<compile_context>
chip_gen: v7x
topology: tpu7x:2x2x1
jax: 0.10.0
libtpu: 0.0.40
codegen_flags: <defaults>
</compile_context>

<pallas_src>
import functools

import jax
import jax.numpy as jnp
from jax import lax
from jax.experimental import pallas as pl
from jax.experimental.pallas import tpu as pltpu


# ------------------------------ tiling helpers -------------------------------

def _round_up(x, m):
    return ((x + m - 1) // m) * m


def _pick_tile(dim, align, max_tile):
    """Return (padded_dim, tile) with tile % align == 0 and padded_dim % tile == 0."""
    dp = _round_up(dim, align)
    if dp <= max_tile:
        return dp, dp
    for t in range(max_tile, align - 1, -align):
        if dp % t == 0:
            return dp, t
    return _round_up(dim, max_tile), max_tile


# --------------------------- tiled matmul + bias ------------------------------

def _matmul_bias_kernel(a_ref, b_ref, bias_ref, o_ref, acc_ref, *, relu):
    k = pl.program_id(2)

    @pl.when(k == 0)
    def _():
        acc_ref[...] = jnp.zeros_like(acc_ref)

    acc_ref[...] += jnp.dot(a_ref[...], b_ref[...],
                            preferred_element_type=jnp.float32)

    @pl.when(k == pl.num_programs(2) - 1)
    def _():
        acc = acc_ref[...] + bias_ref[...]
        if relu:
            acc = jnp.maximum(acc, 0.0)
        o_ref[...] = acc.astype(o_ref.dtype)


def matmul_bias(a, b, bias, *, relu, out_dtype=jnp.float32):
    """(M,K) @ (K,N) + bias, optional ReLU.  bf16 operands, f32 accumulation."""
    M, K = a.shape
    K2, N = b.shape
    assert K == K2

    Mp, tm = _pick_tile(M, 8, 256)      # sublane-aligned row tiles
    Kp, tk = _pick_tile(K, 128, 512)    # MXU-depth-aligned K tiles
    Np, tn = _pick_tile(N, 128, 256)    # lane-dense output tiles (>=128)

    a = a.astype(jnp.bfloat16)
    b = b.astype(jnp.bfloat16)
    if (Mp, Kp) != (M, K):
        a = jnp.pad(a, ((0, Mp - M), (0, Kp - K)))
    if (Kp, Np) != (K, N):
        b = jnp.pad(b, ((0, Kp - K), (0, Np - N)))
    bias2d = jnp.pad(bias.astype(jnp.float32), (0, Np - N)).reshape(1, Np)

    grid = (Mp // tm, Np // tn, Kp // tk)
    out = pl.pallas_call(
        functools.partial(_matmul_bias_kernel, relu=relu),
        out_shape=jax.ShapeDtypeStruct((Mp, Np), out_dtype),
        grid=grid,
        in_specs=[
            pl.BlockSpec((tm, tk), lambda i, j, k: (i, k)),
            pl.BlockSpec((tk, tn), lambda i, j, k: (k, j)),
            pl.BlockSpec((1, tn), lambda i, j, k: (0, j)),
        ],
        out_specs=pl.BlockSpec((tm, tn), lambda i, j, k: (i, j)),
        scratch_shapes=[pltpu.VMEM((tm, tn), jnp.float32)],
        compiler_params=pltpu.CompilerParams(
            dimension_semantics=("parallel", "parallel", "arbitrary")),
    )(a, b, bias2d)
    if (Mp, Np) != (M, N):
        out = out[:M, :N]
    return out


# ----------------------- fused fc1 + ReLU + fc2 head ---------------------------

def _fc_head_kernel(a_ref, w1_ref, b1_ref, w2_ref, b2_ref, o_ref, acc_ref):
    k = pl.program_id(0)

    @pl.when(k == 0)
    def _():
        acc_ref[...] = jnp.zeros_like(acc_ref)

    acc_ref[...] += jnp.dot(a_ref[...], w1_ref[...],
                            preferred_element_type=jnp.float32)

    @pl.when(k == pl.num_programs(0) - 1)
    def _():
        h = jnp.maximum(acc_ref[...] + b1_ref[...], 0.0).astype(w2_ref.dtype)
        out = jnp.dot(h, w2_ref[...], preferred_element_type=jnp.float32)
        o_ref[...] = (out + b2_ref[...]).astype(o_ref.dtype)


def fc_head(x, w1, b1, w2, b2):
    """relu(x @ w1 + b1) @ w2 + b2 in a single pallas_call (fc1 fused with fc2)."""
    M, K = x.shape
    K2, H = w1.shape
    H2, N = w2.shape
    assert K == K2 and H == H2

    Mp = _round_up(M, 8)
    Hp = _round_up(H, 128)
    Np = _round_up(N, 128)
    Kp, tk = _pick_tile(K, 128, 512)

    x = x.astype(jnp.bfloat16)
    w1 = w1.astype(jnp.bfloat16)
    w2 = w2.astype(jnp.bfloat16)
    if (Mp, Kp) != (M, K):
        x = jnp.pad(x, ((0, Mp - M), (0, Kp - K)))
    if (Kp, Hp) != (K, H):
        w1 = jnp.pad(w1, ((0, Kp - K), (0, Hp - H)))
    if (Hp, Np) != (H, N):
        w2 = jnp.pad(w2, ((0, Hp - H), (0, Np - N)))
    b1p = jnp.pad(b1.astype(jnp.float32), (0, Hp - H)).reshape(1, Hp)
    b2p = jnp.pad(b2.astype(jnp.float32), (0, Np - N)).reshape(1, Np)

    out = pl.pallas_call(
        _fc_head_kernel,
        out_shape=jax.ShapeDtypeStruct((Mp, Np), jnp.float32),
        grid=(Kp // tk,),
        in_specs=[
            pl.BlockSpec((Mp, tk), lambda k: (0, k)),
            pl.BlockSpec((tk, Hp), lambda k: (k, 0)),
            pl.BlockSpec((1, Hp), lambda k: (0, 0)),
            pl.BlockSpec((Hp, Np), lambda k: (0, 0)),
            pl.BlockSpec((1, Np), lambda k: (0, 0)),
        ],
        out_specs=pl.BlockSpec((Mp, Np), lambda k: (0, 0)),
        scratch_shapes=[pltpu.VMEM((Mp, Hp), jnp.float32)],
        compiler_params=pltpu.CompilerParams(
            dimension_semantics=("arbitrary",)),
    )(x, w1, b1p, w2, b2p)
    return out[:M, :N]


# ------------------------------ 2x2 max pool ---------------------------------

def _maxpool2x2_kernel(x_ref, o_ref):
    # x: (tr, 2, Wo, 2*C); rows = (batch, out_row), dim 1 = input-row parity,
    # last dim = [w_even channels | w_odd channels].
    x = x_ref[...]
    hm = jnp.maximum(x[:, 0], x[:, 1])                       # pool over H
    c = o_ref.shape[-1]
    o_ref[...] = jnp.maximum(hm[:, :, :c], hm[:, :, c:])     # pool over W


def maxpool2x2_rows(h, n, H, W, C):
    """2x2 / stride-2 max pool.  h: (n*H*W, C) rows in (n, h, w) order (NHWC-flat).
    Returns (n, Ho*Wo*C) flattened in (h, w, c) order."""
    Ho, Wo = H // 2, W // 2
    rows = n * Ho
    x = h.reshape(rows, 2, Wo, 2 * C)          # contiguous reshape, no data movement
    rp, tr = _pick_tile(rows, 8, 256)
    if rp != rows:
        x = jnp.pad(x, ((0, rp - rows), (0, 0), (0, 0), (0, 0)))
    out = pl.pallas_call(
        _maxpool2x2_kernel,
        out_shape=jax.ShapeDtypeStruct((rp, Wo, C), h.dtype),
        grid=(rp // tr,),
        in_specs=[pl.BlockSpec((tr, 2, Wo, 2 * C), lambda i: (i, 0, 0, 0))],
        out_specs=pl.BlockSpec((tr, Wo, C), lambda i: (i, 0, 0)),
        compiler_params=pltpu.CompilerParams(dimension_semantics=("parallel",)),
    )(x)
    return out[:rows].reshape(n, Ho * Wo * C)


# ----------------------------- conv via im2col --------------------------------

def _im2col_3x3_pad1_nhwc(x):
    """x: (N, H, W, C) -> (N*H*W, 9*C), patch column order (ky, kx, c)."""
    N, H, W, C = x.shape
    xp = jnp.pad(x, ((0, 0), (1, 1), (1, 1), (0, 0)))
    cols = [xp[:, dy:dy + H, dx:dx + W, :] for dy in range(3) for dx in range(3)]
    return jnp.concatenate(cols, axis=-1).reshape(N * H * W, 9 * C)


# -------------------------------- parameters ----------------------------------

def init_params(key):
    ks = jax.random.split(key, 8)

    def u(k, shape, fan_in):
        bound = 1.0 / jnp.sqrt(float(fan_in))
        return jax.random.uniform(k, shape, jnp.float32, -bound, bound)

    return {
        "conv1_w": u(ks[0], (32, 1, 3, 3), 1 * 9),
        "conv1_b": u(ks[1], (32,), 1 * 9),
        "conv2_w": u(ks[2], (64, 32, 3, 3), 32 * 9),
        "conv2_b": u(ks[3], (64,), 32 * 9),
        "fc1_w": u(ks[4], (128, 64 * 14 * 14), 64 * 14 * 14),
        "fc1_b": u(ks[5], (128,), 64 * 14 * 14),
        "fc2_w": u(ks[6], (10, 128), 128),
        "fc2_b": u(ks[7], (10,), 128),
    }


def prepare_params(params):
    """One-time (offline) layout prep: conv weights -> (9*Cin, Cout) im2col
    matrices in (ky, kx, cin) order, fc weights pre-transposed to (K, N) with
    the PyTorch NCHW flatten order folded into fc1, and all weight matrices
    pre-cast to bf16 (biases stay f32 for the f32 epilogue add)."""
    def conv_mat(w):  # (Cout, Cin, 3, 3) -> (9*Cin, Cout)
        co, ci, kh, kw = w.shape
        return jnp.transpose(w, (2, 3, 1, 0)).reshape(kh * kw * ci, co)

    w1 = params["fc1_w"].reshape(128, 64, 14, 14)            # (out, c, h, w)
    fc1_wmat = jnp.transpose(w1, (2, 3, 1, 0)).reshape(14 * 14 * 64, 128)
    bf = jnp.bfloat16
    return {
        "conv1_wmat": conv_mat(params["conv1_w"]).astype(bf), "conv1_b": params["conv1_b"],
        "conv2_wmat": conv_mat(params["conv2_w"]).astype(bf), "conv2_b": params["conv2_b"],
        "fc1_wmat": fc1_wmat.astype(bf), "fc1_b": params["fc1_b"],
        "fc2_wmat": params["fc2_w"].T.astype(bf), "fc2_b": params["fc2_b"],
    }


# ------------------------------- forward passes --------------------------------

@jax.jit
def simple_cnn_forward(fp, x):
    """Pallas-backed forward.  x: (N, 1, 28, 28) float32 NCHW -> (N, 10) f32."""
    n = x.shape[0]
    xh = jnp.transpose(x, (0, 2, 3, 1)).astype(jnp.bfloat16)  # NHWC + bf16 once
    H, W = xh.shape[1], xh.shape[2]

    # conv1 + ReLU (im2col + tiled Pallas matmul), stays NHWC-flat, bf16 out
    p1 = _im2col_3x3_pad1_nhwc(xh)                             # (n*H*W, 9) bf16
    h1 = matmul_bias(p1, fp["conv1_wmat"], fp["conv1_b"],
                     relu=True, out_dtype=jnp.bfloat16)        # (n*H*W, 32)

    # conv2 + ReLU
    # TODO(synk): build conv2 patches inside the matmul kernel (9 shifted
    # accumulating dots) to avoid the 9x im2col HBM inflation entirely.
    p2 = _im2col_3x3_pad1_nhwc(h1.reshape(n, H, W, 32))        # (n*H*W, 288) bf16
    h2 = matmul_bias(p2, fp["conv2_wmat"], fp["conv2_b"],
                     relu=True, out_dtype=jnp.bfloat16)        # (n*H*W, 64)

    # 2x2 max-pool directly on the (n*H*W, 64) NHWC-flat conv2 output (bf16)
    flat = maxpool2x2_rows(h2, n, H, W, 64)                    # (n, 14*14*64)

    # fc1 + ReLU + fc2 fused in one pallas_call (flatten order pre-folded)
    return fc_head(flat, fp["fc1_wmat"], fp["fc1_b"],
                   fp["fc2_wmat"], fp["fc2_b"])                # (n, 10) f32


@jax.jit
def reference_forward(params, x):
    """Pure-JAX f32 reference for correctness checking."""
    def conv(x, w, b):
        y = lax.conv_general_dilated(
            x, w, window_strides=(1, 1), padding=((1, 1), (1, 1)),
            dimension_numbers=("NCHW", "OIHW", "NCHW"))
        return y + b.reshape(1, -1, 1, 1)

    h = jax.nn.relu(conv(x, params["conv1_w"], params["conv1_b"]))
    h = jax.nn.relu(conv(h, params["conv2_w"], params["conv2_b"]))
    N, C, H, W = h.shape
    h = h.reshape(N, C, H // 2, 2, W // 2, 2).max(axis=(3, 5))
    h = h.reshape(N, -1)
    h = jax.nn.relu(h @ params["fc1_w"].T + params["fc1_b"])
    return h @ params["fc2_w"].T + params["fc2_b"]


# ------------------------------------ main -------------------------------------

if __name__ == "__main__":
    key = jax.random.PRNGKey(0)
    pkey, xkey = jax.random.split(key)
    params = init_params(pkey)
    fp = prepare_params(params)

    # MNIST-shaped input (fc1 requires 28x28x1); small batch.
    x = jax.random.normal(xkey, (2, 1, 28, 28), jnp.float32)

    out = jax.block_until_ready(simple_cnn_forward(fp, x))
    ref = jax.block_until_ready(reference_forward(params, x))

    assert out.shape == (2, 10), out.shape
    # bf16 MXU operands vs pure-f32 reference -> relaxed tolerance.
    assert jnp.allclose(out, ref, atol=5e-2, rtol=5e-2), (
        "mismatch vs reference, max abs diff = %s" % jnp.max(jnp.abs(out - ref)))
    print("KERNEL_OK")
</pallas_src>

<mosaic_0001>
module attributes {stable_mosaic.version = 11 : i64} {
  func.func @_matmul_bias_kernel(%arg0: i32, %arg1: i32, %arg2: i32, %arg3: memref<224x128xbf16, #tpu.memory_space<vmem>>, %arg4: memref<128x128xbf16, #tpu.memory_space<vmem>>, %arg5: memref<1x128xf32, #tpu.memory_space<vmem>>, %arg6: memref<224x128xbf16, #tpu.memory_space<vmem>>, %arg7: memref<224x128xf32, #tpu.memory_space<vmem>>) attributes {dimension_semantics = [#tpu.dimension_semantics<parallel>, #tpu.dimension_semantics<parallel>, #tpu.dimension_semantics<arbitrary>], iteration_bounds = array<i64: 7, 1, 1>, scalar_prefetch = 0 : i64, scratch_operands = 1 : i64, tpu.core_type = #tpu.core_type<tc>, window_params = [{transform_indices = @transform_0, window_bounds = array<i64: 224, 128>}, {transform_indices = @transform_1, window_bounds = array<i64: 128, 128>}, {transform_indices = @transform_2, window_bounds = array<i64: 1, 128>}, {transform_indices = @transform_3, window_bounds = array<i64: 224, 128>}]} {
    %c0_i32 = arith.constant 0 : i32
    %0 = arith.cmpi eq, %arg2, %c0_i32 : i32
    %1 = arith.extui %0 : i1 to i32
    %c0_i32_0 = arith.constant 0 : i32
    %2 = arith.cmpi ne, %1, %c0_i32_0 : i32
    scf.if %2 {
      %cst_10 = arith.constant 0.000000e+00 : f32
      %12 = vector.broadcast %cst_10 : f32 to vector<224x128xf32>
      %c0_11 = arith.constant 0 : index
      %c0_12 = arith.constant 0 : index
      %13 = vector.load %arg7[%c0_11, %c0_12] : memref<224x128xf32, #tpu.memory_space<vmem>>, vector<224x128xf32>
      tpu.vector_store %arg7[%c0_11, %c0_12], %12 {strides = array<i32>} : memref<224x128xf32, #tpu.memory_space<vmem>>, vector<224x128xf32>,
    } else {
    }
    %c0 = arith.constant 0 : index
    %c0_1 = arith.constant 0 : index
    %3 = vector.load %arg7[%c0, %c0_1] : memref<224x128xf32, #tpu.memory_space<vmem>>, vector<224x128xf32>
    %c0_2 = arith.constant 0 : index
    %c0_3 = arith.constant 0 : index
    %4 = vector.load %arg3[%c0_2, %c0_3] : memref<224x128xbf16, #tpu.memory_space<vmem>>, vector<224x128xbf16>
    %c0_4 = arith.constant 0 : index
    %c0_5 = arith.constant 0 : index
    %5 = vector.load %arg4[%c0_4, %c0_5] : memref<128x128xbf16, #tpu.memory_space<vmem>>, vector<128x128xbf16>
    %cst = arith.constant dense<0.000000e+00> : vector<224x128xf32>
    %6 = tpu.matmul %4, %5, %cst {dimension_numbers = #tpu.dot_dimension_numbers<[1], [0], [0], [1], [0, 0, 1, 1], [], []>} : vector<224x128xbf16>, vector<128x128xbf16>, vector<224x128xf32> -> vector<224x128xf32>
    %7 = arith.addf %3, %6 : vector<224x128xf32>
    %c0_6 = arith.constant 0 : index
    %c0_7 = arith.constant 0 : index
    %8 = vector.load %arg7[%c0_6, %c0_7] : memref<224x128xf32, #tpu.memory_space<vmem>>, vector<224x128xf32>
    tpu.vector_store %arg7[%c0_6, %c0_7], %7 {strides = array<i32>} : memref<224x128xf32, #tpu.memory_space<vmem>>, vector<224x128xf32>,
    %c0_i32_8 = arith.constant 0 : i32
    %9 = arith.cmpi eq, %arg2, %c0_i32_8 : i32
    %10 = arith.extui %9 : i1 to i32
    %c0_i32_9 = arith.constant 0 : i32
    %11 = arith.cmpi ne, %10, %c0_i32_9 : i32
    scf.if %11 {
      %c0_10 = arith.constant 0 : index
      %c0_11 = arith.constant 0 : index
      %12 = vector.load %arg7[%c0_10, %c0_11] : memref<224x128xf32, #tpu.memory_space<vmem>>, vector<224x128xf32>
      %c0_12 = arith.constant 0 : index
      %c0_13 = arith.constant 0 : index
      %13 = vector.load %arg5[%c0_12, %c0_13] : memref<1x128xf32, #tpu.memory_space<vmem>>, vector<1x128xf32>
      %14 = vector.broadcast %13 : vector<1x128xf32> to vector<224x128xf32>
      %15 = arith.addf %12, %14 : vector<224x128xf32>
      %cst_14 = arith.constant 0.000000e+00 : f32
      %16 = vector.broadcast %cst_14 : f32 to vector<224x128xf32>
      %17 = arith.maximumf %15, %16 : vector<224x128xf32>
      %18 = arith.truncf %17 : vector<224x128xf32> to vector<224x128xbf16>
      %c0_15 = arith.constant 0 : index
      %c0_16 = arith.constant 0 : index
      %19 = vector.load %arg6[%c0_15, %c0_16] : memref<224x128xbf16, #tpu.memory_space<vmem>>, vector<224x128xbf16>
      tpu.vector_store %arg6[%c0_15, %c0_16], %18 {strides = array<i32>} : memref<224x128xbf16, #tpu.memory_space<vmem>>, vector<224x128xbf16>,
    } else {
    }
    return
  }
  func.func @transform_0(%arg0: i32, %arg1: i32, %arg2: i32) -> (i32, i32) {
    %c0_i32 = arith.constant 0 : i32
    return %arg0, %arg2 : i32, i32
  }
  func.func @transform_1(%arg0: i32, %arg1: i32, %arg2: i32) -> (i32, i32) {
    %c0_i32 = arith.constant 0 : i32
    return %arg2, %arg1 : i32, i32
  }
  func.func @transform_2(%arg0: i32, %arg1: i32, %arg2: i32) -> (i32, i32) {
    %c0_i32 = arith.constant 0 : i32
    %c0_i32_0 = arith.constant 0 : i32
    return %c0_i32, %arg1 : i32, i32
  }
  func.func @transform_3(%arg0: i32, %arg1: i32, %arg2: i32) -> (i32, i32) {
    %c0_i32 = arith.constant 0 : i32
    return %arg0, %arg1 : i32, i32
  }
}

module attributes {stable_mosaic.version = 11 : i64} {
  func.func @_matmul_bias_kernel(%arg0: i32, %arg1: i32, %arg2: i32, %arg3: memref<224x384xbf16, #tpu.memory_space<vmem>>, %arg4: memref<384x128xbf16, #tpu.memory_space<vmem>>, %arg5: memref<1x128xf32, #tpu.memory_space<vmem>>, %arg6: memref<224x128xbf16, #tpu.memory_space<vmem>>, %arg7: memref<224x128xf32, #tpu.memory_space<vmem>>) attributes {dimension_semantics = [#tpu.dimension_semantics<parallel>, #tpu.dimension_semantics<parallel>, #tpu.dimension_semantics<arbitrary>], iteration_bounds = array<i64: 7, 1, 1>, scalar_prefetch = 0 : i64, scratch_operands = 1 : i64, tpu.core_type = #tpu.core_type<tc>, window_params = [{transform_indices = @transform_0, window_bounds = array<i64: 224, 384>}, {transform_indices = @transform_1, window_bounds = array<i64: 384, 128>}, {transform_indices = @transform_2, window_bounds = array<i64: 1, 128>}, {transform_indices = @transform_3, window_bounds = array<i64: 224, 128>}]} {
    %c0_i32 = arith.constant 0 : i32
    %0 = arith.cmpi eq, %arg2, %c0_i32 : i32
    %1 = arith.extui %0 : i1 to i32
    %c0_i32_0 = arith.constant 0 : i32
    %2 = arith.cmpi ne, %1, %c0_i32_0 : i32
    scf.if %2 {
      %cst_10 = arith.constant 0.000000e+00 : f32
      %12 = vector.broadcast %cst_10 : f32 to vector<224x128xf32>
      %c0_11 = arith.constant 0 : index
      %c0_12 = arith.constant 0 : index
      %13 = vector.load %arg7[%c0_11, %c0_12] : memref<224x128xf32, #tpu.memory_space<vmem>>, vector<224x128xf32>
      tpu.vector_store %arg7[%c0_11, %c0_12], %12 {strides = array<i32>} : memref<224x128xf32, #tpu.memory_space<vmem>>, vector<224x128xf32>,
    } else {
    }
    %c0 = arith.constant 0 : index
    %c0_1 = arith.constant 0 : index
    %3 = vector.load %arg7[%c0, %c0_1] : memref<224x128xf32, #tpu.memory_space<vmem>>, vector<224x128xf32>
    %c0_2 = arith.constant 0 : index
    %c0_3 = arith.constant 0 : index
    %4 = vector.load %arg3[%c0_2, %c0_3] : memref<224x384xbf16, #tpu.memory_space<vmem>>, vector<224x384xbf16>
    %c0_4 = arith.constant 0 : index
    %c0_5 = arith.constant 0 : index
    %5 = vector.load %arg4[%c0_4, %c0_5] : memref<384x128xbf16, #tpu.memory_space<vmem>>, vector<384x128xbf16>
    %cst = arith.constant dense<0.000000e+00> : vector<224x128xf32>
    %6 = tpu.matmul %4, %5, %cst {dimension_numbers = #tpu.dot_dimension_numbers<[1], [0], [0], [1], [0, 0, 1, 1], [], []>} : vector<224x384xbf16>, vector<384x128xbf16>, vector<224x128xf32> -> vector<224x128xf32>
    %7 = arith.addf %3, %6 : vector<224x128xf32>
    %c0_6 = arith.constant 0 : index
    %c0_7 = arith.constant 0 : index
    %8 = vector.load %arg7[%c0_6, %c0_7] : memref<224x128xf32, #tpu.memory_space<vmem>>, vector<224x128xf32>
    tpu.vector_store %arg7[%c0_6, %c0_7], %7 {strides = array<i32>} : memref<224x128xf32, #tpu.memory_space<vmem>>, vector<224x128xf32>,
    %c0_i32_8 = arith.constant 0 : i32
    %9 = arith.cmpi eq, %arg2, %c0_i32_8 : i32
    %10 = arith.extui %9 : i1 to i32
    %c0_i32_9 = arith.constant 0 : i32
    %11 = arith.cmpi ne, %10, %c0_i32_9 : i32
    scf.if %11 {
      %c0_10 = arith.constant 0 : index
      %c0_11 = arith.constant 0 : index
      %12 = vector.load %arg7[%c0_10, %c0_11] : memref<224x128xf32, #tpu.memory_space<vmem>>, vector<224x128xf32>
      %c0_12 = arith.constant 0 : index
      %c0_13 = arith.constant 0 : index
      %13 = vector.load %arg5[%c0_12, %c0_13] : memref<1x128xf32, #tpu.memory_space<vmem>>, vector<1x128xf32>
      %14 = vector.broadcast %13 : vector<1x128xf32> to vector<224x128xf32>
      %15 = arith.addf %12, %14 : vector<224x128xf32>
      %cst_14 = arith.constant 0.000000e+00 : f32
      %16 = vector.broadcast %cst_14 : f32 to vector<224x128xf32>
      %17 = arith.maximumf %15, %16 : vector<224x128xf32>
      %18 = arith.truncf %17 : vector<224x128xf32> to vector<224x128xbf16>
      %c0_15 = arith.constant 0 : index
      %c0_16 = arith.constant 0 : index
      %19 = vector.load %arg6[%c0_15, %c0_16] : memref<224x128xbf16, #tpu.memory_space<vmem>>, vector<224x128xbf16>
      tpu.vector_store %arg6[%c0_15, %c0_16], %18 {strides = array<i32>} : memref<224x128xbf16, #tpu.memory_space<vmem>>, vector<224x128xbf16>,
    } else {
    }
    return
  }
  func.func @transform_0(%arg0: i32, %arg1: i32, %arg2: i32) -> (i32, i32) {
    %c0_i32 = arith.constant 0 : i32
    return %arg0, %arg2 : i32, i32
  }
  func.func @transform_1(%arg0: i32, %arg1: i32, %arg2: i32) -> (i32, i32) {
    %c0_i32 = arith.constant 0 : i32
    return %arg2, %arg1 : i32, i32
  }
  func.func @transform_2(%arg0: i32, %arg1: i32, %arg2: i32) -> (i32, i32) {
    %c0_i32 = arith.constant 0 : i32
    %c0_i32_0 = arith.constant 0 : i32
    return %c0_i32, %arg1 : i32, i32
  }
  func.func @transform_3(%arg0: i32, %arg1: i32, %arg2: i32) -> (i32, i32) {
    %c0_i32 = arith.constant 0 : i32
    return %arg0, %arg1 : i32, i32
  }
}

module attributes {stable_mosaic.version = 11 : i64} {
  func.func @_maxpool2x2_kernel(%arg0: i32, %arg1: memref<32x2x14x128xbf16, #tpu.memory_space<vmem>>, %arg2: memref<32x14x64xbf16, #tpu.memory_space<vmem>>) attributes {dimension_semantics = [#tpu.dimension_semantics<parallel>], iteration_bounds = array<i64: 1>, scalar_prefetch = 0 : i64, scratch_operands = 0 : i64, tpu.core_type = #tpu.core_type<tc>, window_params = [{transform_indices = @transform_0, window_bounds = array<i64: 32, 2, 14, 128>}, {transform_indices = @transform_1, window_bounds = array<i64: 32, 14, 64>}]} {
    %c0 = arith.constant 0 : index
    %c0_0 = arith.constant 0 : index
    %c0_1 = arith.constant 0 : index
    %c0_2 = arith.constant 0 : index
    %0 = vector.load %arg1[%c0, %c0_0, %c0_1, %c0_2] : memref<32x2x14x128xbf16, #tpu.memory_space<vmem>>, vector<32x2x14x128xbf16>
    %1 = vector.extract_strided_slice %0 {offsets = [0, 0, 0, 0], sizes = [32, 1, 14, 128], strides = [1, 1, 1, 1]} : vector<32x2x14x128xbf16> to vector<32x1x14x128xbf16>
    %2 = vector.shape_cast %1 : vector<32x1x14x128xbf16> to vector<32x14x128xbf16>
    %3 = vector.extract_strided_slice %0 {offsets = [0, 1, 0, 0], sizes = [32, 1, 14, 128], strides = [1, 1, 1, 1]} : vector<32x2x14x128xbf16> to vector<32x1x14x128xbf16>
    %4 = vector.shape_cast %3 : vector<32x1x14x128xbf16> to vector<32x14x128xbf16>
    %5 = arith.maximumf %2, %4 : vector<32x14x128xbf16>
    %6 = vector.extract_strided_slice %5 {offsets = [0, 0, 0], sizes = [32, 14, 64], strides = [1, 1, 1]} : vector<32x14x128xbf16> to vector<32x14x64xbf16>
    %7 = vector.extract_strided_slice %5 {offsets = [0, 0, 64], sizes = [32, 14, 64], strides = [1, 1, 1]} : vector<32x14x128xbf16> to vector<32x14x64xbf16>
    %8 = arith.maximumf %6, %7 : vector<32x14x64xbf16>
    %c0_3 = arith.constant 0 : index
    %c0_4 = arith.constant 0 : index
    %c0_5 = arith.constant 0 : index
    %9 = vector.load %arg2[%c0_3, %c0_4, %c0_5] : memref<32x14x64xbf16, #tpu.memory_space<vmem>>, vector<32x14x64xbf16>
    tpu.vector_store %arg2[%c0_3, %c0_4, %c0_5], %8 {strides = array<i32>} : memref<32x14x64xbf16, #tpu.memory_space<vmem>>, vector<32x14x64xbf16>,
    return
  }
  func.func @transform_0(%arg0: i32) -> (i32, i32, i32, i32) {
    %c0_i32 = arith.constant 0 : i32
    %c0_i32_0 = arith.constant 0 : i32
    %c0_i32_1 = arith.constant 0 : i32
    %c0_i32_2 = arith.constant 0 : i32
    return %arg0, %c0_i32, %c0_i32_0, %c0_i32_1 : i32, i32, i32, i32
  }
  func.func @transform_1(%arg0: i32) -> (i32, i32, i32) {
    %c0_i32 = arith.constant 0 : i32
    %c0_i32_0 = arith.constant 0 : i32
    %c0_i32_1 = arith.constant 0 : i32
    return %arg0, %c0_i32, %c0_i32_0 : i32, i32, i32
  }
}

module attributes {stable_mosaic.version = 11 : i64} {
  func.func @_fc_head_kernel(%arg0: i32, %arg1: memref<8x256xbf16, #tpu.memory_space<vmem>>, %arg2: memref<256x128xbf16, #tpu.memory_space<vmem>>, %arg3: memref<1x128xf32, #tpu.memory_space<vmem>>, %arg4: memref<128x128xbf16, #tpu.memory_space<vmem>>, %arg5: memref<1x128xf32, #tpu.memory_space<vmem>>, %arg6: memref<8x128xf32, #tpu.memory_space<vmem>>, %arg7: memref<8x128xf32, #tpu.memory_space<vmem>>) attributes {dimension_semantics = [#tpu.dimension_semantics<arbitrary>], iteration_bounds = array<i64: 49>, scalar_prefetch = 0 : i64, scratch_operands = 1 : i64, tpu.core_type = #tpu.core_type<tc>, window_params = [{transform_indices = @transform_0, window_bounds = array<i64: 8, 256>}, {transform_indices = @transform_1, window_bounds = array<i64: 256, 128>}, {pipeline_mode = #tpu.pipeline_mode<synchronous>, transform_indices = @transform_2, window_bounds = array<i64: 1, 128>}, {pipeline_mode = #tpu.pipeline_mode<synchronous>, transform_indices = @transform_3, window_bounds = array<i64: 128, 128>}, {pipeline_mode = #tpu.pipeline_mode<synchronous>, transform_indices = @transform_4, window_bounds = array<i64: 1, 128>}, {pipeline_mode = #tpu.pipeline_mode<synchronous>, transform_indices = @transform_5, window_bounds = array<i64: 8, 128>}]} {
    %c0_i32 = arith.constant 0 : i32
    %0 = arith.cmpi eq, %arg0, %c0_i32 : i32
    %1 = arith.extui %0 : i1 to i32
    %c0_i32_0 = arith.constant 0 : i32
    %2 = arith.cmpi ne, %1, %c0_i32_0 : i32
    scf.if %2 {
      %cst_9 = arith.constant 0.000000e+00 : f32
      %12 = vector.broadcast %cst_9 : f32 to vector<8x128xf32>
      %c0_10 = arith.constant 0 : index
      %c0_11 = arith.constant 0 : index
      %13 = vector.load %arg7[%c0_10, %c0_11] : memref<8x128xf32, #tpu.memory_space<vmem>>, vector<8x128xf32>
      tpu.vector_store %arg7[%c0_10, %c0_11], %12 {strides = array<i32>} : memref<8x128xf32, #tpu.memory_space<vmem>>, vector<8x128xf32>,
    } else {
    }
    %c0 = arith.constant 0 : index
    %c0_1 = arith.constant 0 : index
    %3 = vector.load %arg7[%c0, %c0_1] : memref<8x128xf32, #tpu.memory_space<vmem>>, vector<8x128xf32>
    %c0_2 = arith.constant 0 : index
    %c0_3 = arith.constant 0 : index
    %4 = vector.load %arg1[%c0_2, %c0_3] : memref<8x256xbf16, #tpu.memory_space<vmem>>, vector<8x256xbf16>
    %c0_4 = arith.constant 0 : index
    %c0_5 = arith.constant 0 : index
    %5 = vector.load %arg2[%c0_4, %c0_5] : memref<256x128xbf16, #tpu.memory_space<vmem>>, vector<256x128xbf16>
    %cst = arith.constant dense<0.000000e+00> : vector<8x128xf32>
    %6 = tpu.matmul %4, %5, %cst {dimension_numbers = #tpu.dot_dimension_numbers<[1], [0], [0], [1], [0, 0, 1, 1], [], []>} : vector<8x256xbf16>, vector<256x128xbf16>, vector<8x128xf32> -> vector<8x128xf32>
    %7 = arith.addf %3, %6 : vector<8x128xf32>
    %c0_6 = arith.constant 0 : index
    %c0_7 = arith.constant 0 : index
    %8 = vector.load %arg7[%c0_6, %c0_7] : memref<8x128xf32, #tpu.memory_space<vmem>>, vector<8x128xf32>
    tpu.vector_store %arg7[%c0_6, %c0_7], %7 {strides = array<i32>} : memref<8x128xf32, #tpu.memory_space<vmem>>, vector<8x128xf32>,
    %c48_i32 = arith.constant 48 : i32
    %9 = arith.cmpi eq, %arg0, %c48_i32 : i32
    %10 = arith.extui %9 : i1 to i32
    %c0_i32_8 = arith.constant 0 : i32
    %11 = arith.cmpi ne, %10, %c0_i32_8 : i32
    scf.if %11 {
      %c0_9 = arith.constant 0 : index
      %c0_10 = arith.constant 0 : index
      %12 = vector.load %arg7[%c0_9, %c0_10] : memref<8x128xf32, #tpu.memory_space<vmem>>, vector<8x128xf32>
      %c0_11 = arith.constant 0 : index
      %c0_12 = arith.constant 0 : index
      %13 = vector.load %arg3[%c0_11, %c0_12] : memref<1x128xf32, #tpu.memory_space<vmem>>, vector<1x128xf32>
      %14 = vector.broadcast %13 : vector<1x128xf32> to vector<8x128xf32>
      %15 = arith.addf %12, %14 : vector<8x128xf32>
      %cst_13 = arith.constant 0.000000e+00 : f32
      %16 = vector.broadcast %cst_13 : f32 to vector<8x128xf32>
      %17 = arith.maximumf %15, %16 : vector<8x128xf32>
      %18 = arith.truncf %17 : vector<8x128xf32> to vector<8x128xbf16>
      %c0_14 = arith.constant 0 : index
      %c0_15 = arith.constant 0 : index
      %19 = vector.load %arg4[%c0_14, %c0_15] : memref<128x128xbf16, #tpu.memory_space<vmem>>, vector<128x128xbf16>
      %cst_16 = arith.constant dense<0.000000e+00> : vector<8x128xf32>
      %20 = tpu.matmul %18, %19, %cst_16 {dimension_numbers = #tpu.dot_dimension_numbers<[1], [0], [0], [1], [0, 0, 1, 1], [], []>} : vector<8x128xbf16>, vector<128x128xbf16>, vector<8x128xf32> -> vector<8x128xf32>
      %c0_17 = arith.constant 0 : index
      %c0_18 = arith.constant 0 : index
      %21 = vector.load %arg5[%c0_17, %c0_18] : memref<1x128xf32, #tpu.memory_space<vmem>>, vector<1x128xf32>
      %22 = vector.broadcast %21 : vector<1x128xf32> to vector<8x128xf32>
      %23 = arith.addf %20, %22 : vector<8x128xf32>
      %c0_19 = arith.constant 0 : index
      %c0_20 = arith.constant 0 : index
      %24 = vector.load %arg6[%c0_19, %c0_20] : memref<8x128xf32, #tpu.memory_space<vmem>>, vector<8x128xf32>
      tpu.vector_store %arg6[%c0_19, %c0_20], %23 {strides = array<i32>} : memref<8x128xf32, #tpu.memory_space<vmem>>, vector<8x128xf32>,
    } else {
    }
    return
  }
  func.func @transform_0(%arg0: i32) -> (i32, i32) {
    %c0_i32 = arith.constant 0 : i32
    %c0_i32_0 = arith.constant 0 : i32
    return %c0_i32, %arg0 : i32, i32
  }
  func.func @transform_1(%arg0: i32) -> (i32, i32) {
    %c0_i32 = arith.constant 0 : i32
    %c0_i32_0 = arith.constant 0 : i32
    return %arg0, %c0_i32 : i32, i32
  }
  func.func @transform_2(%arg0: i32) -> (i32, i32) {
    %c0_i32 = arith.constant 0 : i32
    %c0_i32_0 = arith.constant 0 : i32
    %c0_i32_1 = arith.constant 0 : i32
    return %c0_i32, %c0_i32_0 : i32, i32
  }
  func.func @transform_3(%arg0: i32) -> (i32, i32) {
    %c0_i32 = arith.constant 0 : i32
    %c0_i32_0 = arith.constant 0 : i32
    %c0_i32_1 = arith.constant 0 : i32
    return %c0_i32, %c0_i32_0 : i32, i32
  }
  func.func @transform_4(%arg0: i32) -> (i32, i32) {
    %c0_i32 = arith.constant 0 : i32
    %c0_i32_0 = arith.constant 0 : i32
    %c0_i32_1 = arith.constant 0 : i32
    return %c0_i32, %c0_i32_0 : i32, i32
  }
  func.func @transform_5(%arg0: i32) -> (i32, i32) {
    %c0_i32 = arith.constant 0 : i32
    %c0_i32_0 = arith.constant 0 : i32
    %c0_i32_1 = arith.constant 0 : i32
    return %c0_i32, %c0_i32_0 : i32, i32
  }
}

</mosaic_0001>

<llo_original>
// kernel: simple_cnn_forward.4
$region0: #{simple_cnn_forward.4}
  #allocation0 [shape = 'u32[]', space=smem, size = 0x4, offset = 0x4, fixed_abs, tag = 'smem constant byte address 0x4 - core index']
  #allocation1 [shape = 'u32[144,128]{1,0:T(1,128)}', space=vmem, size = 0x12000, scoped, tag = 'internal scratch']
  #allocation2 [shape = 'f32[224,128]{1,0:T(8,128)}', space=vmem, size = 0x1c000, scoped, tag = 'scratch operand']
  %s0 = inlined_call_operand.vmem [shape: bf16[1568,128], index: 0, kind: input, shape index: {}]
  %s1 = inlined_call_operand.vmem [shape: bf16[128,128], index: 1, kind: input, shape index: {}]
  %s2 = inlined_call_operand.vmem [shape: f32[1,128], index: 2, kind: input, shape index: {}]
  %s3 = inlined_call_operand.vmem [shape: bf16[1568,128], index: 3, kind: output, shape index: {}]
  %s4 = sld [smem:[#allocation0]]
  $region53: #{simple_cnn_forward.4} parent=0
    _
  %s6 = ssub.s32 1, %s4
  %s7 = scalar_select 0, %s6, %s4
  loop: start=0, step=1, limit=9
  $region2: #{simple_cnn_forward.4} parent=0 // loop_pre_header
    _
  $region3: #{simple_cnn_forward.4} parent=0 // loop_header
    %s9 = sphi 0, %s13
    %p10 = scmp.ge.s32.totalorder %s9, 9
    %s16 = sphi 0, %s35
    %s17 = sphi 0, %s31
    %s18 = sphi 0, %s27
    %s19 = sphi 0, %s16
    %s20 = sphi 0, %s17
    %s21 = sphi 0, %s18
    %s22 = sphi 0, %s19
    %s23 = sphi 0, %s20
    %s24 = sphi 0, %s21
    %s40 = sphi 0, %s42
    %s43 = sphi 0, %s40
    %s44 = sphi 0, %s43
    %s60 = sphi 0, %s44
    %s68 = sphi 0, %s70
    %s71 = sphi 0, %s68
    %s72 = sphi 0, %s71
    %s88 = sphi 0, %s72
    %s94 = sphi 0, %s96
    %s97 = sphi 0, %s94
    %s98 = sphi 0, %s97
    %s114 = sphi 0, %s98
    %s122 = sphi 0, %s124
    %s125 = sphi 0, %s122
    %s126 = sphi 0, %s125
    %s142 = sphi 0, %s126
  $region4: #{simple_cnn_forward.4} parent=0 // loop_header_branch
    %12 = sbr.rel (%p10) target = $region8
  $region5: #{simple_cnn_forward.4} parent=0 // loop_body
    %s14 = ssub.s32 %s9, 1
    %s15 = ssub.s32 %s9, 2
    %s25 = sadd.s32 1, %s18
    %p26 = scmp.ge.s32.totalorder %s25, 1
    %s27 = scalar_select %p26, 0, %s25
    %s28 = sadd.s32 1, %s17
    %s29 = scalar_select %p26, %s28, %s17
    %p30 = scmp.ge.s32.totalorder %s29, 1
    %s31 = scalar_select %p30, 0, %s29
    %s32 = sadd.s32 1, %s16
    %s33 = scalar_select %p30, %s32, %s16
    %p34 = scmp.ge.s32.totalorder %s33, 7
    %s35 = scalar_select %p34, 0, %s33
    %s36 = ssub.s32 %s16, %s35
    %s37 = ssub.s32 %s18, %s27
    %s38 = sor.u32 %s36, %s37
    %p39 = scmp.eq.s32.totalorder %s38, 0
    %s41 = sadd.s32 %s40, 1
    %s42 = scalar_select %p39, %s40, %s41
    %p45 = pneg %p39
    %p46 = scmp.eq.s32.totalorder %s9, 6
    %p47 = por %p45, %p46
    %p48 = scmp.ne.s32.totalorder %s40, %s43
    %p49 = scmp.eq.s32.totalorder %s9, 0
    %p50 = por %p48, %p49
    %p51 = scmp.ne.s32.totalorder %s40, %s43
    %p52 = scmp.eq.s32.totalorder %s14, 6
    %p53 = por %p51, %p52
    %p54 = scmp.ne.s32.totalorder %s43, %s44
    %p55 = scmp.eq.s32.totalorder %s14, 0
    %p56 = por %p54, %p55
    %p57 = scmp.ne.s32.totalorder %s43, %s44
    %p58 = scmp.eq.s32.totalorder %s15, 6
    %p59 = por %p57, %p58
    %p61 = scmp.ne.s32.totalorder %s44, %s60
    %p62 = scmp.eq.s32.totalorder %s15, 0
    %p63 = por %p61, %p62
    %s64 = ssub.s32 %s18, %s27
    %s65 = ssub.s32 %s17, %s31
    %s66 = sor.u32 %s64, %s65
    %p67 = scmp.eq.s32.totalorder %s66, 0
    %s69 = sadd.s32 %s68, 1
    %s70 = scalar_select %p67, %s68, %s69
    %p73 = pneg %p67
    %p74 = scmp.eq.s32.totalorder %s9, 6
    %p75 = por %p73, %p74
    %p76 = scmp.ne.s32.totalorder %s68, %s71
    %p77 = scmp.eq.s32.totalorder %s9, 0
    %p78 = por %p76, %p77
    %p79 = scmp.ne.s32.totalorder %s68, %s71
    %p80 = scmp.eq.s32.totalorder %s14, 6
    %p81 = por %p79, %p80
    %p82 = scmp.ne.s32.totalorder %s71, %s72
    %p83 = scmp.eq.s32.totalorder %s14, 0
    %p84 = por %p82, %p83
    %p85 = scmp.ne.s32.totalorder %s71, %s72
    %p86 = scmp.eq.s32.totalorder %s15, 6
    %p87 = por %p85, %p86
    %p89 = scmp.ne.s32.totalorder %s72, %s88
    %p90 = scmp.eq.s32.totalorder %s15, 0
    %p91 = por %p89, %p90
    %s92 = ssub.s32 %s17, %s31
    %p93 = scmp.eq.s32.totalorder %s92, 0
    %s95 = sadd.s32 %s94, 1
    %s96 = scalar_select %p93, %s94, %s95
    %p99 = pneg %p93
    %p100 = scmp.eq.s32.totalorder %s9, 6
    %p101 = por %p99, %p100
    %p102 = scmp.ne.s32.totalorder %s94, %s97
    %p103 = scmp.eq.s32.totalorder %s9, 0
    %p104 = por %p102, %p103
    %p105 = scmp.ne.s32.totalorder %s94, %s97
    %p106 = scmp.eq.s32.totalorder %s14, 6
    %p107 = por %p105, %p106
    %p108 = scmp.ne.s32.totalorder %s97, %s98
    %p109 = scmp.eq.s32.totalorder %s14, 0
    %p110 = por %p108, %p109
    %p111 = scmp.ne.s32.totalorder %s97, %s98
    %p112 = scmp.eq.s32.totalorder %s15, 6
    %p113 = por %p111, %p112
    %p115 = scmp.ne.s32.totalorder %s98, %s114
    %p116 = scmp.eq.s32.totalorder %s15, 0
    %p117 = por %p115, %p116
    %s118 = ssub.s32 %s16, %s35
    %s119 = ssub.s32 %s17, %s31
    %s120 = sor.u32 %s118, %s119
    %p121 = scmp.eq.s32.totalorder %s120, 0
    %s123 = sadd.s32 %s122, 1
    %s124 = scalar_select %p121, %s122, %s123
    %p127 = pneg %p121
    %p128 = scmp.eq.s32.totalorder %s9, 6
    %p129 = por %p127, %p128
    %p130 = scmp.ne.s32.totalorder %s122, %s125
    %p131 = scmp.eq.s32.totalorder %s9, 0
    %p132 = por %p130, %p131
    %p133 = scmp.ne.s32.totalorder %s122, %s125
    %p134 = scmp.eq.s32.totalorder %s14, 6
    %p135 = por %p133, %p134
    %p136 = scmp.ne.s32.totalorder %s125, %s126
    %p137 = scmp.eq.s32.totalorder %s14, 0
    %p138 = por %p136, %p137
    %p139 = scmp.ne.s32.totalorder %s125, %s126
    %p140 = scmp.eq.s32.totalorder %s15, 6
    %p141 = por %p139, %p140
    %p143 = scmp.ne.s32.totalorder %s126, %s142
    %p144 = scmp.eq.s32.totalorder %s15, 0
    %p145 = por %p143, %p144
    %p146 = scmp.le.s32.totalorder 1, %s9
    %p147 = scmp.lt.s32.totalorder %s9, 8
    %p148 = pnand %p146, %p147
    %p149 = pneg %p148
    // Predicated region
    $region9: #{simple_cnn_forward.4} parent=5 // pred_check
      _
    $region10: #{simple_cnn_forward.4} parent=5 // pred_check_branch
      %151 = sbr.rel (%p148) target = $region12
    $region11: #{simple_cnn_forward.4} parent=5 // pred_region
      %s152 = ssub.s32 %s9, 1
      // Predicated region
      $region13: #{simple_cnn_forward.4} parent=11 // pred_check
        %p153 = pneg %p84
      $region14: #{simple_cnn_forward.4} parent=11 // pred_check_branch
        %155 = sbr.rel (%p153) target = $region16
      $region15: #{simple_cnn_forward.4} parent=11 // pred_region
        %s156 = smul.u32 16, %s21
        %p157 = scmp.lt.s32.totalorder %s156, 15
        %s158 = scalar_select %p157, %s156, 15
        %p159 = scmp.lt.s32.totalorder %s20, 0
        %s160 = scalar_select %p159, %s20, 0
        %s161 = sadd.s32 %s160, %s158
        %s162 = smul.addr %s161, 4
        %s163 = scalar_lea.vmem %s1, %s162
        %s164 = smul.u32 16, %s21
      $region16: #{simple_cnn_forward.4} parent=11 // pred_fallthru
        _
      // Predicated region
      $region17: #{simple_cnn_forward.4} parent=11 // pred_check
        %p165 = pneg %p110
      $region18: #{simple_cnn_forward.4} parent=11 // pred_check_branch
        %167 = sbr.rel (%p165) target = $region20
      $region19: #{simple_cnn_forward.4} parent=11 // pred_region
        %p168 = scmp.lt.s32.totalorder %s20, 0
        %s169 = scalar_select %p168, %s20, 0
        %s170 = scalar_lea.vmem %s2, %s169
      $region20: #{simple_cnn_forward.4} parent=11 // pred_fallthru
        _
    $region12: #{simple_cnn_forward.4} parent=5 // pred_fallthru
      _
    %p171 = scmp.lt.s32.totalorder %s9, 7
    // Predicated region
    $region21: #{simple_cnn_forward.4} parent=5 // pred_check
      %p172 = pneg %p171
    $region22: #{simple_cnn_forward.4} parent=5 // pred_check_branch
      %174 = sbr.rel (%p172) target = $region24
    $region23: #{simple_cnn_forward.4} parent=5 // pred_region
      // Predicated region
      $region25: #{simple_cnn_forward.4} parent=23 // pred_check
        %p175 = pneg %p50
      $region26: #{simple_cnn_forward.4} parent=23 // pred_check_branch
        %177 = sbr.rel (%p175) target = $region28
      $region27: #{simple_cnn_forward.4} parent=23 // pred_region
        %s178 = smul.u32 28, %s16
        %p179 = scmp.lt.s32.totalorder %s178, 195
        %s180 = scalar_select %p179, %s178, 195
        %p181 = scmp.lt.s32.totalorder %s18, 0
        %s182 = scalar_select %p181, %s18, 0
        %s183 = sadd.s32 %s182, %s180
        %s184 = smul.addr %s183, 4
        %s185 = scalar_lea.vmem %s0, %s184
        %s186 = smul.u32 28, %s16
      $region28: #{simple_cnn_forward.4} parent=23 // pred_fallthru
        _
    $region24: #{simple_cnn_forward.4} parent=5 // pred_fallthru
      _
    %p187 = scmp.le.s32.totalorder 1, %s9
    %p188 = scmp.lt.s32.totalorder %s9, 8
    %p189 = pnand %p187, %p188
    %p190 = pneg %p189
    // Predicated region
    $region29: #{simple_cnn_forward.4} parent=5 // pred_check
      _
    $region30: #{simple_cnn_forward.4} parent=5 // pred_check_branch
      %192 = sbr.rel (%p189) target = $region32
    $region31: #{simple_cnn_forward.4} parent=5 // pred_region
      %s193 = ssub.s32 %s9, 1
      %s194 = smul.u32 28, %s19
      %p195 = scmp.lt.s32.totalorder %s194, 195
      %s196 = scalar_select %p195, %s194, 195
      %p197 = scmp.lt.s32.totalorder %s21, 0
      %s198 = scalar_select %p197, %s21, 0
      %s199 = sadd.s32 %s198, %s196
      %s200 = smul.addr %s199, 4
      %s201 = scalar_lea.vmem %s0, %s200
      %p202 = pneg %p56
      %p203 = pneg %p53
      %s204 = smul.u32 16, %s21
      %p205 = scmp.lt.s32.totalorder %s204, 15
      %s206 = scalar_select %p205, %s204, 15
      %p207 = scmp.lt.s32.totalorder %s20, 0
      %s208 = scalar_select %p207, %s20, 0
      %s209 = sadd.s32 %s208, %s206
      %s210 = smul.addr %s209, 4
      %s211 = scalar_lea.vmem %s1, %s210
      %p212 = pneg %p84
      %p213 = pneg %p81
      %p214 = scmp.lt.s32.totalorder %s20, 0
      %s215 = scalar_select %p214, %s20, 0
      %s216 = scalar_lea.vmem %s2, %s215
      %p217 = pneg %p110
      %p218 = pneg %p107
      %p219 = pneg %p138
      %p220 = pneg %p135
      %s221 = smul.u32 28, %s19
      %p222 = scmp.lt.s32.totalorder %s221, 195
      %s223 = scalar_select %p222, %s221, 195
      %p224 = scmp.lt.s32.totalorder %s20, 0
      %s225 = scalar_select %p224, %s20, 0
      %s226 = sadd.s32 %s225, %s223
      %s227 = smul.addr %s226, 4
      %s228 = scalar_lea.vmem %s3, %s227
      %s229 = smul.u32 28, %s19
      %p230 = scmp.lt.s32.totalorder %s229, 195
      %s231 = scalar_select %p230, %s229, 195
      %p232 = scmp.lt.s32.totalorder %s21, 0
      %s233 = scalar_select %p232, %s21, 0
      %s234 = sadd.s32 %s233, %s231
      %s235 = smul.addr %s234, 4
      %s236 = scalar_lea.vmem %s0, %s235
      %s237 = smul.u32 28, %s19
      %s238 = smul.u32 16, %s21
      %p239 = scmp.lt.s32.totalorder %s238, 15
      %s240 = scalar_select %p239, %s238, 15
      %p241 = scmp.lt.s32.totalorder %s20, 0
      %s242 = scalar_select %p241, %s20, 0
      %s243 = sadd.s32 %s242, %s240
      %s244 = smul.addr %s243, 4
      %s245 = scalar_lea.vmem %s1, %s244
      %s246 = smul.u32 16, %s21
      %p247 = scmp.lt.s32.totalorder %s20, 0
      %s248 = scalar_select %p247, %s20, 0
      %s249 = scalar_lea.vmem %s2, %s248
      %s250 = smul.u32 28, %s19
      %p251 = scmp.lt.s32.totalorder %s250, 195
      %s252 = scalar_select %p251, %s250, 195
      %p253 = scmp.lt.s32.totalorder %s20, 0
      %s254 = scalar_select %p253, %s20, 0
      %s255 = sadd.s32 %s254, %s252
      %s256 = smul.addr %s255, 4
      %s257 = scalar_lea.vmem %s3, %s256
      %s258 = smul.u32 28, %s19
      %p260 = scmp.eq.s32.totalorder %s21, 0
      // Predicated region
      $region33: #{simple_cnn_forward.4} parent=31 // pred_check
        %p261 = pneg %p260
      $region34: #{simple_cnn_forward.4} parent=31 // pred_check_branch
        %263 = sbr.rel (%p261) target = $region36
      $region35: #{simple_cnn_forward.4} parent=31 // pred_region
        %264 = vst [vmem:[#allocation2] sm:$0xff] 0.0
        %265 = vst [vmem:[#allocation2 + $0x8] sm:$0xff] 0.0
        %266 = vst [vmem:[#allocation2 + $0x10] sm:$0xff] 0.0
        %267 = vst [vmem:[#allocation2 + $0x18] sm:$0xff] 0.0
        %268 = vst [vmem:[#allocation2 + $0x20] sm:$0xff] 0.0
        %269 = vst [vmem:[#allocation2 + $0x28] sm:$0xff] 0.0
        %270 = vst [vmem:[#allocation2 + $0x30] sm:$0xff] 0.0
        %271 = vst [vmem:[#allocation2 + $0x38] sm:$0xff] 0.0
        %272 = vst [vmem:[#allocation2 + $0x40] sm:$0xff] 0.0
        %273 = vst [vmem:[#allocation2 + $0x48] sm:$0xff] 0.0
        %274 = vst [vmem:[#allocation2 + $0x50] sm:$0xff] 0.0
        %275 = vst [vmem:[#allocation2 + $0x58] sm:$0xff] 0.0
        %276 = vst [vmem:[#allocation2 + $0x60] sm:$0xff] 0.0
        %277 = vst [vmem:[#allocation2 + $0x68] sm:$0xff] 0.0
        %278 = vst [vmem:[#allocation2 + $0x70] sm:$0xff] 0.0
        %279 = vst [vmem:[#allocation2 + $0x78] sm:$0xff] 0.0
        %280 = vst [vmem:[#allocation2 + $0x80] sm:$0xff] 0.0
        %281 = vst [vmem:[#allocation2 + $0x88] sm:$0xff] 0.0
        %282 = vst [vmem:[#allocation2 + $0x90] sm:$0xff] 0.0
        %283 = vst [vmem:[#allocation2 + $0x98] sm:$0xff] 0.0
        %284 = vst [vmem:[#allocation2 + $0xa0] sm:$0xff] 0.0
        %285 = vst [vmem:[#allocation2 + $0xa8] sm:$0xff] 0.0
        %286 = vst [vmem:[#allocation2 + $0xb0] sm:$0xff] 0.0
        %287 = vst [vmem:[#allocation2 + $0xb8] sm:$0xff] 0.0
        %288 = vst [vmem:[#allocation2 + $0xc0] sm:$0xff] 0.0
        %289 = vst [vmem:[#allocation2 + $0xc8] sm:$0xff] 0.0
        %290 = vst [vmem:[#allocation2 + $0xd0] sm:$0xff] 0.0
        %291 = vst [vmem:[#allocation2 + $0xd8] sm:$0xff] 0.0
      $region36: #{simple_cnn_forward.4} parent=31 // pred_fallthru
        _
      %v292 = vld [vmem:[#allocation2] sm:$0xff]
      %v293 = vld [vmem:[#allocation2 + $0x8] sm:$0xff]
      %v294 = vld [vmem:[#allocation2 + $0x10] sm:$0xff]
      %v295 = vld [vmem:[#allocation2 + $0x18] sm:$0xff]
      %v296 = vld [vmem:[#allocation2 + $0x20] sm:$0xff]
      %v297 = vld [vmem:[#allocation2 + $0x28] sm:$0xff]
      %v298 = vld [vmem:[#allocation2 + $0x30] sm:$0xff]
      %v299 = vld [vmem:[#allocation2 + $0x38] sm:$0xff]
      %v300 = vld [vmem:[#allocation2 + $0x40] sm:$0xff]
      %v301 = vld [vmem:[#allocation2 + $0x48] sm:$0xff]
      %v302 = vld [vmem:[#allocation2 + $0x50] sm:$0xff]
      %v303 = vld [vmem:[#allocation2 + $0x58] sm:$0xff]
      %v304 = vld [vmem:[#allocation2 + $0x60] sm:$0xff]
      %v305 = vld [vmem:[#allocation2 + $0x68] sm:$0xff]
      %v306 = vld [vmem:[#allocation2 + $0x70] sm:$0xff]
      %v307 = vld [vmem:[#allocation2 + $0x78] sm:$0xff]
      %v308 = vld [vmem:[#allocation2 + $0x80] sm:$0xff]
      %v309 = vld [vmem:[#allocation2 + $0x88] sm:$0xff]
      %v310 = vld [vmem:[#allocation2 + $0x90] sm:$0xff]
      %v311 = vld [vmem:[#allocation2 + $0x98] sm:$0xff]
      %v312 = vld [vmem:[#allocation2 + $0xa0] sm:$0xff]
      %v313 = vld [vmem:[#allocation2 + $0xa8] sm:$0xff]
      %v314 = vld [vmem:[#allocation2 + $0xb0] sm:$0xff]
      %v315 = vld [vmem:[#allocation2 + $0xb8] sm:$0xff]
      %v316 = vld [vmem:[#allocation2 + $0xc0] sm:$0xff]
      %v317 = vld [vmem:[#allocation2 + $0xc8] sm:$0xff]
      %v318 = vld [vmem:[#allocation2 + $0xd0] sm:$0xff]
      %v319 = vld [vmem:[#allocation2 + $0xd8] sm:$0xff]
      %v320 = vld [vmem:[%s236] sm:$0xf]
      %v321 = vld [vmem:[%s236 + $0x4] sm:$0xf]
      %v322 = vld [vmem:[%s236 + $0x8] sm:$0xf]
      %v323 = vld [vmem:[%s236 + $0xc] sm:$0xf]
      %v324 = vld [vmem:[%s236 + $0x10] sm:$0xf]
      %v325 = vld [vmem:[%s236 + $0x14] sm:$0xf]
      %v326 = vld [vmem:[%s236 + $0x18] sm:$0xf]
      %v327 = vld [vmem:[%s236 + $0x1c] sm:$0xf]
      %v328 = vld [vmem:[%s236 + $0x20] sm:$0xf]
      %v329 = vld [vmem:[%s236 + $0x24] sm:$0xf]
      %v330 = vld [vmem:[%s236 + $0x28] sm:$0xf]
      %v331 = vld [vmem:[%s236 + $0x2c] sm:$0xf]
      %v332 = vld [vmem:[%s236 + $0x30] sm:$0xf]
      %v333 = vld [vmem:[%s236 + $0x34] sm:$0xf]
      %v334 = vld [vmem:[%s236 + $0x38] sm:$0xf]
      %v335 = vld [vmem:[%s236 + $0x3c] sm:$0xf]
      %v336 = vld [vmem:[%s236 + $0x40] sm:$0xf]
      %v337 = vld [vmem:[%s236 + $0x44] sm:$0xf]
      %v338 = vld [vmem:[%s236 + $0x48] sm:$0xf]
      %v339 = vld [vmem:[%s236 + $0x4c] sm:$0xf]
      %v340 = vld [vmem:[%s236 + $0x50] sm:$0xf]
      %v341 = vld [vmem:[%s236 + $0x54] sm:$0xf]
      %v342 = vld [vmem:[%s236 + $0x58] sm:$0xf]
      %v343 = vld [vmem:[%s236 + $0x5c] sm:$0xf]
      %v344 = vld [vmem:[%s236 + $0x60] sm:$0xf]
      %v345 = vld [vmem:[%s236 + $0x64] sm:$0xf]
      %v346 = vld [vmem:[%s236 + $0x68] sm:$0xf]
      %v347 = vld [vmem:[%s236 + $0x6c] sm:$0xf]
      %v348 = vld [vmem:[%s245] sm:$0xf]
      %v349 = vld [vmem:[%s245 + $0x4] sm:$0xf]
      %v350 = vld [vmem:[%s245 + $0x8] sm:$0xf]
      %v351 = vld [vmem:[%s245 + $0xc] sm:$0xf]
      %v352 = vld [vmem:[%s245 + $0x10] sm:$0xf]
      %v353 = vld [vmem:[%s245 + $0x14] sm:$0xf]
      %v354 = vld [vmem:[%s245 + $0x18] sm:$0xf]
      %v355 = vld [vmem:[%s245 + $0x1c] sm:$0xf]
      %v356 = vld [vmem:[%s245 + $0x20] sm:$0xf]
      %v357 = vld [vmem:[%s245 + $0x24] sm:$0xf]
      %v358 = vld [vmem:[%s245 + $0x28] sm:$0xf]
      %v359 = vld [vmem:[%s245 + $0x2c] sm:$0xf]
      %v360 = vld [vmem:[%s245 + $0x30] sm:$0xf]
      %v361 = vld [vmem:[%s245 + $0x34] sm:$0xf]
      %v362 = vld [vmem:[%s245 + $0x38] sm:$0xf]
      %v363 = vld [vmem:[%s245 + $0x3c] sm:$0xf]
      %v392 = vunpack.c.l.b16 %v320
      %v393 = vunpack.c.l.b16 %v321
      %v394 = vunpack.c.l.b16 %v322
      %v395 = vunpack.c.l.b16 %v323
      %v396 = vunpack.c.l.b16 %v324
      %v397 = vunpack.c.l.b16 %v325
      %v398 = vunpack.c.l.b16 %v326
      %v399 = vunpack.c.l.b16 %v327
      %v400 = vunpack.c.l.b16 %v328
      %v401 = vunpack.c.l.b16 %v329
      %v402 = vunpack.c.l.b16 %v330
      %v403 = vunpack.c.l.b16 %v331
      %v404 = vunpack.c.l.b16 %v332
      %v405 = vunpack.c.l.b16 %v333
      %v406 = vunpack.c.l.b16 %v334
      %v407 = vunpack.c.l.b16 %v335
      %v408 = vunpack.c.l.b16 %v336
      %v409 = vunpack.c.l.b16 %v337
      %v410 = vunpack.c.l.b16 %v338
      %v411 = vunpack.c.l.b16 %v339
      %v412 = vunpack.c.l.b16 %v340
      %v413 = vunpack.c.l.b16 %v341
      %v414 = vunpack.c.l.b16 %v342
      %v415 = vunpack.c.l.b16 %v343
      %v416 = vunpack.c.l.b16 %v344
      %v417 = vunpack.c.l.b16 %v345
      %v418 = vunpack.c.l.b16 %v346
      %v419 = vunpack.c.l.b16 %v347
      %v420 = vpack.c.b16 %v393, %v392
      %v421 = vpack.c.b16 %v395, %v394
      %v422 = vpack.c.b16 %v397, %v396
      %v423 = vpack.c.b16 %v399, %v398
      %v424 = vpack.c.b16 %v401, %v400
      %v425 = vpack.c.b16 %v403, %v402
      %v426 = vpack.c.b16 %v405, %v404
      %v427 = vpack.c.b16 %v407, %v406
      %v428 = vpack.c.b16 %v409, %v408
      %v429 = vpack.c.b16 %v411, %v410
      %v430 = vpack.c.b16 %v413, %v412
      %v431 = vpack.c.b16 %v415, %v414
      %v432 = vpack.c.b16 %v417, %v416
      %v433 = vpack.c.b16 %v419, %v418
      %v464 = vunpack.c.l.b16 %v348
      %v465 = vunpack.c.l.b16 %v349
      %v466 = vunpack.c.l.b16 %v350
      %v467 = vunpack.c.l.b16 %v351
      %v468 = vunpack.c.l.b16 %v352
      %v469 = vunpack.c.l.b16 %v353
      %v470 = vunpack.c.l.b16 %v354
      %v471 = vunpack.c.l.b16 %v355
      %v472 = vunpack.c.l.b16 %v356
      %v473 = vunpack.c.l.b16 %v357
      %v474 = vunpack.c.l.b16 %v358
      %v475 = vunpack.c.l.b16 %v359
      %v476 = vunpack.c.l.b16 %v360
      %v477 = vunpack.c.l.b16 %v361
      %v478 = vunpack.c.l.b16 %v362
      %v479 = vunpack.c.l.b16 %v363
      %v480 = vpack.c.b16 %v465, %v464
      %v481 = vpack.c.b16 %v467, %v466
      %v482 = vpack.c.b16 %v469, %v468
      %v483 = vpack.c.b16 %v471, %v470
      %v484 = vpack.c.b16 %v473, %v472
      %v485 = vpack.c.b16 %v475, %v474
      %v486 = vpack.c.b16 %v477, %v476
      %v487 = vpack.c.b16 %v479, %v478
      %496 = vmatprep.subr.bf16.mxu0 0
      %497 = vmatpush1.bf16.msra.mxu0 %v480
      %498 = vmatprep.subr.bf16.mxu0 0
      %499 = vmatpush1.bf16.msra.mxu0 %v481
      %500 = vmatprep.subr.bf16.mxu0 0
      %501 = vmatpush1.bf16.msra.mxu0 %v482
      %502 = vmatprep.subr.bf16.mxu0 0
      %503 = vmatpush1.bf16.msra.mxu0 %v483
      %504 = vmatprep.subr.bf16.mxu0 0
      %505 = vmatpush1.bf16.msra.mxu0 %v484
      %506 = vmatprep.subr.bf16.mxu0 0
      %507 = vmatpush1.bf16.msra.mxu0 %v485
      %508 = vmatprep.subr.bf16.mxu0 0
      %509 = vmatpush1.bf16.msra.mxu0 %v486
      %510 = vmatprep.subr.bf16.mxu0 0
      %511 = vmatpush1.bf16.msra.mxu0 %v487
      %512 = vmatprep.subr.bf16.mxu0 0
      %513 = vmatpush1.bf16.msra.mxu0 0
      %514 = vmatprep.subr.bf16.mxu0 0
      %515 = vmatpush1.bf16.msra.mxu0 0
      %516 = vmatprep.subr.bf16.mxu0 0
      %517 = vmatpush1.bf16.msra.mxu0 0
      %518 = vmatprep.subr.bf16.mxu0 0
      %519 = vmatpush1.bf16.msra.mxu0 0
      %520 = vmatprep.subr.bf16.mxu0 0
      %521 = vmatpush1.bf16.msra.mxu0 0
      %522 = vmatprep.subr.bf16.mxu0 0
      %523 = vmatpush1.bf16.msra.mxu0 0
      %524 = vmatprep.subr.bf16.mxu0 0
      %525 = vmatpush1.bf16.msra.mxu0 0
      %526 = vmatprep.subr.bf16.mxu0 0
      %527 = vmatpush1.bf16.msra.mxu0 0
      %528 = vmatprep.mubr.bf16.mxu0 0
      %529 = vmatmul.mubr.bf16.gmra.mrb[0].mxu0 %v420
      %v530 = vpop.f32.mrb[0].mxu0
      %v531 = vadd.f32 0.0, %v530
      %v532 = vpop.f32.mrb[0].mxu0
      %v533 = vpop.f32.mrb[0].mxu0
      %v534 = vadd.f32 0.0, %v533
      %v535 = vpop.f32.mrb[0].mxu0
      %536 = vmatprep.mubr.bf16.mxu0 0
      %537 = vmatmul.mubr.bf16.gmra.mrb[0].mxu0 %v421
      %v538 = vpop.f32.mrb[0].mxu0
      %v539 = vadd.f32 0.0, %v538
      %v540 = vpop.f32.mrb[0].mxu0
      %v541 = vpop.f32.mrb[0].mxu0
      %v542 = vadd.f32 0.0, %v541
      %v543 = vpop.f32.mrb[0].mxu0
      %544 = vmatprep.mubr.bf16.mxu0 0
      %545 = vmatmul.mubr.bf16.gmra.mrb[0].mxu0 %v422
      %v546 = vpop.f32.mrb[0].mxu0
      %v547 = vadd.f32 0.0, %v546
      %v548 = vpop.f32.mrb[0].mxu0
      %v549 = vpop.f32.mrb[0].mxu0
      %v550 = vadd.f32 0.0, %v549
      %v551 = vpop.f32.mrb[0].mxu0
      %552 = vmatprep.mubr.bf16.mxu0 0
      %553 = vmatmul.mubr.bf16.gmra.mrb[0].mxu0 %v423
      %v554 = vpop.f32.mrb[0].mxu0
      %v555 = vadd.f32 0.0, %v554
      %v556 = vpop.f32.mrb[0].mxu0
      %v557 = vpop.f32.mrb[0].mxu0
      %v558 = vadd.f32 0.0, %v557
      %v559 = vpop.f32.mrb[0].mxu0
      %560 = vmatprep.mubr.bf16.mxu0 0
      %561 = vmatmul.mubr.bf16.gmra.mrb[0].mxu0 %v424
      %v562 = vpop.f32.mrb[0].mxu0
      %v563 = vadd.f32 0.0, %v562
      %v564 = vpop.f32.mrb[0].mxu0
      %v565 = vpop.f32.mrb[0].mxu0
      %v566 = vadd.f32 0.0, %v565
      %v567 = vpop.f32.mrb[0].mxu0
      %568 = vmatprep.mubr.bf16.mxu0 0
      %569 = vmatmul.mubr.bf16.gmra.mrb[0].mxu0 %v425
      %v570 = vpop.f32.mrb[0].mxu0
      %v571 = vadd.f32 0.0, %v570
      %v572 = vpop.f32.mrb[0].mxu0
      %v573 = vpop.f32.mrb[0].mxu0
      %v574 = vadd.f32 0.0, %v573
      %v575 = vpop.f32.mrb[0].mxu0
      %576 = vmatprep.mubr.bf16.mxu0 0
      %577 = vmatmul.mubr.bf16.gmra.mrb[0].mxu0 %v426
      %v578 = vpop.f32.mrb[0].mxu0
      %v579 = vadd.f32 0.0, %v578
      %v580 = vpop.f32.mrb[0].mxu0
      %v581 = vpop.f32.mrb[0].mxu0
      %v582 = vadd.f32 0.0, %v581
      %v583 = vpop.f32.mrb[0].mxu0
      %584 = vmatprep.mubr.bf16.mxu0 0
      %585 = vmatmul.mubr.bf16.gmra.mrb[0].mxu0 %v427
      %v586 = vpop.f32.mrb[0].mxu0
      %v587 = vadd.f32 0.0, %v586
      %v588 = vpop.f32.mrb[0].mxu0
      %v589 = vpop.f32.mrb[0].mxu0
      %v590 = vadd.f32 0.0, %v589
      %v591 = vpop.f32.mrb[0].mxu0
      %592 = vmatprep.mubr.bf16.mxu0 0
      %593 = vmatmul.mubr.bf16.gmra.mrb[0].mxu0 %v428
      %v594 = vpop.f32.mrb[0].mxu0
      %v595 = vadd.f32 0.0, %v594
      %v596 = vpop.f32.mrb[0].mxu0
      %v597 = vpop.f32.mrb[0].mxu0
      %v598 = vadd.f32 0.0, %v597
      %v599 = vpop.f32.mrb[0].mxu0
      %600 = vmatprep.mubr.bf16.mxu0 0
      %601 = vmatmul.mubr.bf16.gmra.mrb[0].mxu0 %v429
      %v602 = vpop.f32.mrb[0].mxu0
      %v603 = vadd.f32 0.0, %v602
      %v604 = vpop.f32.mrb[0].mxu0
      %v605 = vpop.f32.mrb[0].mxu0
      %v606 = vadd.f32 0.0, %v605
      %v607 = vpop.f32.mrb[0].mxu0
      %608 = vmatprep.mubr.bf16.mxu0 0
      %609 = vmatmul.mubr.bf16.gmra.mrb[0].mxu0 %v430
      %v610 = vpop.f32.mrb[0].mxu0
      %v611 = vadd.f32 0.0, %v610
      %v612 = vpop.f32.mrb[0].mxu0
      %v613 = vpop.f32.mrb[0].mxu0
      %v614 = vadd.f32 0.0, %v613
      %v615 = vpop.f32.mrb[0].mxu0
      %616 = vmatprep.mubr.bf16.mxu0 0
      %617 = vmatmul.mubr.bf16.gmra.mrb[0].mxu0 %v431
      %v618 = vpop.f32.mrb[0].mxu0
      %v619 = vadd.f32 0.0, %v618
      %v620 = vpop.f32.mrb[0].mxu0
      %v621 = vpop.f32.mrb[0].mxu0
      %v622 = vadd.f32 0.0, %v621
      %v623 = vpop.f32.mrb[0].mxu0
      %624 = vmatprep.mubr.bf16.mxu0 0
      %625 = vmatmul.mubr.bf16.gmra.mrb[0].mxu0 %v432
      %v626 = vpop.f32.mrb[0].mxu0
      %v627 = vadd.f32 0.0, %v626
      %v628 = vpop.f32.mrb[0].mxu0
      %v629 = vpop.f32.mrb[0].mxu0
      %v630 = vadd.f32 0.0, %v629
      %v631 = vpop.f32.mrb[0].mxu0
      %632 = vmatprep.mubr.bf16.mxu0 0
      %633 = vmatmul.mubr.bf16.gmra.mrb[0].mxu0 %v433
      %v634 = vpop.f32.mrb[0].mxu0
      %v635 = vadd.f32 0.0, %v634
      %v636 = vpop.f32.mrb[0].mxu0
      %v637 = vpop.f32.mrb[0].mxu0
      %v638 = vadd.f32 0.0, %v637
      %v639 = vpop.f32.mrb[0].mxu0
      %640 = vdwg.mxu0
      %v641 = vadd.f32 %v292, %v531
      %v642 = vadd.f32 %v293, %v534
      %v643 = vadd.f32 %v294, %v539
      %v644 = vadd.f32 %v295, %v542
      %v645 = vadd.f32 %v296, %v547
      %v646 = vadd.f32 %v297, %v550
      %v647 = vadd.f32 %v298, %v555
      %v648 = vadd.f32 %v299, %v558
      %v649 = vadd.f32 %v300, %v563
      %v650 = vadd.f32 %v301, %v566
      %v651 = vadd.f32 %v302, %v571
      %v652 = vadd.f32 %v303, %v574
      %v653 = vadd.f32 %v304, %v579
      %v654 = vadd.f32 %v305, %v582
      %v655 = vadd.f32 %v306, %v587
      %v656 = vadd.f32 %v307, %v590
      %v657 = vadd.f32 %v308, %v595
      %v658 = vadd.f32 %v309, %v598
      %v659 = vadd.f32 %v310, %v603
      %v660 = vadd.f32 %v311, %v606
      %v661 = vadd.f32 %v312, %v611
      %v662 = vadd.f32 %v313, %v614
      %v663 = vadd.f32 %v314, %v619
      %v664 = vadd.f32 %v315, %v622
      %v665 = vadd.f32 %v316, %v627
      %v666 = vadd.f32 %v317, %v630
      %v667 = vadd.f32 %v318, %v635
      %v668 = vadd.f32 %v319, %v638
      %669 = vst [vmem:[#allocation2] sm:$0xff] %v641
      %670 = vst [vmem:[#allocation2 + $0x8] sm:$0xff] %v642
      %671 = vst [vmem:[#allocation2 + $0x10] sm:$0xff] %v643
      %672 = vst [vmem:[#allocation2 + $0x18] sm:$0xff] %v644
      %673 = vst [vmem:[#allocation2 + $0x20] sm:$0xff] %v645
      %674 = vst [vmem:[#allocation2 + $0x28] sm:$0xff] %v646
      %675 = vst [vmem:[#allocation2 + $0x30] sm:$0xff] %v647
      %676 = vst [vmem:[#allocation2 + $0x38] sm:$0xff] %v648
      %677 = vst [vmem:[#allocation2 + $0x40] sm:$0xff] %v649
      %678 = vst [vmem:[#allocation2 + $0x48] sm:$0xff] %v650
      %679 = vst [vmem:[#allocation2 + $0x50] sm:$0xff] %v651
      %680 = vst [vmem:[#allocation2 + $0x58] sm:$0xff] %v652
      %681 = vst [vmem:[#allocation2 + $0x60] sm:$0xff] %v653
      %682 = vst [vmem:[#allocation2 + $0x68] sm:$0xff] %v654
      %683 = vst [vmem:[#allocation2 + $0x70] sm:$0xff] %v655
      %684 = vst [vmem:[#allocation2 + $0x78] sm:$0xff] %v656
      %685 = vst [vmem:[#allocation2 + $0x80] sm:$0xff] %v657
      %686 = vst [vmem:[#allocation2 + $0x88] sm:$0xff] %v658
      %687 = vst [vmem:[#allocation2 + $0x90] sm:$0xff] %v659
      %688 = vst [vmem:[#allocation2 + $0x98] sm:$0xff] %v660
      %689 = vst [vmem:[#allocation2 + $0xa0] sm:$0xff] %v661
      %690 = vst [vmem:[#allocation2 + $0xa8] sm:$0xff] %v662
      %691 = vst [vmem:[#allocation2 + $0xb0] sm:$0xff] %v663
      %692 = vst [vmem:[#allocation2 + $0xb8] sm:$0xff] %v664
      %693 = vst [vmem:[#allocation2 + $0xc0] sm:$0xff] %v665
      %694 = vst [vmem:[#allocation2 + $0xc8] sm:$0xff] %v666
      %695 = vst [vmem:[#allocation2 + $0xd0] sm:$0xff] %v667
      %696 = vst [vmem:[#allocation2 + $0xd8] sm:$0xff] %v668
      // Predicated region
      $region37: #{simple_cnn_forward.4} parent=31 // pred_check
        %p697 = pneg %p260
      $region38: #{simple_cnn_forward.4} parent=31 // pred_check_branch
        %699 = sbr.rel (%p697) target = $region40
      $region39: #{simple_cnn_forward.4} parent=31 // pred_region
        %v700 = vld [vmem:[#allocation2] sm:$0xff]
        %v701 = vld [vmem:[#allocation2 + $0x8] sm:$0xff]
        %v702 = vld [vmem:[#allocation2 + $0x10] sm:$0xff]
        %v703 = vld [vmem:[#allocation2 + $0x18] sm:$0xff]
        %v704 = vld [vmem:[#allocation2 + $0x20] sm:$0xff]
        %v705 = vld [vmem:[#allocation2 + $0x28] sm:$0xff]
        %v706 = vld [vmem:[#allocation2 + $0x30] sm:$0xff]
        %v707 = vld [vmem:[#allocation2 + $0x38] sm:$0xff]
        %v708 = vld [vmem:[#allocation2 + $0x40] sm:$0xff]
        %v709 = vld [vmem:[#allocation2 + $0x48] sm:$0xff]
        %v710 = vld [vmem:[#allocation2 + $0x50] sm:$0xff]
        %v711 = vld [vmem:[#allocation2 + $0x58] sm:$0xff]
        %v712 = vld [vmem:[#allocation2 + $0x60] sm:$0xff]
        %v713 = vld [vmem:[#allocation2 + $0x68] sm:$0xff]
        %v714 = vld [vmem:[#allocation2 + $0x70] sm:$0xff]
        %v715 = vld [vmem:[#allocation2 + $0x78] sm:$0xff]
        %v716 = vld [vmem:[#allocation2 + $0x80] sm:$0xff]
        %v717 = vld [vmem:[#allocation2 + $0x88] sm:$0xff]
        %v718 = vld [vmem:[#allocation2 + $0x90] sm:$0xff]
        %v719 = vld [vmem:[#allocation2 + $0x98] sm:$0xff]
        %v720 = vld [vmem:[#allocation2 + $0xa0] sm:$0xff]
        %v721 = vld [vmem:[#allocation2 + $0xa8] sm:$0xff]
        %v722 = vld [vmem:[#allocation2 + $0xb0] sm:$0xff]
        %v723 = vld [vmem:[#allocation2 + $0xb8] sm:$0xff]
        %v724 = vld [vmem:[#allocation2 + $0xc0] sm:$0xff]
        %v725 = vld [vmem:[#allocation2 + $0xc8] sm:$0xff]
        %v726 = vld [vmem:[#allocation2 + $0xd0] sm:$0xff]
        %v727 = vld [vmem:[#allocation2 + $0xd8] sm:$0xff]
        %v728 = vld [vmem:[%s249] sm:$0x1]
        %v730 = vlaneseq
        %v731 = vshrl.u32 %v730, 7
        %v732 = vsub.s32 0, %v731
        %v733 = vrot.slane %v728, %v732
        %v735 = vadd.f32 %v700, %v733
        %v736 = vadd.f32 %v701, %v733
        %v737 = vadd.f32 %v702, %v733
        %v738 = vadd.f32 %v703, %v733
        %v739 = vadd.f32 %v704, %v733
        %v740 = vadd.f32 %v705, %v733
        %v741 = vadd.f32 %v706, %v733
        %v742 = vadd.f32 %v707, %v733
        %v743 = vadd.f32 %v708, %v733
        %v744 = vadd.f32 %v709, %v733
        %v745 = vadd.f32 %v710, %v733
        %v746 = vadd.f32 %v711, %v733
        %v747 = vadd.f32 %v712, %v733
        %v748 = vadd.f32 %v713, %v733
        %v749 = vadd.f32 %v714, %v733
        %v750 = vadd.f32 %v715, %v733
        %v751 = vadd.f32 %v716, %v733
        %v752 = vadd.f32 %v717, %v733
        %v753 = vadd.f32 %v718, %v733
        %v754 = vadd.f32 %v719, %v733
        %v755 = vadd.f32 %v720, %v733
        %v756 = vadd.f32 %v721, %v733
        %v757 = vadd.f32 %v722, %v733
        %v758 = vadd.f32 %v723, %v733
        %v759 = vadd.f32 %v724, %v733
        %v760 = vadd.f32 %v725, %v733
        %v761 = vadd.f32 %v726, %v733
        %v762 = vadd.f32 %v727, %v733
        %v763 = vmax.f32 %v735, 0.0
        %v764 = vmax.f32 %v736, 0.0
        %v765 = vmax.f32 %v737, 0.0
        %v766 = vmax.f32 %v738, 0.0
        %v767 = vmax.f32 %v739, 0.0
        %v768 = vmax.f32 %v740, 0.0
        %v769 = vmax.f32 %v741, 0.0
        %v770 = vmax.f32 %v742, 0.0
        %v771 = vmax.f32 %v743, 0.0
        %v772 = vmax.f32 %v744, 0.0
        %v773 = vmax.f32 %v745, 0.0
        %v774 = vmax.f32 %v746, 0.0
        %v775 = vmax.f32 %v747, 0.0
        %v776 = vmax.f32 %v748, 0.0
        %v777 = vmax.f32 %v749, 0.0
        %v778 = vmax.f32 %v750, 0.0
        %v779 = vmax.f32 %v751, 0.0
        %v780 = vmax.f32 %v752, 0.0
        %v781 = vmax.f32 %v753, 0.0
        %v782 = vmax.f32 %v754, 0.0
        %v783 = vmax.f32 %v755, 0.0
        %v784 = vmax.f32 %v756, 0.0
        %v785 = vmax.f32 %v757, 0.0
        %v786 = vmax.f32 %v758, 0.0
        %v787 = vmax.f32 %v759, 0.0
        %v788 = vmax.f32 %v760, 0.0
        %v789 = vmax.f32 %v761, 0.0
        %v790 = vmax.f32 %v762, 0.0
        %v791 = vpack.c.bf16 %v764, %v763
        %v792 = vpack.c.bf16 %v766, %v765
        %v793 = vpack.c.bf16 %v768, %v767
        %v794 = vpack.c.bf16 %v770, %v769
        %v795 = vpack.c.bf16 %v772, %v771
        %v796 = vpack.c.bf16 %v774, %v773
        %v797 = vpack.c.bf16 %v776, %v775
        %v798 = vpack.c.bf16 %v778, %v777
        %v799 = vpack.c.bf16 %v780, %v779
        %v800 = vpack.c.bf16 %v782, %v781
        %v801 = vpack.c.bf16 %v784, %v783
        %v802 = vpack.c.bf16 %v786, %v785
        %v803 = vpack.c.bf16 %v788, %v787
        %v804 = vpack.c.bf16 %v790, %v789
        %v819 = vunpack.c.l.b16 %v791
        %v820 = vunpack.c.h.b16 %v791
        %v821 = vunpack.c.l.b16 %v792
        %v822 = vunpack.c.h.b16 %v792
        %v823 = vunpack.c.l.b16 %v793
        %v824 = vunpack.c.h.b16 %v793
        %v825 = vunpack.c.l.b16 %v794
        %v826 = vunpack.c.h.b16 %v794
        %v827 = vunpack.c.l.b16 %v795
        %v828 = vunpack.c.h.b16 %v795
        %v829 = vunpack.c.l.b16 %v796
        %v830 = vunpack.c.h.b16 %v796
        %v831 = vunpack.c.l.b16 %v797
        %v832 = vunpack.c.h.b16 %v797
        %v833 = vunpack.c.l.b16 %v798
        %v834 = vunpack.c.h.b16 %v798
        %v835 = vunpack.c.l.b16 %v799
        %v836 = vunpack.c.h.b16 %v799
        %v837 = vunpack.c.l.b16 %v800
        %v838 = vunpack.c.h.b16 %v800
        %v839 = vunpack.c.l.b16 %v801
        %v840 = vunpack.c.h.b16 %v801
        %v841 = vunpack.c.l.b16 %v802
        %v842 = vunpack.c.h.b16 %v802
        %v843 = vunpack.c.l.b16 %v803
        %v844 = vunpack.c.h.b16 %v803
        %v845 = vunpack.c.l.b16 %v804
        %v846 = vunpack.c.h.b16 %v804
        %v847 = vpack.c.b16 %v819, %v819
        %v848 = vpack.c.b16 %v820, %v820
        %v849 = vpack.c.b16 %v821, %v821
        %v850 = vpack.c.b16 %v822, %v822
        %v851 = vpack.c.b16 %v823, %v823
        %v852 = vpack.c.b16 %v824, %v824
        %v853 = vpack.c.b16 %v825, %v825
        %v854 = vpack.c.b16 %v826, %v826
        %v855 = vpack.c.b16 %v827, %v827
        %v856 = vpack.c.b16 %v828, %v828
        %v857 = vpack.c.b16 %v829, %v829
        %v858 = vpack.c.b16 %v830, %v830
        %v859 = vpack.c.b16 %v831, %v831
        %v860 = vpack.c.b16 %v832, %v832
        %v861 = vpack.c.b16 %v833, %v833
        %v862 = vpack.c.b16 %v834, %v834
        %v863 = vpack.c.b16 %v835, %v835
        %v864 = vpack.c.b16 %v836, %v836
        %v865 = vpack.c.b16 %v837, %v837
        %v866 = vpack.c.b16 %v838, %v838
        %v867 = vpack.c.b16 %v839, %v839
        %v868 = vpack.c.b16 %v840, %v840
        %v869 = vpack.c.b16 %v841, %v841
        %v870 = vpack.c.b16 %v842, %v842
        %v871 = vpack.c.b16 %v843, %v843
        %v872 = vpack.c.b16 %v844, %v844
        %v873 = vpack.c.b16 %v845, %v845
        %v874 = vpack.c.b16 %v846, %v846
        %903 = vst [vmem:[%s257] sm:$0xf] %v847
        %904 = vst [vmem:[%s257 + $0x4] sm:$0xf] %v848
        %905 = vst [vmem:[%s257 + $0x8] sm:$0xf] %v849
        %906 = vst [vmem:[%s257 + $0xc] sm:$0xf] %v850
        %907 = vst [vmem:[%s257 + $0x10] sm:$0xf] %v851
        %908 = vst [vmem:[%s257 + $0x14] sm:$0xf] %v852
        %909 = vst [vmem:[%s257 + $0x18] sm:$0xf] %v853
        %910 = vst [vmem:[%s257 + $0x1c] sm:$0xf] %v854
        %911 = vst [vmem:[%s257 + $0x20] sm:$0xf] %v855
        %912 = vst [vmem:[%s257 + $0x24] sm:$0xf] %v856
        %913 = vst [vmem:[%s257 + $0x28] sm:$0xf] %v857
        %914 = vst [vmem:[%s257 + $0x2c] sm:$0xf] %v858
        %915 = vst [vmem:[%s257 + $0x30] sm:$0xf] %v859
        %916 = vst [vmem:[%s257 + $0x34] sm:$0xf] %v860
        %917 = vst [vmem:[%s257 + $0x38] sm:$0xf] %v861
        %918 = vst [vmem:[%s257 + $0x3c] sm:$0xf] %v862
        %919 = vst [vmem:[%s257 + $0x40] sm:$0xf] %v863
        %920 = vst [vmem:[%s257 + $0x44] sm:$0xf] %v864
        %921 = vst [vmem:[%s257 + $0x48] sm:$0xf] %v865
        %922 = vst [vmem:[%s257 + $0x4c] sm:$0xf] %v866
        %923 = vst [vmem:[%s257 + $0x50] sm:$0xf] %v867
        %924 = vst [vmem:[%s257 + $0x54] sm:$0xf] %v868
        %925 = vst [vmem:[%s257 + $0x58] sm:$0xf] %v869
        %926 = vst [vmem:[%s257 + $0x5c] sm:$0xf] %v870
        %927 = vst [vmem:[%s257 + $0x60] sm:$0xf] %v871
        %928 = vst [vmem:[%s257 + $0x64] sm:$0xf] %v872
        %929 = vst [vmem:[%s257 + $0x68] sm:$0xf] %v873
        %930 = vst [vmem:[%s257 + $0x6c] sm:$0xf] %v874
      $region40: #{simple_cnn_forward.4} parent=31 // pred_fallthru
        _
      %s931 = smul.u32 28, %s19
      %p932 = scmp.lt.s32.totalorder %s931, 195
      %s933 = scalar_select %p932, %s931, 195
      %p934 = scmp.lt.s32.totalorder %s20, 0
      %s935 = scalar_select %p934, %s20, 0
      %s936 = sadd.s32 %s935, %s933
      %s937 = smul.addr %s936, 4
      %s938 = scalar_lea.vmem %s3, %s937
      // Predicated region
      $region41: #{simple_cnn_forward.4} parent=31 // pred_check
        %p939 = pneg %p135
      $region42: #{simple_cnn_forward.4} parent=31 // pred_check_branch
        %941 = sbr.rel (%p939) target = $region44
      $region43: #{simple_cnn_forward.4} parent=31 // pred_region
        %s942 = smul.u32 28, %s19
      $region44: #{simple_cnn_forward.4} parent=31 // pred_fallthru
        _
    $region32: #{simple_cnn_forward.4} parent=5 // pred_fallthru
      _
    %p943 = scmp.le.s32.totalorder 2, %s9
    // Predicated region
    $region45: #{simple_cnn_forward.4} parent=5 // pred_check
      %p944 = pneg %p943
    $region46: #{simple_cnn_forward.4} parent=5 // pred_check_branch
      %946 = sbr.rel (%p944) target = $region48
    $region47: #{simple_cnn_forward.4} parent=5 // pred_region
      %s947 = ssub.s32 %s9, 2
      // Predicated region
      $region49: #{simple_cnn_forward.4} parent=47 // pred_check
        %p948 = pneg %p141
      $region50: #{simple_cnn_forward.4} parent=47 // pred_check_branch
        %950 = sbr.rel (%p948) target = $region52
      $region51: #{simple_cnn_forward.4} parent=47 // pred_region
        %s951 = smul.u32 28, %s22
        %p952 = scmp.lt.s32.totalorder %s951, 195
        %s953 = scalar_select %p952, %s951, 195
        %p954 = scmp.lt.s32.totalorder %s23, 0
        %s955 = scalar_select %p954, %s23, 0
        %s956 = sadd.s32 %s955, %s953
        %s957 = smul.addr %s956, 4
        %s958 = scalar_lea.vmem %s3, %s957
      $region52: #{simple_cnn_forward.4} parent=47 // pred_fallthru
        _
    $region48: #{simple_cnn_forward.4} parent=5 // pred_fallthru
      _
  $region6: #{simple_cnn_forward.4} parent=0 // loop_footer
    %s13 = sadd.s32 1, %s9
  $region7: #{simple_cnn_forward.4} parent=0 // loop_footer_branch
    %8 = sbr.rel target = $region3
  $region8: #{simple_cnn_forward.4} parent=0 // loop_exit
    _

// kernel: simple_cnn_forward.5
$region0: #{simple_cnn_forward.5}
  #allocation0 [shape = 'u32[]', space=smem, size = 0x4, offset = 0x4, fixed_abs, tag = 'smem constant byte address 0x4 - core index']
  #allocation1 [shape = 'u32[144,128]{1,0:T(1,128)}', space=vmem, size = 0x12000, scoped, tag = 'internal scratch']
  #allocation2 [shape = 'f32[224,128]{1,0:T(8,128)}', space=vmem, size = 0x1c000, scoped, tag = 'scratch operand']
  %s0 = inlined_call_operand.vmem [shape: bf16[1568,384], index: 0, kind: input, shape index: {}]
  %s1 = inlined_call_operand.vmem [shape: bf16[384,128], index: 1, kind: input, shape index: {}]
  %s2 = inlined_call_operand.vmem [shape: f32[1,128], index: 2, kind: input, shape index: {}]
  %s3 = inlined_call_operand.vmem [shape: bf16[1568,128], index: 3, kind: output, shape index: {}]
  %s4 = sld [smem:[#allocation0]]
  $region53: #{simple_cnn_forward.5} parent=0
    _
  %s6 = ssub.s32 1, %s4
  %s7 = scalar_select 0, %s6, %s4
  loop: start=0, step=1, limit=9
  $region2: #{simple_cnn_forward.5} parent=0 // loop_pre_header
    _
  $region3: #{simple_cnn_forward.5} parent=0 // loop_header
    %s9 = sphi 0, %s13
    %p10 = scmp.ge.s32.totalorder %s9, 9
    %s16 = sphi 0, %s35
    %s17 = sphi 0, %s31
    %s18 = sphi 0, %s27
    %s19 = sphi 0, %s16
    %s20 = sphi 0, %s17
    %s21 = sphi 0, %s18
    %s22 = sphi 0, %s19
    %s23 = sphi 0, %s20
    %s24 = sphi 0, %s21
    %s40 = sphi 0, %s42
    %s43 = sphi 0, %s40
    %s44 = sphi 0, %s43
    %s60 = sphi 0, %s44
    %s68 = sphi 0, %s70
    %s71 = sphi 0, %s68
    %s72 = sphi 0, %s71
    %s88 = sphi 0, %s72
    %s94 = sphi 0, %s96
    %s97 = sphi 0, %s94
    %s98 = sphi 0, %s97
    %s114 = sphi 0, %s98
    %s122 = sphi 0, %s124
    %s125 = sphi 0, %s122
    %s126 = sphi 0, %s125
    %s142 = sphi 0, %s126
  $region4: #{simple_cnn_forward.5} parent=0 // loop_header_branch
    %12 = sbr.rel (%p10) target = $region8
  $region5: #{simple_cnn_forward.5} parent=0 // loop_body
    %s14 = ssub.s32 %s9, 1
    %s15 = ssub.s32 %s9, 2
    %s25 = sadd.s32 1, %s18
    %p26 = scmp.ge.s32.totalorder %s25, 1
    %s27 = scalar_select %p26, 0, %s25
    %s28 = sadd.s32 1, %s17
    %s29 = scalar_select %p26, %s28, %s17
    %p30 = scmp.ge.s32.totalorder %s29, 1
    %s31 = scalar_select %p30, 0, %s29
    %s32 = sadd.s32 1, %s16
    %s33 = scalar_select %p30, %s32, %s16
    %p34 = scmp.ge.s32.totalorder %s33, 7
    %s35 = scalar_select %p34, 0, %s33
    %s36 = ssub.s32 %s16, %s35
    %s37 = ssub.s32 %s18, %s27
    %s38 = sor.u32 %s36, %s37
    %p39 = scmp.eq.s32.totalorder %s38, 0
    %s41 = sadd.s32 %s40, 1
    %s42 = scalar_select %p39, %s40, %s41
    %p45 = pneg %p39
    %p46 = scmp.eq.s32.totalorder %s9, 6
    %p47 = por %p45, %p46
    %p48 = scmp.ne.s32.totalorder %s40, %s43
    %p49 = scmp.eq.s32.totalorder %s9, 0
    %p50 = por %p48, %p49
    %p51 = scmp.ne.s32.totalorder %s40, %s43
    %p52 = scmp.eq.s32.totalorder %s14, 6
    %p53 = por %p51, %p52
    %p54 = scmp.ne.s32.totalorder %s43, %s44
    %p55 = scmp.eq.s32.totalorder %s14, 0
    %p56 = por %p54, %p55
    %p57 = scmp.ne.s32.totalorder %s43, %s44
    %p58 = scmp.eq.s32.totalorder %s15, 6
    %p59 = por %p57, %p58
    %p61 = scmp.ne.s32.totalorder %s44, %s60
    %p62 = scmp.eq.s32.totalorder %s15, 0
    %p63 = por %p61, %p62
    %s64 = ssub.s32 %s18, %s27
    %s65 = ssub.s32 %s17, %s31
    %s66 = sor.u32 %s64, %s65
    %p67 = scmp.eq.s32.totalorder %s66, 0
    %s69 = sadd.s32 %s68, 1
    %s70 = scalar_select %p67, %s68, %s69
    %p73 = pneg %p67
    %p74 = scmp.eq.s32.totalorder %s9, 6
    %p75 = por %p73, %p74
    %p76 = scmp.ne.s32.totalorder %s68, %s71
    %p77 = scmp.eq.s32.totalorder %s9, 0
    %p78 = por %p76, %p77
    %p79 = scmp.ne.s32.totalorder %s68, %s71
    %p80 = scmp.eq.s32.totalorder %s14, 6
    %p81 = por %p79, %p80
    %p82 = scmp.ne.s32.totalorder %s71, %s72
    %p83 = scmp.eq.s32.totalorder %s14, 0
    %p84 = por %p82, %p83
    %p85 = scmp.ne.s32.totalorder %s71, %s72
    %p86 = scmp.eq.s32.totalorder %s15, 6
    %p87 = por %p85, %p86
    %p89 = scmp.ne.s32.totalorder %s72, %s88
    %p90 = scmp.eq.s32.totalorder %s15, 0
    %p91 = por %p89, %p90
    %s92 = ssub.s32 %s17, %s31
    %p93 = scmp.eq.s32.totalorder %s92, 0
    %s95 = sadd.s32 %s94, 1
    %s96 = scalar_select %p93, %s94, %s95
    %p99 = pneg %p93
    %p100 = scmp.eq.s32.totalorder %s9, 6
    %p101 = por %p99, %p100
    %p102 = scmp.ne.s32.totalorder %s94, %s97
    %p103 = scmp.eq.s32.totalorder %s9, 0
    %p104 = por %p102, %p103
    %p105 = scmp.ne.s32.totalorder %s94, %s97
    %p106 = scmp.eq.s32.totalorder %s14, 6
    %p107 = por %p105, %p106
    %p108 = scmp.ne.s32.totalorder %s97, %s98
    %p109 = scmp.eq.s32.totalorder %s14, 0
    %p110 = por %p108, %p109
    %p111 = scmp.ne.s32.totalorder %s97, %s98
    %p112 = scmp.eq.s32.totalorder %s15, 6
    %p113 = por %p111, %p112
    %p115 = scmp.ne.s32.totalorder %s98, %s114
    %p116 = scmp.eq.s32.totalorder %s15, 0
    %p117 = por %p115, %p116
    %s118 = ssub.s32 %s16, %s35
    %s119 = ssub.s32 %s17, %s31
    %s120 = sor.u32 %s118, %s119
    %p121 = scmp.eq.s32.totalorder %s120, 0
    %s123 = sadd.s32 %s122, 1
    %s124 = scalar_select %p121, %s122, %s123
    %p127 = pneg %p121
    %p128 = scmp.eq.s32.totalorder %s9, 6
    %p129 = por %p127, %p128
    %p130 = scmp.ne.s32.totalorder %s122, %s125
    %p131 = scmp.eq.s32.totalorder %s9, 0
    %p132 = por %p130, %p131
    %p133 = scmp.ne.s32.totalorder %s122, %s125
    %p134 = scmp.eq.s32.totalorder %s14, 6
    %p135 = por %p133, %p134
    %p136 = scmp.ne.s32.totalorder %s125, %s126
    %p137 = scmp.eq.s32.totalorder %s14, 0
    %p138 = por %p136, %p137
    %p139 = scmp.ne.s32.totalorder %s125, %s126
    %p140 = scmp.eq.s32.totalorder %s15, 6
    %p141 = por %p139, %p140
    %p143 = scmp.ne.s32.totalorder %s126, %s142
    %p144 = scmp.eq.s32.totalorder %s15, 0
    %p145 = por %p143, %p144
    %p146 = scmp.le.s32.totalorder 1, %s9
    %p147 = scmp.lt.s32.totalorder %s9, 8
    %p148 = pnand %p146, %p147
    %p149 = pneg %p148
    // Predicated region
    $region9: #{simple_cnn_forward.5} parent=5 // pred_check
      _
    $region10: #{simple_cnn_forward.5} parent=5 // pred_check_branch
      %151 = sbr.rel (%p148) target = $region12
    $region11: #{simple_cnn_forward.5} parent=5 // pred_region
      %s152 = ssub.s32 %s9, 1
      // Predicated region
      $region13: #{simple_cnn_forward.5} parent=11 // pred_check
        %p153 = pneg %p84
      $region14: #{simple_cnn_forward.5} parent=11 // pred_check_branch
        %155 = sbr.rel (%p153) target = $region16
      $region15: #{simple_cnn_forward.5} parent=11 // pred_region
        %s156 = smul.u32 48, %s21
        %p157 = scmp.lt.s32.totalorder %s156, 47
        %s158 = scalar_select %p157, %s156, 47
        %p159 = scmp.lt.s32.totalorder %s20, 0
        %s160 = scalar_select %p159, %s20, 0
        %s161 = sadd.s32 %s160, %s158
        %s162 = smul.addr %s161, 4
        %s163 = scalar_lea.vmem %s1, %s162
        %s164 = smul.u32 48, %s21
      $region16: #{simple_cnn_forward.5} parent=11 // pred_fallthru
        _
      // Predicated region
      $region17: #{simple_cnn_forward.5} parent=11 // pred_check
        %p165 = pneg %p110
      $region18: #{simple_cnn_forward.5} parent=11 // pred_check_branch
        %167 = sbr.rel (%p165) target = $region20
      $region19: #{simple_cnn_forward.5} parent=11 // pred_region
        %p168 = scmp.lt.s32.totalorder %s20, 0
        %s169 = scalar_select %p168, %s20, 0
        %s170 = scalar_lea.vmem %s2, %s169
      $region20: #{simple_cnn_forward.5} parent=11 // pred_fallthru
        _
    $region12: #{simple_cnn_forward.5} parent=5 // pred_fallthru
      _
    %p171 = scmp.lt.s32.totalorder %s9, 7
    // Predicated region
    $region21: #{simple_cnn_forward.5} parent=5 // pred_check
      %p172 = pneg %p171
    $region22: #{simple_cnn_forward.5} parent=5 // pred_check_branch
      %174 = sbr.rel (%p172) target = $region24
    $region23: #{simple_cnn_forward.5} parent=5 // pred_region
      // Predicated region
      $region25: #{simple_cnn_forward.5} parent=23 // pred_check
        %p175 = pneg %p50
      $region26: #{simple_cnn_forward.5} parent=23 // pred_check_branch
        %177 = sbr.rel (%p175) target = $region28
      $region27: #{simple_cnn_forward.5} parent=23 // pred_region
        %s178 = smul.u32 28, %s16
        %s179 = smul.u32 3, %s18
        %p180 = scmp.lt.s32.totalorder %s178, 195
        %s181 = scalar_select %p180, %s178, 195
        %p182 = scmp.lt.s32.totalorder %s179, 2
        %s183 = scalar_select %p182, %s179, 2
        %s184 = smul.addr %s181, 3
        %s185 = sadd.s32 %s183, %s184
        %s186 = smul.addr %s185, 4
        %s187 = scalar_lea.vmem %s0, %s186
        %s188 = smul.u32 28, %s16
        %s189 = smul.u32 3, %s18
      $region28: #{simple_cnn_forward.5} parent=23 // pred_fallthru
        _
    $region24: #{simple_cnn_forward.5} parent=5 // pred_fallthru
      _
    %p190 = scmp.le.s32.totalorder 1, %s9
    %p191 = scmp.lt.s32.totalorder %s9, 8
    %p192 = pnand %p190, %p191
    %p193 = pneg %p192
    // Predicated region
    $region29: #{simple_cnn_forward.5} parent=5 // pred_check
      _
    $region30: #{simple_cnn_forward.5} parent=5 // pred_check_branch
      %195 = sbr.rel (%p192) target = $region32
    $region31: #{simple_cnn_forward.5} parent=5 // pred_region
      %s196 = ssub.s32 %s9, 1
      %s197 = smul.u32 28, %s19
      %s198 = smul.u32 3, %s21
      %p199 = scmp.lt.s32.totalorder %s197, 195
      %s200 = scalar_select %p199, %s197, 195
      %p201 = scmp.lt.s32.totalorder %s198, 2
      %s202 = scalar_select %p201, %s198, 2
      %s203 = smul.addr %s200, 3
      %s204 = sadd.s32 %s202, %s203
      %s205 = smul.addr %s204, 4
      %s206 = scalar_lea.vmem %s0, %s205
      %p207 = pneg %p56
      %p208 = pneg %p53
      %s209 = smul.u32 48, %s21
      %p210 = scmp.lt.s32.totalorder %s209, 47
      %s211 = scalar_select %p210, %s209, 47
      %p212 = scmp.lt.s32.totalorder %s20, 0
      %s213 = scalar_select %p212, %s20, 0
      %s214 = sadd.s32 %s213, %s211
      %s215 = smul.addr %s214, 4
      %s216 = scalar_lea.vmem %s1, %s215
      %p217 = pneg %p84
      %p218 = pneg %p81
      %p219 = scmp.lt.s32.totalorder %s20, 0
      %s220 = scalar_select %p219, %s20, 0
      %s221 = scalar_lea.vmem %s2, %s220
      %p222 = pneg %p110
      %p223 = pneg %p107
      %p224 = pneg %p138
      %p225 = pneg %p135
      %s226 = smul.u32 28, %s19
      %p227 = scmp.lt.s32.totalorder %s226, 195
      %s228 = scalar_select %p227, %s226, 195
      %p229 = scmp.lt.s32.totalorder %s20, 0
      %s230 = scalar_select %p229, %s20, 0
      %s231 = sadd.s32 %s230, %s228
      %s232 = smul.addr %s231, 4
      %s233 = scalar_lea.vmem %s3, %s232
      %s234 = smul.u32 28, %s19
      %s235 = smul.u32 3, %s21
      %p236 = scmp.lt.s32.totalorder %s234, 195
      %s237 = scalar_select %p236, %s234, 195
      %p238 = scmp.lt.s32.totalorder %s235, 2
      %s239 = scalar_select %p238, %s235, 2
      %s240 = smul.addr %s237, 3
      %s241 = sadd.s32 %s239, %s240
      %s242 = smul.addr %s241, 4
      %s243 = scalar_lea.vmem %s0, %s242
      %s244 = smul.u32 28, %s19
      %s245 = smul.u32 3, %s21
      %s246 = smul.u32 48, %s21
      %p247 = scmp.lt.s32.totalorder %s246, 47
      %s248 = scalar_select %p247, %s246, 47
      %p249 = scmp.lt.s32.totalorder %s20, 0
      %s250 = scalar_select %p249, %s20, 0
      %s251 = sadd.s32 %s250, %s248
      %s252 = smul.addr %s251, 4
      %s253 = scalar_lea.vmem %s1, %s252
      %s254 = smul.u32 48, %s21
      %p255 = scmp.lt.s32.totalorder %s20, 0
      %s256 = scalar_select %p255, %s20, 0
      %s257 = scalar_lea.vmem %s2, %s256
      %s258 = smul.u32 28, %s19
      %p259 = scmp.lt.s32.totalorder %s258, 195
      %s260 = scalar_select %p259, %s258, 195
      %p261 = scmp.lt.s32.totalorder %s20, 0
      %s262 = scalar_select %p261, %s20, 0
      %s263 = sadd.s32 %s262, %s260
      %s264 = smul.addr %s263, 4
      %s265 = scalar_lea.vmem %s3, %s264
      %s266 = smul.u32 28, %s19
      %p268 = scmp.eq.s32.totalorder %s21, 0
      // Predicated region
      $region33: #{simple_cnn_forward.5} parent=31 // pred_check
        %p269 = pneg %p268
      $region34: #{simple_cnn_forward.5} parent=31 // pred_check_branch
        %271 = sbr.rel (%p269) target = $region36
      $region35: #{simple_cnn_forward.5} parent=31 // pred_region
        %272 = vst [vmem:[#allocation2] sm:$0xff] 0.0
        %273 = vst [vmem:[#allocation2 + $0x8] sm:$0xff] 0.0
        %274 = vst [vmem:[#allocation2 + $0x10] sm:$0xff] 0.0
        %275 = vst [vmem:[#allocation2 + $0x18] sm:$0xff] 0.0
        %276 = vst [vmem:[#allocation2 + $0x20] sm:$0xff] 0.0
        %277 = vst [vmem:[#allocation2 + $0x28] sm:$0xff] 0.0
        %278 = vst [vmem:[#allocation2 + $0x30] sm:$0xff] 0.0
        %279 = vst [vmem:[#allocation2 + $0x38] sm:$0xff] 0.0
        %280 = vst [vmem:[#allocation2 + $0x40] sm:$0xff] 0.0
        %281 = vst [vmem:[#allocation2 + $0x48] sm:$0xff] 0.0
        %282 = vst [vmem:[#allocation2 + $0x50] sm:$0xff] 0.0
        %283 = vst [vmem:[#allocation2 + $0x58] sm:$0xff] 0.0
        %284 = vst [vmem:[#allocation2 + $0x60] sm:$0xff] 0.0
        %285 = vst [vmem:[#allocation2 + $0x68] sm:$0xff] 0.0
        %286 = vst [vmem:[#allocation2 + $0x70] sm:$0xff] 0.0
        %287 = vst [vmem:[#allocation2 + $0x78] sm:$0xff] 0.0
        %288 = vst [vmem:[#allocation2 + $0x80] sm:$0xff] 0.0
        %289 = vst [vmem:[#allocation2 + $0x88] sm:$0xff] 0.0
        %290 = vst [vmem:[#allocation2 + $0x90] sm:$0xff] 0.0
        %291 = vst [vmem:[#allocation2 + $0x98] sm:$0xff] 0.0
        %292 = vst [vmem:[#allocation2 + $0xa0] sm:$0xff] 0.0
        %293 = vst [vmem:[#allocation2 + $0xa8] sm:$0xff] 0.0
        %294 = vst [vmem:[#allocation2 + $0xb0] sm:$0xff] 0.0
        %295 = vst [vmem:[#allocation2 + $0xb8] sm:$0xff] 0.0
        %296 = vst [vmem:[#allocation2 + $0xc0] sm:$0xff] 0.0
        %297 = vst [vmem:[#allocation2 + $0xc8] sm:$0xff] 0.0
        %298 = vst [vmem:[#allocation2 + $0xd0] sm:$0xff] 0.0
        %299 = vst [vmem:[#allocation2 + $0xd8] sm:$0xff] 0.0
      $region36: #{simple_cnn_forward.5} parent=31 // pred_fallthru
        _
      %v300 = vld [vmem:[#allocation2] sm:$0xff]
      %v301 = vld [vmem:[#allocation2 + $0x8] sm:$0xff]
      %v302 = vld [vmem:[#allocation2 + $0x10] sm:$0xff]
      %v303 = vld [vmem:[#allocation2 + $0x18] sm:$0xff]
      %v304 = vld [vmem:[#allocation2 + $0x20] sm:$0xff]
      %v305 = vld [vmem:[#allocation2 + $0x28] sm:$0xff]
      %v306 = vld [vmem:[#allocation2 + $0x30] sm:$0xff]
      %v307 = vld [vmem:[#allocation2 + $0x38] sm:$0xff]
      %v308 = vld [vmem:[#allocation2 + $0x40] sm:$0xff]
      %v309 = vld [vmem:[#allocation2 + $0x48] sm:$0xff]
      %v310 = vld [vmem:[#allocation2 + $0x50] sm:$0xff]
      %v311 = vld [vmem:[#allocation2 + $0x58] sm:$0xff]
      %v312 = vld [vmem:[#allocation2 + $0x60] sm:$0xff]
      %v313 = vld [vmem:[#allocation2 + $0x68] sm:$0xff]
      %v314 = vld [vmem:[#allocation2 + $0x70] sm:$0xff]
      %v315 = vld [vmem:[#allocation2 + $0x78] sm:$0xff]
      %v316 = vld [vmem:[#allocation2 + $0x80] sm:$0xff]
      %v317 = vld [vmem:[#allocation2 + $0x88] sm:$0xff]
      %v318 = vld [vmem:[#allocation2 + $0x90] sm:$0xff]
      %v319 = vld [vmem:[#allocation2 + $0x98] sm:$0xff]
      %v320 = vld [vmem:[#allocation2 + $0xa0] sm:$0xff]
      %v321 = vld [vmem:[#allocation2 + $0xa8] sm:$0xff]
      %v322 = vld [vmem:[#allocation2 + $0xb0] sm:$0xff]
      %v323 = vld [vmem:[#allocation2 + $0xb8] sm:$0xff]
      %v324 = vld [vmem:[#allocation2 + $0xc0] sm:$0xff]
      %v325 = vld [vmem:[#allocation2 + $0xc8] sm:$0xff]
      %v326 = vld [vmem:[#allocation2 + $0xd0] sm:$0xff]
      %v327 = vld [vmem:[#allocation2 + $0xd8] sm:$0xff]
      %v328 = vld [vmem:[%s243] sm:$0xff]
      %v329 = vld [vmem:[%s243 + $0x8] sm:$0xf]
      %v330 = vld [vmem:[%s243 + $0xc] sm:$0xff]
      %v331 = vld [vmem:[%s243 + $0x14] sm:$0xf]
      %v332 = vld [vmem:[%s243 + $0x18] sm:$0xff]
      %v333 = vld [vmem:[%s243 + $0x20] sm:$0xf]
      %v334 = vld [vmem:[%s243 + $0x24] sm:$0xff]
      %v335 = vld [vmem:[%s243 + $0x2c] sm:$0xf]
      %v336 = vld [vmem:[%s243 + $0x30] sm:$0xff]
      %v337 = vld [vmem:[%s243 + $0x38] sm:$0xf]
      %v338 = vld [vmem:[%s243 + $0x3c] sm:$0xff]
      %v339 = vld [vmem:[%s243 + $0x44] sm:$0xf]
      %v340 = vld [vmem:[%s243 + $0x48] sm:$0xff]
      %v341 = vld [vmem:[%s243 + $0x50] sm:$0xf]
      %v342 = vld [vmem:[%s243 + $0x54] sm:$0xff]
      %v343 = vld [vmem:[%s243 + $0x5c] sm:$0xf]
      %v344 = vld [vmem:[%s243 + $0x60] sm:$0xff]
      %v345 = vld [vmem:[%s243 + $0x68] sm:$0xf]
      %v346 = vld [vmem:[%s243 + $0x6c] sm:$0xff]
      %v347 = vld [vmem:[%s243 + $0x74] sm:$0xf]
      %v348 = vld [vmem:[%s243 + $0x78] sm:$0xff]
      %v349 = vld [vmem:[%s243 + $0x80] sm:$0xf]
      %v350 = vld [vmem:[%s243 + $0x84] sm:$0xff]
      %v351 = vld [vmem:[%s243 + $0x8c] sm:$0xf]
      %v352 = vld [vmem:[%s243 + $0x90] sm:$0xff]
      %v353 = vld [vmem:[%s243 + $0x98] sm:$0xf]
      %v354 = vld [vmem:[%s243 + $0x9c] sm:$0xff]
      %v355 = vld [vmem:[%s243 + $0xa4] sm:$0xf]
      %v356 = vld [vmem:[%s243 + $0xa8] sm:$0xff]
      %v357 = vld [vmem:[%s243 + $0xb0] sm:$0xf]
      %v358 = vld [vmem:[%s243 + $0xb4] sm:$0xff]
      %v359 = vld [vmem:[%s243 + $0xbc] sm:$0xf]
      %v360 = vld [vmem:[%s243 + $0xc0] sm:$0xff]
      %v361 = vld [vmem:[%s243 + $0xc8] sm:$0xf]
      %v362 = vld [vmem:[%s243 + $0xcc] sm:$0xff]
      %v363 = vld [vmem:[%s243 + $0xd4] sm:$0xf]
      %v364 = vld [vmem:[%s243 + $0xd8] sm:$0xff]
      %v365 = vld [vmem:[%s243 + $0xe0] sm:$0xf]
      %v366 = vld [vmem:[%s243 + $0xe4] sm:$0xff]
      %v367 = vld [vmem:[%s243 + $0xec] sm:$0xf]
      %v368 = vld [vmem:[%s243 + $0xf0] sm:$0xff]
      %v369 = vld [vmem:[%s243 + $0xf8] sm:$0xf]
      %v370 = vld [vmem:[%s243 + $0xfc] sm:$0xff]
      %v371 = vld [vmem:[%s243 + $0x104] sm:$0xf]
      %v372 = vld [vmem:[%s243 + $0x108] sm:$0xff]
      %v373 = vld [vmem:[%s243 + $0x110] sm:$0xf]
      %v374 = vld [vmem:[%s243 + $0x114] sm:$0xff]
      %v375 = vld [vmem:[%s243 + $0x11c] sm:$0xf]
      %v376 = vld [vmem:[%s243 + $0x120] sm:$0xff]
      %v377 = vld [vmem:[%s243 + $0x128] sm:$0xf]
      %v378 = vld [vmem:[%s243 + $0x12c] sm:$0xff]
      %v379 = vld [vmem:[%s243 + $0x134] sm:$0xf]
      %v380 = vld [vmem:[%s243 + $0x138] sm:$0xff]
      %v381 = vld [vmem:[%s243 + $0x140] sm:$0xf]
      %v382 = vld [vmem:[%s243 + $0x144] sm:$0xff]
      %v383 = vld [vmem:[%s243 + $0x14c] sm:$0xf]
      %v384 = vld [vmem:[%s253] sm:$0xf]
      %v385 = vld [vmem:[%s253 + $0x4] sm:$0xf]
      %v386 = vld [vmem:[%s253 + $0x8] sm:$0xf]
      %v387 = vld [vmem:[%s253 + $0xc] sm:$0xf]
      %v388 = vld [vmem:[%s253 + $0x10] sm:$0xf]
      %v389 = vld [vmem:[%s253 + $0x14] sm:$0xf]
      %v390 = vld [vmem:[%s253 + $0x18] sm:$0xf]
      %v391 = vld [vmem:[%s253 + $0x1c] sm:$0xf]
      %v392 = vld [vmem:[%s253 + $0x20] sm:$0xf]
      %v393 = vld [vmem:[%s253 + $0x24] sm:$0xf]
      %v394 = vld [vmem:[%s253 + $0x28] sm:$0xf]
      %v395 = vld [vmem:[%s253 + $0x2c] sm:$0xf]
      %v396 = vld [vmem:[%s253 + $0x30] sm:$0xf]
      %v397 = vld [vmem:[%s253 + $0x34] sm:$0xf]
      %v398 = vld [vmem:[%s253 + $0x38] sm:$0xf]
      %v399 = vld [vmem:[%s253 + $0x3c] sm:$0xf]
      %v400 = vld [vmem:[%s253 + $0x40] sm:$0xf]
      %v401 = vld [vmem:[%s253 + $0x44] sm:$0xf]
      %v402 = vld [vmem:[%s253 + $0x48] sm:$0xf]
      %v403 = vld [vmem:[%s253 + $0x4c] sm:$0xf]
      %v404 = vld [vmem:[%s253 + $0x50] sm:$0xf]
      %v405 = vld [vmem:[%s253 + $0x54] sm:$0xf]
      %v406 = vld [vmem:[%s253 + $0x58] sm:$0xf]
      %v407 = vld [vmem:[%s253 + $0x5c] sm:$0xf]
      %v408 = vld [vmem:[%s253 + $0x60] sm:$0xf]
      %v409 = vld [vmem:[%s253 + $0x64] sm:$0xf]
      %v410 = vld [vmem:[%s253 + $0x68] sm:$0xf]
      %v411 = vld [vmem:[%s253 + $0x6c] sm:$0xf]
      %v412 = vld [vmem:[%s253 + $0x70] sm:$0xf]
      %v413 = vld [vmem:[%s253 + $0x74] sm:$0xf]
      %v414 = vld [vmem:[%s253 + $0x78] sm:$0xf]
      %v415 = vld [vmem:[%s253 + $0x7c] sm:$0xf]
      %v416 = vld [vmem:[%s253 + $0x80] sm:$0xf]
      %v417 = vld [vmem:[%s253 + $0x84] sm:$0xf]
      %v418 = vld [vmem:[%s253 + $0x88] sm:$0xf]
      %v419 = vld [vmem:[%s253 + $0x8c] sm:$0xf]
      %v420 = vld [vmem:[%s253 + $0x90] sm:$0xf]
      %v421 = vld [vmem:[%s253 + $0x94] sm:$0xf]
      %v422 = vld [vmem:[%s253 + $0x98] sm:$0xf]
      %v423 = vld [vmem:[%s253 + $0x9c] sm:$0xf]
      %v424 = vld [vmem:[%s253 + $0xa0] sm:$0xf]
      %v425 = vld [vmem:[%s253 + $0xa4] sm:$0xf]
      %v426 = vld [vmem:[%s253 + $0xa8] sm:$0xf]
      %v427 = vld [vmem:[%s253 + $0xac] sm:$0xf]
      %v428 = vld [vmem:[%s253 + $0xb0] sm:$0xf]
      %v429 = vld [vmem:[%s253 + $0xb4] sm:$0xf]
      %v430 = vld [vmem:[%s253 + $0xb8] sm:$0xf]
      %v431 = vld [vmem:[%s253 + $0xbc] sm:$0xf]
      %v488 = vunpack.c.l.b16 %v328
      %v489 = vunpack.c.h.b16 %v328
      %v490 = vunpack.c.l.b16 %v329
      %v491 = vunpack.c.l.b16 %v330
      %v492 = vunpack.c.h.b16 %v330
      %v493 = vunpack.c.l.b16 %v331
      %v494 = vunpack.c.l.b16 %v332
      %v495 = vunpack.c.h.b16 %v332
      %v496 = vunpack.c.l.b16 %v333
      %v497 = vunpack.c.l.b16 %v334
      %v498 = vunpack.c.h.b16 %v334
      %v499 = vunpack.c.l.b16 %v335
      %v500 = vunpack.c.l.b16 %v336
      %v501 = vunpack.c.h.b16 %v336
      %v502 = vunpack.c.l.b16 %v337
      %v503 = vunpack.c.l.b16 %v338
      %v504 = vunpack.c.h.b16 %v338
      %v505 = vunpack.c.l.b16 %v339
      %v506 = vunpack.c.l.b16 %v340
      %v507 = vunpack.c.h.b16 %v340
      %v508 = vunpack.c.l.b16 %v341
      %v509 = vunpack.c.l.b16 %v342
      %v510 = vunpack.c.h.b16 %v342
      %v511 = vunpack.c.l.b16 %v343
      %v512 = vunpack.c.l.b16 %v344
      %v513 = vunpack.c.h.b16 %v344
      %v514 = vunpack.c.l.b16 %v345
      %v515 = vunpack.c.l.b16 %v346
      %v516 = vunpack.c.h.b16 %v346
      %v517 = vunpack.c.l.b16 %v347
      %v518 = vunpack.c.l.b16 %v348
      %v519 = vunpack.c.h.b16 %v348
      %v520 = vunpack.c.l.b16 %v349
      %v521 = vunpack.c.l.b16 %v350
      %v522 = vunpack.c.h.b16 %v350
      %v523 = vunpack.c.l.b16 %v351
      %v524 = vunpack.c.l.b16 %v352
      %v525 = vunpack.c.h.b16 %v352
      %v526 = vunpack.c.l.b16 %v353
      %v527 = vunpack.c.l.b16 %v354
      %v528 = vunpack.c.h.b16 %v354
      %v529 = vunpack.c.l.b16 %v355
      %v530 = vunpack.c.l.b16 %v356
      %v531 = vunpack.c.h.b16 %v356
      %v532 = vunpack.c.l.b16 %v357
      %v533 = vunpack.c.l.b16 %v358
      %v534 = vunpack.c.h.b16 %v358
      %v535 = vunpack.c.l.b16 %v359
      %v536 = vunpack.c.l.b16 %v360
      %v537 = vunpack.c.h.b16 %v360
      %v538 = vunpack.c.l.b16 %v361
      %v539 = vunpack.c.l.b16 %v362
      %v540 = vunpack.c.h.b16 %v362
      %v541 = vunpack.c.l.b16 %v363
      %v542 = vunpack.c.l.b16 %v364
      %v543 = vunpack.c.h.b16 %v364
      %v544 = vunpack.c.l.b16 %v365
      %v545 = vunpack.c.l.b16 %v366
      %v546 = vunpack.c.h.b16 %v366
      %v547 = vunpack.c.l.b16 %v367
      %v548 = vunpack.c.l.b16 %v368
      %v549 = vunpack.c.h.b16 %v368
      %v550 = vunpack.c.l.b16 %v369
      %v551 = vunpack.c.l.b16 %v370
      %v552 = vunpack.c.h.b16 %v370
      %v553 = vunpack.c.l.b16 %v371
      %v554 = vunpack.c.l.b16 %v372
      %v555 = vunpack.c.h.b16 %v372
      %v556 = vunpack.c.l.b16 %v373
      %v557 = vunpack.c.l.b16 %v374
      %v558 = vunpack.c.h.b16 %v374
      %v559 = vunpack.c.l.b16 %v375
      %v560 = vunpack.c.l.b16 %v376
      %v561 = vunpack.c.h.b16 %v376
      %v562 = vunpack.c.l.b16 %v377
      %v563 = vunpack.c.l.b16 %v378
      %v564 = vunpack.c.h.b16 %v378
      %v565 = vunpack.c.l.b16 %v379
      %v566 = vunpack.c.l.b16 %v380
      %v567 = vunpack.c.h.b16 %v380
      %v568 = vunpack.c.l.b16 %v381
      %v569 = vunpack.c.l.b16 %v382
      %v570 = vunpack.c.h.b16 %v382
      %v571 = vunpack.c.l.b16 %v383
      %v572 = vpack.c.b16 %v491, %v488
      %v573 = vpack.c.b16 %v492, %v489
      %v574 = vpack.c.b16 %v493, %v490
      %v575 = vpack.c.b16 %v497, %v494
      %v576 = vpack.c.b16 %v498, %v495
      %v577 = vpack.c.b16 %v499, %v496
      %v578 = vpack.c.b16 %v503, %v500
      %v579 = vpack.c.b16 %v504, %v501
      %v580 = vpack.c.b16 %v505, %v502
      %v581 = vpack.c.b16 %v509, %v506
      %v582 = vpack.c.b16 %v510, %v507
      %v583 = vpack.c.b16 %v511, %v508
      %v584 = vpack.c.b16 %v515, %v512
      %v585 = vpack.c.b16 %v516, %v513
      %v586 = vpack.c.b16 %v517, %v514
      %v587 = vpack.c.b16 %v521, %v518
      %v588 = vpack.c.b16 %v522, %v519
      %v589 = vpack.c.b16 %v523, %v520
      %v590 = vpack.c.b16 %v527, %v524
      %v591 = vpack.c.b16 %v528, %v525
      %v592 = vpack.c.b16 %v529, %v526
      %v593 = vpack.c.b16 %v533, %v530
      %v594 = vpack.c.b16 %v534, %v531
      %v595 = vpack.c.b16 %v535, %v532
      %v596 = vpack.c.b16 %v539, %v536
      %v597 = vpack.c.b16 %v540, %v537
      %v598 = vpack.c.b16 %v541, %v538
      %v599 = vpack.c.b16 %v545, %v542
      %v600 = vpack.c.b16 %v546, %v543
      %v601 = vpack.c.b16 %v547, %v544
      %v602 = vpack.c.b16 %v551, %v548
      %v603 = vpack.c.b16 %v552, %v549
      %v604 = vpack.c.b16 %v553, %v550
      %v605 = vpack.c.b16 %v557, %v554
      %v606 = vpack.c.b16 %v558, %v555
      %v607 = vpack.c.b16 %v559, %v556
      %v608 = vpack.c.b16 %v563, %v560
      %v609 = vpack.c.b16 %v564, %v561
      %v610 = vpack.c.b16 %v565, %v562
      %v611 = vpack.c.b16 %v569, %v566
      %v612 = vpack.c.b16 %v570, %v567
      %v613 = vpack.c.b16 %v571, %v568
      %v704 = vunpack.c.l.b16 %v384
      %v705 = vunpack.c.l.b16 %v385
      %v706 = vunpack.c.l.b16 %v386
      %v707 = vunpack.c.l.b16 %v387
      %v708 = vunpack.c.l.b16 %v388
      %v709 = vunpack.c.l.b16 %v389
      %v710 = vunpack.c.l.b16 %v390
      %v711 = vunpack.c.l.b16 %v391
      %v712 = vunpack.c.l.b16 %v392
      %v713 = vunpack.c.l.b16 %v393
      %v714 = vunpack.c.l.b16 %v394
      %v715 = vunpack.c.l.b16 %v395
      %v716 = vunpack.c.l.b16 %v396
      %v717 = vunpack.c.l.b16 %v397
      %v718 = vunpack.c.l.b16 %v398
      %v719 = vunpack.c.l.b16 %v399
      %v720 = vunpack.c.l.b16 %v400
      %v721 = vunpack.c.l.b16 %v401
      %v722 = vunpack.c.l.b16 %v402
      %v723 = vunpack.c.l.b16 %v403
      %v724 = vunpack.c.l.b16 %v404
      %v725 = vunpack.c.l.b16 %v405
      %v726 = vunpack.c.l.b16 %v406
      %v727 = vunpack.c.l.b16 %v407
      %v728 = vunpack.c.l.b16 %v408
      %v729 = vunpack.c.l.b16 %v409
      %v730 = vunpack.c.l.b16 %v410
      %v731 = vunpack.c.l.b16 %v411
      %v732 = vunpack.c.l.b16 %v412
      %v733 = vunpack.c.l.b16 %v413
      %v734 = vunpack.c.l.b16 %v414
      %v735 = vunpack.c.l.b16 %v415
      %v736 = vunpack.c.l.b16 %v416
      %v737 = vunpack.c.l.b16 %v417
      %v738 = vunpack.c.l.b16 %v418
      %v739 = vunpack.c.l.b16 %v419
      %v740 = vunpack.c.l.b16 %v420
      %v741 = vunpack.c.l.b16 %v421
      %v742 = vunpack.c.l.b16 %v422
      %v743 = vunpack.c.l.b16 %v423
      %v744 = vunpack.c.l.b16 %v424
      %v745 = vunpack.c.l.b16 %v425
      %v746 = vunpack.c.l.b16 %v426
      %v747 = vunpack.c.l.b16 %v427
      %v748 = vunpack.c.l.b16 %v428
      %v749 = vunpack.c.l.b16 %v429
      %v750 = vunpack.c.l.b16 %v430
      %v751 = vunpack.c.l.b16 %v431
      %v752 = vpack.c.b16 %v705, %v704
      %v753 = vpack.c.b16 %v707, %v706
      %v754 = vpack.c.b16 %v709, %v708
      %v755 = vpack.c.b16 %v711, %v710
      %v756 = vpack.c.b16 %v713, %v712
      %v757 = vpack.c.b16 %v715, %v714
      %v758 = vpack.c.b16 %v717, %v716
      %v759 = vpack.c.b16 %v719, %v718
      %v760 = vpack.c.b16 %v721, %v720
      %v761 = vpack.c.b16 %v723, %v722
      %v762 = vpack.c.b16 %v725, %v724
      %v763 = vpack.c.b16 %v727, %v726
      %v764 = vpack.c.b16 %v729, %v728
      %v765 = vpack.c.b16 %v731, %v730
      %v766 = vpack.c.b16 %v733, %v732
      %v767 = vpack.c.b16 %v735, %v734
      %v768 = vpack.c.b16 %v737, %v736
      %v769 = vpack.c.b16 %v739, %v738
      %v770 = vpack.c.b16 %v741, %v740
      %v771 = vpack.c.b16 %v743, %v742
      %v772 = vpack.c.b16 %v745, %v744
      %v773 = vpack.c.b16 %v747, %v746
      %v774 = vpack.c.b16 %v749, %v748
      %v775 = vpack.c.b16 %v751, %v750
      %800 = vmatprep.subr.bf16.mxu0 0
      %801 = vmatpush1.bf16.msra.mxu0 %v752
      %802 = vmatprep.subr.bf16.mxu0 0
      %803 = vmatpush1.bf16.msra.mxu0 %v753
      %804 = vmatprep.subr.bf16.mxu0 0
      %805 = vmatpush1.bf16.msra.mxu0 %v754
      %806 = vmatprep.subr.bf16.mxu0 0
      %807 = vmatpush1.bf16.msra.mxu0 %v755
      %808 = vmatprep.subr.bf16.mxu0 0
      %809 = vmatpush1.bf16.msra.mxu0 %v756
      %810 = vmatprep.subr.bf16.mxu0 0
      %811 = vmatpush1.bf16.msra.mxu0 %v757
      %812 = vmatprep.subr.bf16.mxu0 0
      %813 = vmatpush1.bf16.msra.mxu0 %v758
      %814 = vmatprep.subr.bf16.mxu0 0
      %815 = vmatpush1.bf16.msra.mxu0 %v759
      %816 = vmatprep.subr.bf16.mxu0 0
      %817 = vmatpush1.bf16.msra.mxu0 %v760
      %818 = vmatprep.subr.bf16.mxu0 0
      %819 = vmatpush1.bf16.msra.mxu0 %v761
      %820 = vmatprep.subr.bf16.mxu0 0
      %821 = vmatpush1.bf16.msra.mxu0 %v762
      %822 = vmatprep.subr.bf16.mxu0 0
      %823 = vmatpush1.bf16.msra.mxu0 %v763
      %824 = vmatprep.subr.bf16.mxu0 0
      %825 = vmatpush1.bf16.msra.mxu0 %v764
      %826 = vmatprep.subr.bf16.mxu0 0
      %827 = vmatpush1.bf16.msra.mxu0 %v765
      %828 = vmatprep.subr.bf16.mxu0 0
      %829 = vmatpush1.bf16.msra.mxu0 %v766
      %830 = vmatprep.subr.bf16.mxu0 0
      %831 = vmatpush1.bf16.msra.mxu0 %v767
      %832 = vmatprep.mubr.bf16.mxu0 %v573
      %833 = vmatmul.mubr.bf16.gmra.mrb[0].mxu0 %v572
      %v834 = vpop.f32.mrb[0].mxu0
      %v835 = vadd.f32 0.0, %v834
      %v836 = vpop.f32.mrb[0].mxu0
      %v837 = vpop.f32.mrb[0].mxu0
      %v838 = vadd.f32 0.0, %v837
      %v839 = vpop.f32.mrb[0].mxu0
      %840 = vmatprep.mubr.bf16.mxu0 %v576
      %841 = vmatmul.mubr.bf16.gmra.mrb[0].mxu0 %v575
      %v842 = vpop.f32.mrb[0].mxu0
      %v843 = vadd.f32 0.0, %v842
      %v844 = vpop.f32.mrb[0].mxu0
      %v845 = vpop.f32.mrb[0].mxu0
      %v846 = vadd.f32 0.0, %v845
      %v847 = vpop.f32.mrb[0].mxu0
      %848 = vmatprep.mubr.bf16.mxu0 %v579
      %849 = vmatmul.mubr.bf16.gmra.mrb[0].mxu0 %v578
      %v850 = vpop.f32.mrb[0].mxu0
      %v851 = vadd.f32 0.0, %v850
      %v852 = vpop.f32.mrb[0].mxu0
      %v853 = vpop.f32.mrb[0].mxu0
      %v854 = vadd.f32 0.0, %v853
      %v855 = vpop.f32.mrb[0].mxu0
      %856 = vmatprep.mubr.bf16.mxu0 %v582
      %857 = vmatmul.mubr.bf16.gmra.mrb[0].mxu0 %v581
      %v858 = vpop.f32.mrb[0].mxu0
      %v859 = vadd.f32 0.0, %v858
      %v860 = vpop.f32.mrb[0].mxu0
      %v861 = vpop.f32.mrb[0].mxu0
      %v862 = vadd.f32 0.0, %v861
      %v863 = vpop.f32.mrb[0].mxu0
      %864 = vmatprep.mubr.bf16.mxu0 %v585
      %865 = vmatmul.mubr.bf16.gmra.mrb[0].mxu0 %v584
      %v866 = vpop.f32.mrb[0].mxu0
      %v867 = vadd.f32 0.0, %v866
      %v868 = vpop.f32.mrb[0].mxu0
      %v869 = vpop.f32.mrb[0].mxu0
      %v870 = vadd.f32 0.0, %v869
      %v871 = vpop.f32.mrb[0].mxu0
      %872 = vmatprep.mubr.bf16.mxu0 %v588
      %873 = vmatmul.mubr.bf16.gmra.mrb[0].mxu0 %v587
      %v874 = vpop.f32.mrb[0].mxu0
      %v875 = vadd.f32 0.0, %v874
      %v876 = vpop.f32.mrb[0].mxu0
      %v877 = vpop.f32.mrb[0].mxu0
      %v878 = vadd.f32 0.0, %v877
      %v879 = vpop.f32.mrb[0].mxu0
      %880 = vmatprep.mubr.bf16.mxu0 %v591
      %881 = vmatmul.mubr.bf16.gmra.mrb[0].mxu0 %v590
      %v882 = vpop.f32.mrb[0].mxu0
      %v883 = vadd.f32 0.0, %v882
      %v884 = vpop.f32.mrb[0].mxu0
      %v885 = vpop.f32.mrb[0].mxu0
      %v886 = vadd.f32 0.0, %v885
      %v887 = vpop.f32.mrb[0].mxu0
      %888 = vmatprep.mubr.bf16.mxu0 %v594
      %889 = vmatmul.mubr.bf16.gmra.mrb[0].mxu0 %v593
      %v890 = vpop.f32.mrb[0].mxu0
      %v891 = vadd.f32 0.0, %v890
      %v892 = vpop.f32.mrb[0].mxu0
      %v893 = vpop.f32.mrb[0].mxu0
      %v894 = vadd.f32 0.0, %v893
      %v895 = vpop.f32.mrb[0].mxu0
      %896 = vmatprep.mubr.bf16.mxu0 %v597
      %897 = vmatmul.mubr.bf16.gmra.mrb[0].mxu0 %v596
      %v898 = vpop.f32.mrb[0].mxu0
      %v899 = vadd.f32 0.0, %v898
      %v900 = vpop.f32.mrb[0].mxu0
      %v901 = vpop.f32.mrb[0].mxu0
      %v902 = vadd.f32 0.0, %v901
      %v903 = vpop.f32.mrb[0].mxu0
      %904 = vmatprep.mubr.bf16.mxu0 %v600
      %905 = vmatmul.mubr.bf16.gmra.mrb[0].mxu0 %v599
      %v906 = vpop.f32.mrb[0].mxu0
      %v907 = vadd.f32 0.0, %v906
      %v908 = vpop.f32.mrb[0].mxu0
      %v909 = vpop.f32.mrb[0].mxu0
      %v910 = vadd.f32 0.0, %v909
      %v911 = vpop.f32.mrb[0].mxu0
      %912 = vmatprep.mubr.bf16.mxu0 %v603
      %913 = vmatmul.mubr.bf16.gmra.mrb[0].mxu0 %v602
      %v914 = vpop.f32.mrb[0].mxu0
      %v915 = vadd.f32 0.0, %v914
      %v916 = vpop.f32.mrb[0].mxu0
      %v917 = vpop.f32.mrb[0].mxu0
      %v918 = vadd.f32 0.0, %v917
      %v919 = vpop.f32.mrb[0].mxu0
      %920 = vmatprep.mubr.bf16.mxu0 %v606
      %921 = vmatmul.mubr.bf16.gmra.mrb[0].mxu0 %v605
      %v922 = vpop.f32.mrb[0].mxu0
      %v923 = vadd.f32 0.0, %v922
      %v924 = vpop.f32.mrb[0].mxu0
      %v925 = vpop.f32.mrb[0].mxu0
      %v926 = vadd.f32 0.0, %v925
      %v927 = vpop.f32.mrb[0].mxu0
      %928 = vmatprep.mubr.bf16.mxu0 %v609
      %929 = vmatmul.mubr.bf16.gmra.mrb[0].mxu0 %v608
      %v930 = vpop.f32.mrb[0].mxu0
      %v931 = vadd.f32 0.0, %v930
      %v932 = vpop.f32.mrb[0].mxu0
      %v933 = vpop.f32.mrb[0].mxu0
      %v934 = vadd.f32 0.0, %v933
      %v935 = vpop.f32.mrb[0].mxu0
      %936 = vmatprep.mubr.bf16.mxu0 %v612
      %937 = vmatmul.mubr.bf16.gmra.mrb[0].mxu0 %v611
      %v938 = vpop.f32.mrb[0].mxu0
      %v939 = vadd.f32 0.0, %v938
      %v940 = vpop.f32.mrb[0].mxu0
      %v941 = vpop.f32.mrb[0].mxu0
      %v942 = vadd.f32 0.0, %v941
      %v943 = vpop.f32.mrb[0].mxu0
      %944 = vdwg.mxu0
      %945 = vmatprep.subr.bf16.mxu0 0
      %946 = vmatpush1.bf16.msra.mxu0 %v768
      %947 = vmatprep.subr.bf16.mxu0 0
      %948 = vmatpush1.bf16.msra.mxu0 %v769
      %949 = vmatprep.subr.bf16.mxu0 0
      %950 = vmatpush1.bf16.msra.mxu0 %v770
      %951 = vmatprep.subr.bf16.mxu0 0
      %952 = vmatpush1.bf16.msra.mxu0 %v771
      %953 = vmatprep.subr.bf16.mxu0 0
      %954 = vmatpush1.bf16.msra.mxu0 %v772
      %955 = vmatprep.subr.bf16.mxu0 0
      %956 = vmatpush1.bf16.msra.mxu0 %v773
      %957 = vmatprep.subr.bf16.mxu0 0
      %958 = vmatpush1.bf16.msra.mxu0 %v774
      %959 = vmatprep.subr.bf16.mxu0 0
      %960 = vmatpush1.bf16.msra.mxu0 %v775
      %961 = vmatprep.subr.bf16.mxu0 0
      %962 = vmatpush1.bf16.msra.mxu0 0
      %963 = vmatprep.subr.bf16.mxu0 0
      %964 = vmatpush1.bf16.msra.mxu0 0
      %965 = vmatprep.subr.bf16.mxu0 0
      %966 = vmatpush1.bf16.msra.mxu0 0
      %967 = vmatprep.subr.bf16.mxu0 0
      %968 = vmatpush1.bf16.msra.mxu0 0
      %969 = vmatprep.subr.bf16.mxu0 0
      %970 = vmatpush1.bf16.msra.mxu0 0
      %971 = vmatprep.subr.bf16.mxu0 0
      %972 = vmatpush1.bf16.msra.mxu0 0
      %973 = vmatprep.subr.bf16.mxu0 0
      %974 = vmatpush1.bf16.msra.mxu0 0
      %975 = vmatprep.subr.bf16.mxu0 0
      %976 = vmatpush1.bf16.msra.mxu0 0
      %977 = vmatprep.mubr.bf16.mxu0 0
      %978 = vmatmul.mubr.bf16.gmra.mrb[0].mxu0 %v574
      %v979 = vpop.f32.mrb[0].mxu0
      %v980 = vadd.f32 %v835, %v979
      %v981 = vpop.f32.mrb[0].mxu0
      %v982 = vpop.f32.mrb[0].mxu0
      %v983 = vadd.f32 %v838, %v982
      %v984 = vpop.f32.mrb[0].mxu0
      %985 = vmatprep.mubr.bf16.mxu0 0
      %986 = vmatmul.mubr.bf16.gmra.mrb[0].mxu0 %v577
      %v987 = vpop.f32.mrb[0].mxu0
      %v988 = vadd.f32 %v843, %v987
      %v989 = vpop.f32.mrb[0].mxu0
      %v990 = vpop.f32.mrb[0].mxu0
      %v991 = vadd.f32 %v846, %v990
      %v992 = vpop.f32.mrb[0].mxu0
      %993 = vmatprep.mubr.bf16.mxu0 0
      %994 = vmatmul.mubr.bf16.gmra.mrb[0].mxu0 %v580
      %v995 = vpop.f32.mrb[0].mxu0
      %v996 = vadd.f32 %v851, %v995
      %v997 = vpop.f32.mrb[0].mxu0
      %v998 = vpop.f32.mrb[0].mxu0
      %v999 = vadd.f32 %v854, %v998
      %v1000 = vpop.f32.mrb[0].mxu0
      %1001 = vmatprep.mubr.bf16.mxu0 0
      %1002 = vmatmul.mubr.bf16.gmra.mrb[0].mxu0 %v583
      %v1003 = vpop.f32.mrb[0].mxu0
      %v1004 = vadd.f32 %v859, %v1003
      %v1005 = vpop.f32.mrb[0].mxu0
      %v1006 = vpop.f32.mrb[0].mxu0
      %v1007 = vadd.f32 %v862, %v1006
      %v1008 = vpop.f32.mrb[0].mxu0
      %1009 = vmatprep.mubr.bf16.mxu0 0
      %1010 = vmatmul.mubr.bf16.gmra.mrb[0].mxu0 %v586
      %v1011 = vpop.f32.mrb[0].mxu0
      %v1012 = vadd.f32 %v867, %v1011
      %v1013 = vpop.f32.mrb[0].mxu0
      %v1014 = vpop.f32.mrb[0].mxu0
      %v1015 = vadd.f32 %v870, %v1014
      %v1016 = vpop.f32.mrb[0].mxu0
      %1017 = vmatprep.mubr.bf16.mxu0 0
      %1018 = vmatmul.mubr.bf16.gmra.mrb[0].mxu0 %v589
      %v1019 = vpop.f32.mrb[0].mxu0
      %v1020 = vadd.f32 %v875, %v1019
      %v1021 = vpop.f32.mrb[0].mxu0
      %v1022 = vpop.f32.mrb[0].mxu0
      %v1023 = vadd.f32 %v878, %v1022
      %v1024 = vpop.f32.mrb[0].mxu0
      %1025 = vmatprep.mubr.bf16.mxu0 0
      %1026 = vmatmul.mubr.bf16.gmra.mrb[0].mxu0 %v592
      %v1027 = vpop.f32.mrb[0].mxu0
      %v1028 = vadd.f32 %v883, %v1027
      %v1029 = vpop.f32.mrb[0].mxu0
      %v1030 = vpop.f32.mrb[0].mxu0
      %v1031 = vadd.f32 %v886, %v1030
      %v1032 = vpop.f32.mrb[0].mxu0
      %1033 = vmatprep.mubr.bf16.mxu0 0
      %1034 = vmatmul.mubr.bf16.gmra.mrb[0].mxu0 %v595
      %v1035 = vpop.f32.mrb[0].mxu0
      %v1036 = vadd.f32 %v891, %v1035
      %v1037 = vpop.f32.mrb[0].mxu0
      %v1038 = vpop.f32.mrb[0].mxu0
      %v1039 = vadd.f32 %v894, %v1038
      %v1040 = vpop.f32.mrb[0].mxu0
      %1041 = vmatprep.mubr.bf16.mxu0 0
      %1042 = vmatmul.mubr.bf16.gmra.mrb[0].mxu0 %v598
      %v1043 = vpop.f32.mrb[0].mxu0
      %v1044 = vadd.f32 %v899, %v1043
      %v1045 = vpop.f32.mrb[0].mxu0
      %v1046 = vpop.f32.mrb[0].mxu0
      %v1047 = vadd.f32 %v902, %v1046
      %v1048 = vpop.f32.mrb[0].mxu0
      %1049 = vmatprep.mubr.bf16.mxu0 0
      %1050 = vmatmul.mubr.bf16.gmra.mrb[0].mxu0 %v601
      %v1051 = vpop.f32.mrb[0].mxu0
      %v1052 = vadd.f32 %v907, %v1051
      %v1053 = vpop.f32.mrb[0].mxu0
      %v1054 = vpop.f32.mrb[0].mxu0
      %v1055 = vadd.f32 %v910, %v1054
      %v1056 = vpop.f32.mrb[0].mxu0
      %1057 = vmatprep.mubr.bf16.mxu0 0
      %1058 = vmatmul.mubr.bf16.gmra.mrb[0].mxu0 %v604
      %v1059 = vpop.f32.mrb[0].mxu0
      %v1060 = vadd.f32 %v915, %v1059
      %v1061 = vpop.f32.mrb[0].mxu0
      %v1062 = vpop.f32.mrb[0].mxu0
      %v1063 = vadd.f32 %v918, %v1062
      %v1064 = vpop.f32.mrb[0].mxu0
      %1065 = vmatprep.mubr.bf16.mxu0 0
      %1066 = vmatmul.mubr.bf16.gmra.mrb[0].mxu0 %v607
      %v1067 = vpop.f32.mrb[0].mxu0
      %v1068 = vadd.f32 %v923, %v1067
      %v1069 = vpop.f32.mrb[0].mxu0
      %v1070 = vpop.f32.mrb[0].mxu0
      %v1071 = vadd.f32 %v926, %v1070
      %v1072 = vpop.f32.mrb[0].mxu0
      %1073 = vmatprep.mubr.bf16.mxu0 0
      %1074 = vmatmul.mubr.bf16.gmra.mrb[0].mxu0 %v610
      %v1075 = vpop.f32.mrb[0].mxu0
      %v1076 = vadd.f32 %v931, %v1075
      %v1077 = vpop.f32.mrb[0].mxu0
      %v1078 = vpop.f32.mrb[0].mxu0
      %v1079 = vadd.f32 %v934, %v1078
      %v1080 = vpop.f32.mrb[0].mxu0
      %1081 = vmatprep.mubr.bf16.mxu0 0
      %1082 = vmatmul.mubr.bf16.gmra.mrb[0].mxu0 %v613
      %v1083 = vpop.f32.mrb[0].mxu0
      %v1084 = vadd.f32 %v939, %v1083
      %v1085 = vpop.f32.mrb[0].mxu0
      %v1086 = vpop.f32.mrb[0].mxu0
      %v1087 = vadd.f32 %v942, %v1086
      %v1088 = vpop.f32.mrb[0].mxu0
      %1089 = vdwg.mxu0
      %v1090 = vadd.f32 %v300, %v980
      %v1091 = vadd.f32 %v301, %v983
      %v1092 = vadd.f32 %v302, %v988
      %v1093 = vadd.f32 %v303, %v991
      %v1094 = vadd.f32 %v304, %v996
      %v1095 = vadd.f32 %v305, %v999
      %v1096 = vadd.f32 %v306, %v1004
      %v1097 = vadd.f32 %v307, %v1007
      %v1098 = vadd.f32 %v308, %v1012
      %v1099 = vadd.f32 %v309, %v1015
      %v1100 = vadd.f32 %v310, %v1020
      %v1101 = vadd.f32 %v311, %v1023
      %v1102 = vadd.f32 %v312, %v1028
      %v1103 = vadd.f32 %v313, %v1031
      %v1104 = vadd.f32 %v314, %v1036
      %v1105 = vadd.f32 %v315, %v1039
      %v1106 = vadd.f32 %v316, %v1044
      %v1107 = vadd.f32 %v317, %v1047
      %v1108 = vadd.f32 %v318, %v1052
      %v1109 = vadd.f32 %v319, %v1055
      %v1110 = vadd.f32 %v320, %v1060
      %v1111 = vadd.f32 %v321, %v1063
      %v1112 = vadd.f32 %v322, %v1068
      %v1113 = vadd.f32 %v323, %v1071
      %v1114 = vadd.f32 %v324, %v1076
      %v1115 = vadd.f32 %v325, %v1079
      %v1116 = vadd.f32 %v326, %v1084
      %v1117 = vadd.f32 %v327, %v1087
      %1118 = vst [vmem:[#allocation2] sm:$0xff] %v1090
      %1119 = vst [vmem:[#allocation2 + $0x8] sm:$0xff] %v1091
      %1120 = vst [vmem:[#allocation2 + $0x10] sm:$0xff] %v1092
      %1121 = vst [vmem:[#allocation2 + $0x18] sm:$0xff] %v1093
      %1122 = vst [vmem:[#allocation2 + $0x20] sm:$0xff] %v1094
      %1123 = vst [vmem:[#allocation2 + $0x28] sm:$0xff] %v1095
      %1124 = vst [vmem:[#allocation2 + $0x30] sm:$0xff] %v1096
      %1125 = vst [vmem:[#allocation2 + $0x38] sm:$0xff] %v1097
      %1126 = vst [vmem:[#allocation2 + $0x40] sm:$0xff] %v1098
      %1127 = vst [vmem:[#allocation2 + $0x48] sm:$0xff] %v1099
      %1128 = vst [vmem:[#allocation2 + $0x50] sm:$0xff] %v1100
      %1129 = vst [vmem:[#allocation2 + $0x58] sm:$0xff] %v1101
      %1130 = vst [vmem:[#allocation2 + $0x60] sm:$0xff] %v1102
      %1131 = vst [vmem:[#allocation2 + $0x68] sm:$0xff] %v1103
      %1132 = vst [vmem:[#allocation2 + $0x70] sm:$0xff] %v1104
      %1133 = vst [vmem:[#allocation2 + $0x78] sm:$0xff] %v1105
      %1134 = vst [vmem:[#allocation2 + $0x80] sm:$0xff] %v1106
      %1135 = vst [vmem:[#allocation2 + $0x88] sm:$0xff] %v1107
      %1136 = vst [vmem:[#allocation2 + $0x90] sm:$0xff] %v1108
      %1137 = vst [vmem:[#allocation2 + $0x98] sm:$0xff] %v1109
      %1138 = vst [vmem:[#allocation2 + $0xa0] sm:$0xff] %v1110
      %1139 = vst [vmem:[#allocation2 + $0xa8] sm:$0xff] %v1111
      %1140 = vst [vmem:[#allocation2 + $0xb0] sm:$0xff] %v1112
      %1141 = vst [vmem:[#allocation2 + $0xb8] sm:$0xff] %v1113
      %1142 = vst [vmem:[#allocation2 + $0xc0] sm:$0xff] %v1114
      %1143 = vst [vmem:[#allocation2 + $0xc8] sm:$0xff] %v1115
      %1144 = vst [vmem:[#allocation2 + $0xd0] sm:$0xff] %v1116
      %1145 = vst [vmem:[#allocation2 + $0xd8] sm:$0xff] %v1117
      // Predicated region
      $region37: #{simple_cnn_forward.5} parent=31 // pred_check
        %p1146 = pneg %p268
      $region38: #{simple_cnn_forward.5} parent=31 // pred_check_branch
        %1148 = sbr.rel (%p1146) target = $region40
      $region39: #{simple_cnn_forward.5} parent=31 // pred_region
        %v1149 = vld [vmem:[#allocation2] sm:$0xff]
        %v1150 = vld [vmem:[#allocation2 + $0x8] sm:$0xff]
        %v1151 = vld [vmem:[#allocation2 + $0x10] sm:$0xff]
        %v1152 = vld [vmem:[#allocation2 + $0x18] sm:$0xff]
        %v1153 = vld [vmem:[#allocation2 + $0x20] sm:$0xff]
        %v1154 = vld [vmem:[#allocation2 + $0x28] sm:$0xff]
        %v1155 = vld [vmem:[#allocation2 + $0x30] sm:$0xff]
        %v1156 = vld [vmem:[#allocation2 + $0x38] sm:$0xff]
        %v1157 = vld [vmem:[#allocation2 + $0x40] sm:$0xff]
        %v1158 = vld [vmem:[#allocation2 + $0x48] sm:$0xff]
        %v1159 = vld [vmem:[#allocation2 + $0x50] sm:$0xff]
        %v1160 = vld [vmem:[#allocation2 + $0x58] sm:$0xff]
        %v1161 = vld [vmem:[#allocation2 + $0x60] sm:$0xff]
        %v1162 = vld [vmem:[#allocation2 + $0x68] sm:$0xff]
        %v1163 = vld [vmem:[#allocation2 + $0x70] sm:$0xff]
        %v1164 = vld [vmem:[#allocation2 + $0x78] sm:$0xff]
        %v1165 = vld [vmem:[#allocation2 + $0x80] sm:$0xff]
        %v1166 = vld [vmem:[#allocation2 + $0x88] sm:$0xff]
        %v1167 = vld [vmem:[#allocation2 + $0x90] sm:$0xff]
        %v1168 = vld [vmem:[#allocation2 + $0x98] sm:$0xff]
        %v1169 = vld [vmem:[#allocation2 + $0xa0] sm:$0xff]
        %v1170 = vld [vmem:[#allocation2 + $0xa8] sm:$0xff]
        %v1171 = vld [vmem:[#allocation2 + $0xb0] sm:$0xff]
        %v1172 = vld [vmem:[#allocation2 + $0xb8] sm:$0xff]
        %v1173 = vld [vmem:[#allocation2 + $0xc0] sm:$0xff]
        %v1174 = vld [vmem:[#allocation2 + $0xc8] sm:$0xff]
        %v1175 = vld [vmem:[#allocation2 + $0xd0] sm:$0xff]
        %v1176 = vld [vmem:[#allocation2 + $0xd8] sm:$0xff]
        %v1177 = vld [vmem:[%s257] sm:$0x1]
        %v1179 = vlaneseq
        %v1180 = vshrl.u32 %v1179, 7
        %v1181 = vsub.s32 0, %v1180
        %v1182 = vrot.slane %v1177, %v1181
        %v1184 = vadd.f32 %v1149, %v1182
        %v1185 = vadd.f32 %v1150, %v1182
        %v1186 = vadd.f32 %v1151, %v1182
        %v1187 = vadd.f32 %v1152, %v1182
        %v1188 = vadd.f32 %v1153, %v1182
        %v1189 = vadd.f32 %v1154, %v1182
        %v1190 = vadd.f32 %v1155, %v1182
        %v1191 = vadd.f32 %v1156, %v1182
        %v1192 = vadd.f32 %v1157, %v1182
        %v1193 = vadd.f32 %v1158, %v1182
        %v1194 = vadd.f32 %v1159, %v1182
        %v1195 = vadd.f32 %v1160, %v1182
        %v1196 = vadd.f32 %v1161, %v1182
        %v1197 = vadd.f32 %v1162, %v1182
        %v1198 = vadd.f32 %v1163, %v1182
        %v1199 = vadd.f32 %v1164, %v1182
        %v1200 = vadd.f32 %v1165, %v1182
        %v1201 = vadd.f32 %v1166, %v1182
        %v1202 = vadd.f32 %v1167, %v1182
        %v1203 = vadd.f32 %v1168, %v1182
        %v1204 = vadd.f32 %v1169, %v1182
        %v1205 = vadd.f32 %v1170, %v1182
        %v1206 = vadd.f32 %v1171, %v1182
        %v1207 = vadd.f32 %v1172, %v1182
        %v1208 = vadd.f32 %v1173, %v1182
        %v1209 = vadd.f32 %v1174, %v1182
        %v1210 = vadd.f32 %v1175, %v1182
        %v1211 = vadd.f32 %v1176, %v1182
        %v1212 = vmax.f32 %v1184, 0.0
        %v1213 = vmax.f32 %v1185, 0.0
        %v1214 = vmax.f32 %v1186, 0.0
        %v1215 = vmax.f32 %v1187, 0.0
        %v1216 = vmax.f32 %v1188, 0.0
        %v1217 = vmax.f32 %v1189, 0.0
        %v1218 = vmax.f32 %v1190, 0.0
        %v1219 = vmax.f32 %v1191, 0.0
        %v1220 = vmax.f32 %v1192, 0.0
        %v1221 = vmax.f32 %v1193, 0.0
        %v1222 = vmax.f32 %v1194, 0.0
        %v1223 = vmax.f32 %v1195, 0.0
        %v1224 = vmax.f32 %v1196, 0.0
        %v1225 = vmax.f32 %v1197, 0.0
        %v1226 = vmax.f32 %v1198, 0.0
        %v1227 = vmax.f32 %v1199, 0.0
        %v1228 = vmax.f32 %v1200, 0.0
        %v1229 = vmax.f32 %v1201, 0.0
        %v1230 = vmax.f32 %v1202, 0.0
        %v1231 = vmax.f32 %v1203, 0.0
        %v1232 = vmax.f32 %v1204, 0.0
        %v1233 = vmax.f32 %v1205, 0.0
        %v1234 = vmax.f32 %v1206, 0.0
        %v1235 = vmax.f32 %v1207, 0.0
        %v1236 = vmax.f32 %v1208, 0.0
        %v1237 = vmax.f32 %v1209, 0.0
        %v1238 = vmax.f32 %v1210, 0.0
        %v1239 = vmax.f32 %v1211, 0.0
        %v1240 = vpack.c.bf16 %v1213, %v1212
        %v1241 = vpack.c.bf16 %v1215, %v1214
        %v1242 = vpack.c.bf16 %v1217, %v1216
        %v1243 = vpack.c.bf16 %v1219, %v1218
        %v1244 = vpack.c.bf16 %v1221, %v1220
        %v1245 = vpack.c.bf16 %v1223, %v1222
        %v1246 = vpack.c.bf16 %v1225, %v1224
        %v1247 = vpack.c.bf16 %v1227, %v1226
        %v1248 = vpack.c.bf16 %v1229, %v1228
        %v1249 = vpack.c.bf16 %v1231, %v1230
        %v1250 = vpack.c.bf16 %v1233, %v1232
        %v1251 = vpack.c.bf16 %v1235, %v1234
        %v1252 = vpack.c.bf16 %v1237, %v1236
        %v1253 = vpack.c.bf16 %v1239, %v1238
        %v1268 = vunpack.c.l.b16 %v1240
        %v1269 = vunpack.c.h.b16 %v1240
        %v1270 = vunpack.c.l.b16 %v1241
        %v1271 = vunpack.c.h.b16 %v1241
        %v1272 = vunpack.c.l.b16 %v1242
        %v1273 = vunpack.c.h.b16 %v1242
        %v1274 = vunpack.c.l.b16 %v1243
        %v1275 = vunpack.c.h.b16 %v1243
        %v1276 = vunpack.c.l.b16 %v1244
        %v1277 = vunpack.c.h.b16 %v1244
        %v1278 = vunpack.c.l.b16 %v1245
        %v1279 = vunpack.c.h.b16 %v1245
        %v1280 = vunpack.c.l.b16 %v1246
        %v1281 = vunpack.c.h.b16 %v1246
        %v1282 = vunpack.c.l.b16 %v1247
        %v1283 = vunpack.c.h.b16 %v1247
        %v1284 = vunpack.c.l.b16 %v1248
        %v1285 = vunpack.c.h.b16 %v1248
        %v1286 = vunpack.c.l.b16 %v1249
        %v1287 = vunpack.c.h.b16 %v1249
        %v1288 = vunpack.c.l.b16 %v1250
        %v1289 = vunpack.c.h.b16 %v1250
        %v1290 = vunpack.c.l.b16 %v1251
        %v1291 = vunpack.c.h.b16 %v1251
        %v1292 = vunpack.c.l.b16 %v1252
        %v1293 = vunpack.c.h.b16 %v1252
        %v1294 = vunpack.c.l.b16 %v1253
        %v1295 = vunpack.c.h.b16 %v1253
        %v1296 = vpack.c.b16 %v1268, %v1268
        %v1297 = vpack.c.b16 %v1269, %v1269
        %v1298 = vpack.c.b16 %v1270, %v1270
        %v1299 = vpack.c.b16 %v1271, %v1271
        %v1300 = vpack.c.b16 %v1272, %v1272
        %v1301 = vpack.c.b16 %v1273, %v1273
        %v1302 = vpack.c.b16 %v1274, %v1274
        %v1303 = vpack.c.b16 %v1275, %v1275
        %v1304 = vpack.c.b16 %v1276, %v1276
        %v1305 = vpack.c.b16 %v1277, %v1277
        %v1306 = vpack.c.b16 %v1278, %v1278
        %v1307 = vpack.c.b16 %v1279, %v1279
        %v1308 = vpack.c.b16 %v1280, %v1280
        %v1309 = vpack.c.b16 %v1281, %v1281
        %v1310 = vpack.c.b16 %v1282, %v1282
        %v1311 = vpack.c.b16 %v1283, %v1283
        %v1312 = vpack.c.b16 %v1284, %v1284
        %v1313 = vpack.c.b16 %v1285, %v1285
        %v1314 = vpack.c.b16 %v1286, %v1286
        %v1315 = vpack.c.b16 %v1287, %v1287
        %v1316 = vpack.c.b16 %v1288, %v1288
        %v1317 = vpack.c.b16 %v1289, %v1289
        %v1318 = vpack.c.b16 %v1290, %v1290
        %v1319 = vpack.c.b16 %v1291, %v1291
        %v1320 = vpack.c.b16 %v1292, %v1292
        %v1321 = vpack.c.b16 %v1293, %v1293
        %v1322 = vpack.c.b16 %v1294, %v1294
        %v1323 = vpack.c.b16 %v1295, %v1295
        %1352 = vst [vmem:[%s265] sm:$0xf] %v1296
        %1353 = vst [vmem:[%s265 + $0x4] sm:$0xf] %v1297
        %1354 = vst [vmem:[%s265 + $0x8] sm:$0xf] %v1298
        %1355 = vst [vmem:[%s265 + $0xc] sm:$0xf] %v1299
        %1356 = vst [vmem:[%s265 + $0x10] sm:$0xf] %v1300
        %1357 = vst [vmem:[%s265 + $0x14] sm:$0xf] %v1301
        %1358 = vst [vmem:[%s265 + $0x18] sm:$0xf] %v1302
        %1359 = vst [vmem:[%s265 + $0x1c] sm:$0xf] %v1303
        %1360 = vst [vmem:[%s265 + $0x20] sm:$0xf] %v1304
        %1361 = vst [vmem:[%s265 + $0x24] sm:$0xf] %v1305
        %1362 = vst [vmem:[%s265 + $0x28] sm:$0xf] %v1306
        %1363 = vst [vmem:[%s265 + $0x2c] sm:$0xf] %v1307
        %1364 = vst [vmem:[%s265 + $0x30] sm:$0xf] %v1308
        %1365 = vst [vmem:[%s265 + $0x34] sm:$0xf] %v1309
        %1366 = vst [vmem:[%s265 + $0x38] sm:$0xf] %v1310
        %1367 = vst [vmem:[%s265 + $0x3c] sm:$0xf] %v1311
        %1368 = vst [vmem:[%s265 + $0x40] sm:$0xf] %v1312
        %1369 = vst [vmem:[%s265 + $0x44] sm:$0xf] %v1313
        %1370 = vst [vmem:[%s265 + $0x48] sm:$0xf] %v1314
        %1371 = vst [vmem:[%s265 + $0x4c] sm:$0xf] %v1315
        %1372 = vst [vmem:[%s265 + $0x50] sm:$0xf] %v1316
        %1373 = vst [vmem:[%s265 + $0x54] sm:$0xf] %v1317
        %1374 = vst [vmem:[%s265 + $0x58] sm:$0xf] %v1318
        %1375 = vst [vmem:[%s265 + $0x5c] sm:$0xf] %v1319
        %1376 = vst [vmem:[%s265 + $0x60] sm:$0xf] %v1320
        %1377 = vst [vmem:[%s265 + $0x64] sm:$0xf] %v1321
        %1378 = vst [vmem:[%s265 + $0x68] sm:$0xf] %v1322
        %1379 = vst [vmem:[%s265 + $0x6c] sm:$0xf] %v1323
      $region40: #{simple_cnn_forward.5} parent=31 // pred_fallthru
        _
      %s1380 = smul.u32 28, %s19
      %p1381 = scmp.lt.s32.totalorder %s1380, 195
      %s1382 = scalar_select %p1381, %s1380, 195
      %p1383 = scmp.lt.s32.totalorder %s20, 0
      %s1384 = scalar_select %p1383, %s20, 0
      %s1385 = sadd.s32 %s1384, %s1382
      %s1386 = smul.addr %s1385, 4
      %s1387 = scalar_lea.vmem %s3, %s1386
      // Predicated region
      $region41: #{simple_cnn_forward.5} parent=31 // pred_check
        %p1388 = pneg %p135
      $region42: #{simple_cnn_forward.5} parent=31 // pred_check_branch
        %1390 = sbr.rel (%p1388) target = $region44
      $region43: #{simple_cnn_forward.5} parent=31 // pred_region
        %s1391 = smul.u32 28, %s19
      $region44: #{simple_cnn_forward.5} parent=31 // pred_fallthru
        _
    $region32: #{simple_cnn_forward.5} parent=5 // pred_fallthru
      _
    %p1392 = scmp.le.s32.totalorder 2, %s9
    // Predicated region
    $region45: #{simple_cnn_forward.5} parent=5 // pred_check
      %p1393 = pneg %p1392
    $region46: #{simple_cnn_forward.5} parent=5 // pred_check_branch
      %1395 = sbr.rel (%p1393) target = $region48
    $region47: #{simple_cnn_forward.5} parent=5 // pred_region
      %s1396 = ssub.s32 %s9, 2
      // Predicated region
      $region49: #{simple_cnn_forward.5} parent=47 // pred_check
        %p1397 = pneg %p141
      $region50: #{simple_cnn_forward.5} parent=47 // pred_check_branch
        %1399 = sbr.rel (%p1397) target = $region52
      $region51: #{simple_cnn_forward.5} parent=47 // pred_region
        %s1400 = smul.u32 28, %s22
        %p1401 = scmp.lt.s32.totalorder %s1400, 195
        %s1402 = scalar_select %p1401, %s1400, 195
        %p1403 = scmp.lt.s32.totalorder %s23, 0
        %s1404 = scalar_select %p1403, %s23, 0
        %s1405 = sadd.s32 %s1404, %s1402
        %s1406 = smul.addr %s1405, 4
        %s1407 = scalar_lea.vmem %s3, %s1406
      $region52: #{simple_cnn_forward.5} parent=47 // pred_fallthru
        _
    $region48: #{simple_cnn_forward.5} parent=5 // pred_fallthru
      _
  $region6: #{simple_cnn_forward.5} parent=0 // loop_footer
    %s13 = sadd.s32 1, %s9
  $region7: #{simple_cnn_forward.5} parent=0 // loop_footer_branch
    %8 = sbr.rel target = $region3
  $region8: #{simple_cnn_forward.5} parent=0 // loop_exit
    _

// kernel: simple_cnn_forward.6
$region0: #{simple_cnn_forward.6}
  #allocation0 [shape = 'u32[]', space=smem, size = 0x4, offset = 0x4, fixed_abs, tag = 'smem constant byte address 0x4 - core index']
  #allocation1 [shape = 'u32[144,128]{1,0:T(1,128)}', space=vmem, size = 0x12000, scoped, tag = 'internal scratch']
  %s0 = inlined_call_operand.vmem [shape: bf16[32,2,14,128], index: 0, kind: input, shape index: {}]
  %s1 = inlined_call_operand.vmem [shape: bf16[32,14,64], index: 1, kind: output, shape index: {}]
  %s2 = sld [smem:[#allocation0]]
  $region14: #{simple_cnn_forward.6} parent=0
    _
  %s4 = ssub.s32 1, %s2
  %s5 = scalar_select 0, %s4, %s2
  // Predicated region
  $region2: #{simple_cnn_forward.6} parent=0 // pred_check
    _
  $region3: #{simple_cnn_forward.6} parent=0 // pred_check_branch
    %7 = sbr.rel (0) target = $region5
  $region4: #{simple_cnn_forward.6} parent=0 // pred_region
    _
  $region5: #{simple_cnn_forward.6} parent=0 // pred_fallthru
    _
  %v8 = vld [vmem:[%s0] sm:$0xf]
  %v9 = vld [vmem:[%s0 + $0x4] sm:$0x7]
  %v10 = vld [vmem:[%s0 + $0x8] sm:$0xf]
  %v11 = vld [vmem:[%s0 + $0xc] sm:$0x7]
  %v12 = vld [vmem:[%s0 + $0x10] sm:$0xf]
  %v13 = vld [vmem:[%s0 + $0x14] sm:$0x7]
  %v14 = vld [vmem:[%s0 + $0x18] sm:$0xf]
  %v15 = vld [vmem:[%s0 + $0x1c] sm:$0x7]
  %v16 = vld [vmem:[%s0 + $0x20] sm:$0xf]
  %v17 = vld [vmem:[%s0 + $0x24] sm:$0x7]
  %v18 = vld [vmem:[%s0 + $0x28] sm:$0xf]
  %v19 = vld [vmem:[%s0 + $0x2c] sm:$0x7]
  %v20 = vld [vmem:[%s0 + $0x30] sm:$0xf]
  %v21 = vld [vmem:[%s0 + $0x34] sm:$0x7]
  %v22 = vld [vmem:[%s0 + $0x38] sm:$0xf]
  %v23 = vld [vmem:[%s0 + $0x3c] sm:$0x7]
  %v24 = vld [vmem:[%s0 + $0x40] sm:$0xf]
  %v25 = vld [vmem:[%s0 + $0x44] sm:$0x7]
  %v26 = vld [vmem:[%s0 + $0x48] sm:$0xf]
  %v27 = vld [vmem:[%s0 + $0x4c] sm:$0x7]
  %v28 = vld [vmem:[%s0 + $0x50] sm:$0xf]
  %v29 = vld [vmem:[%s0 + $0x54] sm:$0x7]
  %v30 = vld [vmem:[%s0 + $0x58] sm:$0xf]
  %v31 = vld [vmem:[%s0 + $0x5c] sm:$0x7]
  %v32 = vld [vmem:[%s0 + $0x60] sm:$0xf]
  %v33 = vld [vmem:[%s0 + $0x64] sm:$0x7]
  %v34 = vld [vmem:[%s0 + $0x68] sm:$0xf]
  %v35 = vld [vmem:[%s0 + $0x6c] sm:$0x7]
  %v36 = vld [vmem:[%s0 + $0x70] sm:$0xf]
  %v37 = vld [vmem:[%s0 + $0x74] sm:$0x7]
  %v38 = vld [vmem:[%s0 + $0x78] sm:$0xf]
  %v39 = vld [vmem:[%s0 + $0x7c] sm:$0x7]
  %v40 = vld [vmem:[%s0 + $0x80] sm:$0xf]
  %v41 = vld [vmem:[%s0 + $0x84] sm:$0x7]
  %v42 = vld [vmem:[%s0 + $0x88] sm:$0xf]
  %v43 = vld [vmem:[%s0 + $0x8c] sm:$0x7]
  %v44 = vld [vmem:[%s0 + $0x90] sm:$0xf]
  %v45 = vld [vmem:[%s0 + $0x94] sm:$0x7]
  %v46 = vld [vmem:[%s0 + $0x98] sm:$0xf]
  %v47 = vld [vmem:[%s0 + $0x9c] sm:$0x7]
  %v48 = vld [vmem:[%s0 + $0xa0] sm:$0xf]
  %v49 = vld [vmem:[%s0 + $0xa4] sm:$0x7]
  %v50 = vld [vmem:[%s0 + $0xa8] sm:$0xf]
  %v51 = vld [vmem:[%s0 + $0xac] sm:$0x7]
  %v52 = vld [vmem:[%s0 + $0xb0] sm:$0xf]
  %v53 = vld [vmem:[%s0 + $0xb4] sm:$0x7]
  %v54 = vld [vmem:[%s0 + $0xb8] sm:$0xf]
  %v55 = vld [vmem:[%s0 + $0xbc] sm:$0x7]
  %v56 = vld [vmem:[%s0 + $0xc0] sm:$0xf]
  %v57 = vld [vmem:[%s0 + $0xc4] sm:$0x7]
  %v58 = vld [vmem:[%s0 + $0xc8] sm:$0xf]
  %v59 = vld [vmem:[%s0 + $0xcc] sm:$0x7]
  %v60 = vld [vmem:[%s0 + $0xd0] sm:$0xf]
  %v61 = vld [vmem:[%s0 + $0xd4] sm:$0x7]
  %v62 = vld [vmem:[%s0 + $0xd8] sm:$0xf]
  %v63 = vld [vmem:[%s0 + $0xdc] sm:$0x7]
  %v64 = vld [vmem:[%s0 + $0xe0] sm:$0xf]
  %v65 = vld [vmem:[%s0 + $0xe4] sm:$0x7]
  %v66 = vld [vmem:[%s0 + $0xe8] sm:$0xf]
  %v67 = vld [vmem:[%s0 + $0xec] sm:$0x7]
  %v68 = vld [vmem:[%s0 + $0xf0] sm:$0xf]
  %v69 = vld [vmem:[%s0 + $0xf4] sm:$0x7]
  %v70 = vld [vmem:[%s0 + $0xf8] sm:$0xf]
  %v71 = vld [vmem:[%s0 + $0xfc] sm:$0x7]
  %v72 = vld [vmem:[%s0 + $0x100] sm:$0xf]
  %v73 = vld [vmem:[%s0 + $0x104] sm:$0x7]
  %v74 = vld [vmem:[%s0 + $0x108] sm:$0xf]
  %v75 = vld [vmem:[%s0 + $0x10c] sm:$0x7]
  %v76 = vld [vmem:[%s0 + $0x110] sm:$0xf]
  %v77 = vld [vmem:[%s0 + $0x114] sm:$0x7]
  %v78 = vld [vmem:[%s0 + $0x118] sm:$0xf]
  %v79 = vld [vmem:[%s0 + $0x11c] sm:$0x7]
  %v80 = vld [vmem:[%s0 + $0x120] sm:$0xf]
  %v81 = vld [vmem:[%s0 + $0x124] sm:$0x7]
  %v82 = vld [vmem:[%s0 + $0x128] sm:$0xf]
  %v83 = vld [vmem:[%s0 + $0x12c] sm:$0x7]
  %v84 = vld [vmem:[%s0 + $0x130] sm:$0xf]
  %v85 = vld [vmem:[%s0 + $0x134] sm:$0x7]
  %v86 = vld [vmem:[%s0 + $0x138] sm:$0xf]
  %v87 = vld [vmem:[%s0 + $0x13c] sm:$0x7]
  %v88 = vld [vmem:[%s0 + $0x140] sm:$0xf]
  %v89 = vld [vmem:[%s0 + $0x144] sm:$0x7]
  %v90 = vld [vmem:[%s0 + $0x148] sm:$0xf]
  %v91 = vld [vmem:[%s0 + $0x14c] sm:$0x7]
  %v92 = vld [vmem:[%s0 + $0x150] sm:$0xf]
  %v93 = vld [vmem:[%s0 + $0x154] sm:$0x7]
  %v94 = vld [vmem:[%s0 + $0x158] sm:$0xf]
  %v95 = vld [vmem:[%s0 + $0x15c] sm:$0x7]
  %v96 = vld [vmem:[%s0 + $0x160] sm:$0xf]
  %v97 = vld [vmem:[%s0 + $0x164] sm:$0x7]
  %v98 = vld [vmem:[%s0 + $0x168] sm:$0xf]
  %v99 = vld [vmem:[%s0 + $0x16c] sm:$0x7]
  %v100 = vld [vmem:[%s0 + $0x170] sm:$0xf]
  %v101 = vld [vmem:[%s0 + $0x174] sm:$0x7]
  %v102 = vld [vmem:[%s0 + $0x178] sm:$0xf]
  %v103 = vld [vmem:[%s0 + $0x17c] sm:$0x7]
  %v104 = vld [vmem:[%s0 + $0x180] sm:$0xf]
  %v105 = vld [vmem:[%s0 + $0x184] sm:$0x7]
  %v106 = vld [vmem:[%s0 + $0x188] sm:$0xf]
  %v107 = vld [vmem:[%s0 + $0x18c] sm:$0x7]
  %v108 = vld [vmem:[%s0 + $0x190] sm:$0xf]
  %v109 = vld [vmem:[%s0 + $0x194] sm:$0x7]
  %v110 = vld [vmem:[%s0 + $0x198] sm:$0xf]
  %v111 = vld [vmem:[%s0 + $0x19c] sm:$0x7]
  %v112 = vld [vmem:[%s0 + $0x1a0] sm:$0xf]
  %v113 = vld [vmem:[%s0 + $0x1a4] sm:$0x7]
  %v114 = vld [vmem:[%s0 + $0x1a8] sm:$0xf]
  %v115 = vld [vmem:[%s0 + $0x1ac] sm:$0x7]
  %v116 = vld [vmem:[%s0 + $0x1b0] sm:$0xf]
  %v117 = vld [vmem:[%s0 + $0x1b4] sm:$0x7]
  %v118 = vld [vmem:[%s0 + $0x1b8] sm:$0xf]
  %v119 = vld [vmem:[%s0 + $0x1bc] sm:$0x7]
  %v120 = vld [vmem:[%s0 + $0x1c0] sm:$0xf]
  %v121 = vld [vmem:[%s0 + $0x1c4] sm:$0x7]
  %v122 = vld [vmem:[%s0 + $0x1c8] sm:$0xf]
  %v123 = vld [vmem:[%s0 + $0x1cc] sm:$0x7]
  %v124 = vld [vmem:[%s0 + $0x1d0] sm:$0xf]
  %v125 = vld [vmem:[%s0 + $0x1d4] sm:$0x7]
  %v126 = vld [vmem:[%s0 + $0x1d8] sm:$0xf]
  %v127 = vld [vmem:[%s0 + $0x1dc] sm:$0x7]
  %v128 = vld [vmem:[%s0 + $0x1e0] sm:$0xf]
  %v129 = vld [vmem:[%s0 + $0x1e4] sm:$0x7]
  %v130 = vld [vmem:[%s0 + $0x1e8] sm:$0xf]
  %v131 = vld [vmem:[%s0 + $0x1ec] sm:$0x7]
  %v132 = vld [vmem:[%s0 + $0x1f0] sm:$0xf]
  %v133 = vld [vmem:[%s0 + $0x1f4] sm:$0x7]
  %v134 = vld [vmem:[%s0 + $0x1f8] sm:$0xf]
  %v135 = vld [vmem:[%s0 + $0x1fc] sm:$0x7]
  %v136 = vmax.bf16 %v8, %v10
  %v137 = vmax.bf16 %v9, %v11
  %v138 = vmax.bf16 %v12, %v14
  %v139 = vmax.bf16 %v13, %v15
  %v140 = vmax.bf16 %v16, %v18
  %v141 = vmax.bf16 %v17, %v19
  %v142 = vmax.bf16 %v20, %v22
  %v143 = vmax.bf16 %v21, %v23
  %v144 = vmax.bf16 %v24, %v26
  %v145 = vmax.bf16 %v25, %v27
  %v146 = vmax.bf16 %v28, %v30
  %v147 = vmax.bf16 %v29, %v31
  %v148 = vmax.bf16 %v32, %v34
  %v149 = vmax.bf16 %v33, %v35
  %v150 = vmax.bf16 %v36, %v38
  %v151 = vmax.bf16 %v37, %v39
  %v152 = vmax.bf16 %v40, %v42
  %v153 = vmax.bf16 %v41, %v43
  %v154 = vmax.bf16 %v44, %v46
  %v155 = vmax.bf16 %v45, %v47
  %v156 = vmax.bf16 %v48, %v50
  %v157 = vmax.bf16 %v49, %v51
  %v158 = vmax.bf16 %v52, %v54
  %v159 = vmax.bf16 %v53, %v55
  %v160 = vmax.bf16 %v56, %v58
  %v161 = vmax.bf16 %v57, %v59
  %v162 = vmax.bf16 %v60, %v62
  %v163 = vmax.bf16 %v61, %v63
  %v164 = vmax.bf16 %v64, %v66
  %v165 = vmax.bf16 %v65, %v67
  %v166 = vmax.bf16 %v68, %v70
  %v167 = vmax.bf16 %v69, %v71
  %v168 = vmax.bf16 %v72, %v74
  %v169 = vmax.bf16 %v73, %v75
  %v170 = vmax.bf16 %v76, %v78
  %v171 = vmax.bf16 %v77, %v79
  %v172 = vmax.bf16 %v80, %v82
  %v173 = vmax.bf16 %v81, %v83
  %v174 = vmax.bf16 %v84, %v86
  %v175 = vmax.bf16 %v85, %v87
  %v176 = vmax.bf16 %v88, %v90
  %v177 = vmax.bf16 %v89, %v91
  %v178 = vmax.bf16 %v92, %v94
  %v179 = vmax.bf16 %v93, %v95
  %v180 = vmax.bf16 %v96, %v98
  %v181 = vmax.bf16 %v97, %v99
  %v182 = vmax.bf16 %v100, %v102
  %v183 = vmax.bf16 %v101, %v103
  %v184 = vmax.bf16 %v104, %v106
  %v185 = vmax.bf16 %v105, %v107
  %v186 = vmax.bf16 %v108, %v110
  %v187 = vmax.bf16 %v109, %v111
  %v188 = vmax.bf16 %v112, %v114
  %v189 = vmax.bf16 %v113, %v115
  %v190 = vmax.bf16 %v116, %v118
  %v191 = vmax.bf16 %v117, %v119
  %v192 = vmax.bf16 %v120, %v122
  %v193 = vmax.bf16 %v121, %v123
  %v194 = vmax.bf16 %v124, %v126
  %v195 = vmax.bf16 %v125, %v127
  %v196 = vmax.bf16 %v128, %v130
  %v197 = vmax.bf16 %v129, %v131
  %v198 = vmax.bf16 %v132, %v134
  %v199 = vmax.bf16 %v133, %v135
  %264 = vrot.lane.b32.xlu0 %v136, 64
  %v265 = vpop.permute.xlu0 %264
  %266 = vrot.lane.b32.xlu0 %v137, 64
  %v267 = vpop.permute.xlu0 %266
  %268 = vrot.lane.b32.xlu0 %v138, 64
  %v269 = vpop.permute.xlu0 %268
  %270 = vrot.lane.b32.xlu0 %v139, 64
  %v271 = vpop.permute.xlu0 %270
  %272 = vrot.lane.b32.xlu0 %v140, 64
  %v273 = vpop.permute.xlu0 %272
  %274 = vrot.lane.b32.xlu0 %v141, 64
  %v275 = vpop.permute.xlu0 %274
  %276 = vrot.lane.b32.xlu0 %v142, 64
  %v277 = vpop.permute.xlu0 %276
  %278 = vrot.lane.b32.xlu0 %v143, 64
  %v279 = vpop.permute.xlu0 %278
  %280 = vrot.lane.b32.xlu0 %v144, 64
  %v281 = vpop.permute.xlu0 %280
  %282 = vrot.lane.b32.xlu0 %v145, 64
  %v283 = vpop.permute.xlu0 %282
  %284 = vrot.lane.b32.xlu0 %v146, 64
  %v285 = vpop.permute.xlu0 %284
  %286 = vrot.lane.b32.xlu0 %v147, 64
  %v287 = vpop.permute.xlu0 %286
  %288 = vrot.lane.b32.xlu0 %v148, 64
  %v289 = vpop.permute.xlu0 %288
  %290 = vrot.lane.b32.xlu0 %v149, 64
  %v291 = vpop.permute.xlu0 %290
  %292 = vrot.lane.b32.xlu0 %v150, 64
  %v293 = vpop.permute.xlu0 %292
  %294 = vrot.lane.b32.xlu0 %v151, 64
  %v295 = vpop.permute.xlu0 %294
  %296 = vrot.lane.b32.xlu0 %v152, 64
  %v297 = vpop.permute.xlu0 %296
  %298 = vrot.lane.b32.xlu0 %v153, 64
  %v299 = vpop.permute.xlu0 %298
  %300 = vrot.lane.b32.xlu0 %v154, 64
  %v301 = vpop.permute.xlu0 %300
  %302 = vrot.lane.b32.xlu0 %v155, 64
  %v303 = vpop.permute.xlu0 %302
  %304 = vrot.lane.b32.xlu0 %v156, 64
  %v305 = vpop.permute.xlu0 %304
  %306 = vrot.lane.b32.xlu0 %v157, 64
  %v307 = vpop.permute.xlu0 %306
  %308 = vrot.lane.b32.xlu0 %v158, 64
  %v309 = vpop.permute.xlu0 %308
  %310 = vrot.lane.b32.xlu0 %v159, 64
  %v311 = vpop.permute.xlu0 %310
  %312 = vrot.lane.b32.xlu0 %v160, 64
  %v313 = vpop.permute.xlu0 %312
  %314 = vrot.lane.b32.xlu0 %v161, 64
  %v315 = vpop.permute.xlu0 %314
  %316 = vrot.lane.b32.xlu0 %v162, 64
  %v317 = vpop.permute.xlu0 %316
  %318 = vrot.lane.b32.xlu0 %v163, 64
  %v319 = vpop.permute.xlu0 %318
  %320 = vrot.lane.b32.xlu0 %v164, 64
  %v321 = vpop.permute.xlu0 %320
  %322 = vrot.lane.b32.xlu0 %v165, 64
  %v323 = vpop.permute.xlu0 %322
  %324 = vrot.lane.b32.xlu0 %v166, 64
  %v325 = vpop.permute.xlu0 %324
  %326 = vrot.lane.b32.xlu0 %v167, 64
  %v327 = vpop.permute.xlu0 %326
  %328 = vrot.lane.b32.xlu0 %v168, 64
  %v329 = vpop.permute.xlu0 %328
  %330 = vrot.lane.b32.xlu0 %v169, 64
  %v331 = vpop.permute.xlu0 %330
  %332 = vrot.lane.b32.xlu0 %v170, 64
  %v333 = vpop.permute.xlu0 %332
  %334 = vrot.lane.b32.xlu0 %v171, 64
  %v335 = vpop.permute.xlu0 %334
  %336 = vrot.lane.b32.xlu0 %v172, 64
  %v337 = vpop.permute.xlu0 %336
  %338 = vrot.lane.b32.xlu0 %v173, 64
  %v339 = vpop.permute.xlu0 %338
  %340 = vrot.lane.b32.xlu0 %v174, 64
  %v341 = vpop.permute.xlu0 %340
  %342 = vrot.lane.b32.xlu0 %v175, 64
  %v343 = vpop.permute.xlu0 %342
  %344 = vrot.lane.b32.xlu0 %v176, 64
  %v345 = vpop.permute.xlu0 %344
  %346 = vrot.lane.b32.xlu0 %v177, 64
  %v347 = vpop.permute.xlu0 %346
  %348 = vrot.lane.b32.xlu0 %v178, 64
  %v349 = vpop.permute.xlu0 %348
  %350 = vrot.lane.b32.xlu0 %v179, 64
  %v351 = vpop.permute.xlu0 %350
  %352 = vrot.lane.b32.xlu0 %v180, 64
  %v353 = vpop.permute.xlu0 %352
  %354 = vrot.lane.b32.xlu0 %v181, 64
  %v355 = vpop.permute.xlu0 %354
  %356 = vrot.lane.b32.xlu0 %v182, 64
  %v357 = vpop.permute.xlu0 %356
  %358 = vrot.lane.b32.xlu0 %v183, 64
  %v359 = vpop.permute.xlu0 %358
  %360 = vrot.lane.b32.xlu0 %v184, 64
  %v361 = vpop.permute.xlu0 %360
  %362 = vrot.lane.b32.xlu0 %v185, 64
  %v363 = vpop.permute.xlu0 %362
  %364 = vrot.lane.b32.xlu0 %v186, 64
  %v365 = vpop.permute.xlu0 %364
  %366 = vrot.lane.b32.xlu0 %v187, 64
  %v367 = vpop.permute.xlu0 %366
  %368 = vrot.lane.b32.xlu0 %v188, 64
  %v369 = vpop.permute.xlu0 %368
  %370 = vrot.lane.b32.xlu0 %v189, 64
  %v371 = vpop.permute.xlu0 %370
  %372 = vrot.lane.b32.xlu0 %v190, 64
  %v373 = vpop.permute.xlu0 %372
  %374 = vrot.lane.b32.xlu0 %v191, 64
  %v375 = vpop.permute.xlu0 %374
  %376 = vrot.lane.b32.xlu0 %v192, 64
  %v377 = vpop.permute.xlu0 %376
  %378 = vrot.lane.b32.xlu0 %v193, 64
  %v379 = vpop.permute.xlu0 %378
  %380 = vrot.lane.b32.xlu0 %v194, 64
  %v381 = vpop.permute.xlu0 %380
  %382 = vrot.lane.b32.xlu0 %v195, 64
  %v383 = vpop.permute.xlu0 %382
  %384 = vrot.lane.b32.xlu0 %v196, 64
  %v385 = vpop.permute.xlu0 %384
  %386 = vrot.lane.b32.xlu0 %v197, 64
  %v387 = vpop.permute.xlu0 %386
  %388 = vrot.lane.b32.xlu0 %v198, 64
  %v389 = vpop.permute.xlu0 %388
  %390 = vrot.lane.b32.xlu0 %v199, 64
  %v391 = vpop.permute.xlu0 %390
  %v456 = vmax.bf16 %v136, %v265
  %v457 = vmax.bf16 %v137, %v267
  %v458 = vmax.bf16 %v138, %v269
  %v459 = vmax.bf16 %v139, %v271
  %v460 = vmax.bf16 %v140, %v273
  %v461 = vmax.bf16 %v141, %v275
  %v462 = vmax.bf16 %v142, %v277
  %v463 = vmax.bf16 %v143, %v279
  %v464 = vmax.bf16 %v144, %v281
  %v465 = vmax.bf16 %v145, %v283
  %v466 = vmax.bf16 %v146, %v285
  %v467 = vmax.bf16 %v147, %v287
  %v468 = vmax.bf16 %v148, %v289
  %v469 = vmax.bf16 %v149, %v291
  %v470 = vmax.bf16 %v150, %v293
  %v471 = vmax.bf16 %v151, %v295
  %v472 = vmax.bf16 %v152, %v297
  %v473 = vmax.bf16 %v153, %v299
  %v474 = vmax.bf16 %v154, %v301
  %v475 = vmax.bf16 %v155, %v303
  %v476 = vmax.bf16 %v156, %v305
  %v477 = vmax.bf16 %v157, %v307
  %v478 = vmax.bf16 %v158, %v309
  %v479 = vmax.bf16 %v159, %v311
  %v480 = vmax.bf16 %v160, %v313
  %v481 = vmax.bf16 %v161, %v315
  %v482 = vmax.bf16 %v162, %v317
  %v483 = vmax.bf16 %v163, %v319
  %v484 = vmax.bf16 %v164, %v321
  %v485 = vmax.bf16 %v165, %v323
  %v486 = vmax.bf16 %v166, %v325
  %v487 = vmax.bf16 %v167, %v327
  %v488 = vmax.bf16 %v168, %v329
  %v489 = vmax.bf16 %v169, %v331
  %v490 = vmax.bf16 %v170, %v333
  %v491 = vmax.bf16 %v171, %v335
  %v492 = vmax.bf16 %v172, %v337
  %v493 = vmax.bf16 %v173, %v339
  %v494 = vmax.bf16 %v174, %v341
  %v495 = vmax.bf16 %v175, %v343
  %v496 = vmax.bf16 %v176, %v345
  %v497 = vmax.bf16 %v177, %v347
  %v498 = vmax.bf16 %v178, %v349
  %v499 = vmax.bf16 %v179, %v351
  %v500 = vmax.bf16 %v180, %v353
  %v501 = vmax.bf16 %v181, %v355
  %v502 = vmax.bf16 %v182, %v357
  %v503 = vmax.bf16 %v183, %v359
  %v504 = vmax.bf16 %v184, %v361
  %v505 = vmax.bf16 %v185, %v363
  %v506 = vmax.bf16 %v186, %v365
  %v507 = vmax.bf16 %v187, %v367
  %v508 = vmax.bf16 %v188, %v369
  %v509 = vmax.bf16 %v189, %v371
  %v510 = vmax.bf16 %v190, %v373
  %v511 = vmax.bf16 %v191, %v375
  %v512 = vmax.bf16 %v192, %v377
  %v513 = vmax.bf16 %v193, %v379
  %v514 = vmax.bf16 %v194, %v381
  %v515 = vmax.bf16 %v195, %v383
  %v516 = vmax.bf16 %v196, %v385
  %v517 = vmax.bf16 %v197, %v387
  %v518 = vmax.bf16 %v198, %v389
  %v519 = vmax.bf16 %v199, %v391
  %vm520 = vcmask 519168
  %521 = vst.msk [vmem:[%s1] sm:$0xf] %vm520, %v456
  %vm522 = vcmask 518144
  %523 = vst.msk [vmem:[%s1 + $0x4] sm:$0x7] %vm522, %v457
  %524 = vst.msk [vmem:[%s1 + $0x8] sm:$0xf] %vm520, %v458
  %525 = vst.msk [vmem:[%s1 + $0xc] sm:$0x7] %vm522, %v459
  %526 = vst.msk [vmem:[%s1 + $0x10] sm:$0xf] %vm520, %v460
  %527 = vst.msk [vmem:[%s1 + $0x14] sm:$0x7] %vm522, %v461
  %528 = vst.msk [vmem:[%s1 + $0x18] sm:$0xf] %vm520, %v462
  %529 = vst.msk [vmem:[%s1 + $0x1c] sm:$0x7] %vm522, %v463
  %530 = vst.msk [vmem:[%s1 + $0x20] sm:$0xf] %vm520, %v464
  %531 = vst.msk [vmem:[%s1 + $0x24] sm:$0x7] %vm522, %v465
  %532 = vst.msk [vmem:[%s1 + $0x28] sm:$0xf] %vm520, %v466
  %533 = vst.msk [vmem:[%s1 + $0x2c] sm:$0x7] %vm522, %v467
  %534 = vst.msk [vmem:[%s1 + $0x30] sm:$0xf] %vm520, %v468
  %535 = vst.msk [vmem:[%s1 + $0x34] sm:$0x7] %vm522, %v469
  %536 = vst.msk [vmem:[%s1 + $0x38] sm:$0xf] %vm520, %v470
  %537 = vst.msk [vmem:[%s1 + $0x3c] sm:$0x7] %vm522, %v471
  %538 = vst.msk [vmem:[%s1 + $0x40] sm:$0xf] %vm520, %v472
  %539 = vst.msk [vmem:[%s1 + $0x44] sm:$0x7] %vm522, %v473
  %540 = vst.msk [vmem:[%s1 + $0x48] sm:$0xf] %vm520, %v474
  %541 = vst.msk [vmem:[%s1 + $0x4c] sm:$0x7] %vm522, %v475
  %542 = vst.msk [vmem:[%s1 + $0x50] sm:$0xf] %vm520, %v476
  %543 = vst.msk [vmem:[%s1 + $0x54] sm:$0x7] %vm522, %v477
  %544 = vst.msk [vmem:[%s1 + $0x58] sm:$0xf] %vm520, %v478
  %545 = vst.msk [vmem:[%s1 + $0x5c] sm:$0x7] %vm522, %v479
  %546 = vst.msk [vmem:[%s1 + $0x60] sm:$0xf] %vm520, %v480
  %547 = vst.msk [vmem:[%s1 + $0x64] sm:$0x7] %vm522, %v481
  %548 = vst.msk [vmem:[%s1 + $0x68] sm:$0xf] %vm520, %v482
  %549 = vst.msk [vmem:[%s1 + $0x6c] sm:$0x7] %vm522, %v483
  %550 = vst.msk [vmem:[%s1 + $0x70] sm:$0xf] %vm520, %v484
  %551 = vst.msk [vmem:[%s1 + $0x74] sm:$0x7] %vm522, %v485
  %552 = vst.msk [vmem:[%s1 + $0x78] sm:$0xf] %vm520, %v486
  %553 = vst.msk [vmem:[%s1 + $0x7c] sm:$0x7] %vm522, %v487
  %554 = vst.msk [vmem:[%s1 + $0x80] sm:$0xf] %vm520, %v488
  %555 = vst.msk [vmem:[%s1 + $0x84] sm:$0x7] %vm522, %v489
  %556 = vst.msk [vmem:[%s1 + $0x88] sm:$0xf] %vm520, %v490
  %557 = vst.msk [vmem:[%s1 + $0x8c] sm:$0x7] %vm522, %v491
  %558 = vst.msk [vmem:[%s1 + $0x90] sm:$0xf] %vm520, %v492
  %559 = vst.msk [vmem:[%s1 + $0x94] sm:$0x7] %vm522, %v493
  %560 = vst.msk [vmem:[%s1 + $0x98] sm:$0xf] %vm520, %v494
  %561 = vst.msk [vmem:[%s1 + $0x9c] sm:$0x7] %vm522, %v495
  %562 = vst.msk [vmem:[%s1 + $0xa0] sm:$0xf] %vm520, %v496
  %563 = vst.msk [vmem:[%s1 + $0xa4] sm:$0x7] %vm522, %v497
  %564 = vst.msk [vmem:[%s1 + $0xa8] sm:$0xf] %vm520, %v498
  %565 = vst.msk [vmem:[%s1 + $0xac] sm:$0x7] %vm522, %v499
  %566 = vst.msk [vmem:[%s1 + $0xb0] sm:$0xf] %vm520, %v500
  %567 = vst.msk [vmem:[%s1 + $0xb4] sm:$0x7] %vm522, %v501
  %568 = vst.msk [vmem:[%s1 + $0xb8] sm:$0xf] %vm520, %v502
  %569 = vst.msk [vmem:[%s1 + $0xbc] sm:$0x7] %vm522, %v503
  %570 = vst.msk [vmem:[%s1 + $0xc0] sm:$0xf] %vm520, %v504
  %571 = vst.msk [vmem:[%s1 + $0xc4] sm:$0x7] %vm522, %v505
  %572 = vst.msk [vmem:[%s1 + $0xc8] sm:$0xf] %vm520, %v506
  %573 = vst.msk [vmem:[%s1 + $0xcc] sm:$0x7] %vm522, %v507
  %574 = vst.msk [vmem:[%s1 + $0xd0] sm:$0xf] %vm520, %v508
  %575 = vst.msk [vmem:[%s1 + $0xd4] sm:$0x7] %vm522, %v509
  %576 = vst.msk [vmem:[%s1 + $0xd8] sm:$0xf] %vm520, %v510
  %577 = vst.msk [vmem:[%s1 + $0xdc] sm:$0x7] %vm522, %v511
  %578 = vst.msk [vmem:[%s1 + $0xe0] sm:$0xf] %vm520, %v512
  %579 = vst.msk [vmem:[%s1 + $0xe4] sm:$0x7] %vm522, %v513
  %580 = vst.msk [vmem:[%s1 + $0xe8] sm:$0xf] %vm520, %v514
  %581 = vst.msk [vmem:[%s1 + $0xec] sm:$0x7] %vm522, %v515
  %582 = vst.msk [vmem:[%s1 + $0xf0] sm:$0xf] %vm520, %v516
  %583 = vst.msk [vmem:[%s1 + $0xf4] sm:$0x7] %vm522, %v517
  %584 = vst.msk [vmem:[%s1 + $0xf8] sm:$0xf] %vm520, %v518
  %585 = vst.msk [vmem:[%s1 + $0xfc] sm:$0x7] %vm522, %v519
  // Predicated region
  $region6: #{simple_cnn_forward.6} parent=0 // pred_check
    _
  $region7: #{simple_cnn_forward.6} parent=0 // pred_check_branch
    %587 = sbr.rel (0) target = $region9
  $region8: #{simple_cnn_forward.6} parent=0 // pred_region
    _
  $region9: #{simple_cnn_forward.6} parent=0 // pred_fallthru
    _
  // Predicated region
  $region10: #{simple_cnn_forward.6} parent=0 // pred_check
    _
  $region11: #{simple_cnn_forward.6} parent=0 // pred_check_branch
    %589 = sbr.rel (0) target = $region13
  $region12: #{simple_cnn_forward.6} parent=0 // pred_region
    _
  $region13: #{simple_cnn_forward.6} parent=0 // pred_fallthru
    _

// kernel: simple_cnn_forward.7
$region0: #{simple_cnn_forward.7}
  #allocation0 [shape = 'u32[]', space=smem, size = 0x4, offset = 0x4, fixed_abs, tag = 'smem constant byte address 0x4 - core index']
  #allocation1 [shape = 'u32[144,128]{1,0:T(1,128)}', space=vmem, size = 0x12000, scoped, tag = 'internal scratch']
  #allocation2 [shape = 'f32[8,128]{1,0:T(8,128)}', space=vmem, size = 0x1000, scoped, tag = 'scratch operand']
  %s0 = inlined_call_operand.vmem [shape: bf16[8,12544], index: 0, kind: input, shape index: {}]
  %s1 = inlined_call_operand.vmem [shape: bf16[12544,128], index: 1, kind: input, shape index: {}]
  %s2 = inlined_call_operand.vmem [shape: f32[1,128], index: 2, kind: input, shape index: {}]
  %s3 = inlined_call_operand.vmem [shape: bf16[128,128], index: 3, kind: input, shape index: {}]
  %s4 = inlined_call_operand.vmem [shape: f32[1,128], index: 4, kind: input, shape index: {}]
  %s5 = inlined_call_operand.vmem [shape: f32[8,128], index: 5, kind: output, shape index: {}]
  %s6 = sld [smem:[#allocation0]]
  $region61: #{simple_cnn_forward.7} parent=0
    _
  %s8 = ssub.s32 1, %s6
  %s9 = scalar_select 0, %s8, %s6
  loop: start=0, step=1, limit=51
  $region2: #{simple_cnn_forward.7} parent=0 // loop_pre_header
    _
  $region3: #{simple_cnn_forward.7} parent=0 // loop_header
    %s11 = sphi 0, %s15
    %p12 = scmp.ge.s32.totalorder %s11, 51
    %s21 = sphi 0, %s23
    %s24 = sphi 0, %s21
    %s25 = sphi 0, %s24
    %s41 = sphi 0, %s25
    %s47 = sphi 0, %s49
    %s50 = sphi 0, %s47
    %s51 = sphi 0, %s50
    %s67 = sphi 0, %s51
    %s71 = sphi 0, %s71
    %s73 = sphi 0, %s71
    %s74 = sphi 0, %s73
    %s88 = sphi 0, %s74
    %s92 = sphi 0, %s92
    %s94 = sphi 0, %s92
    %s95 = sphi 0, %s94
    %s109 = sphi 0, %s95
    %s113 = sphi 0, %s113
    %s115 = sphi 0, %s113
    %s116 = sphi 0, %s115
    %s130 = sphi 0, %s116
    %s134 = sphi 0, %s134
    %s136 = sphi 0, %s134
    %s137 = sphi 0, %s136
    %s151 = sphi 0, %s137
  $region4: #{simple_cnn_forward.7} parent=0 // loop_header_branch
    %14 = sbr.rel (%p12) target = $region8
  $region5: #{simple_cnn_forward.7} parent=0 // loop_body
    %s16 = ssub.s32 %s11, 1
    %s17 = ssub.s32 %s11, 2
    %s18 = sadd.s32 %s11, 1
    %s19 = ssub.s32 %s11, %s18
    %p20 = scmp.eq.s32.totalorder %s19, 0
    %s22 = sadd.s32 %s21, 1
    %s23 = scalar_select %p20, %s21, %s22
    %p26 = pneg %p20
    %p27 = scmp.eq.s32.totalorder %s11, 48
    %p28 = por %p26, %p27
    %p29 = scmp.ne.s32.totalorder %s21, %s24
    %p30 = scmp.eq.s32.totalorder %s11, 0
    %p31 = por %p29, %p30
    %p32 = scmp.ne.s32.totalorder %s21, %s24
    %p33 = scmp.eq.s32.totalorder %s16, 48
    %p34 = por %p32, %p33
    %p35 = scmp.ne.s32.totalorder %s24, %s25
    %p36 = scmp.eq.s32.totalorder %s16, 0
    %p37 = por %p35, %p36
    %p38 = scmp.ne.s32.totalorder %s24, %s25
    %p39 = scmp.eq.s32.totalorder %s17, 48
    %p40 = por %p38, %p39
    %p42 = scmp.ne.s32.totalorder %s25, %s41
    %p43 = scmp.eq.s32.totalorder %s17, 0
    %p44 = por %p42, %p43
    %s45 = ssub.s32 %s11, %s18
    %p46 = scmp.eq.s32.totalorder %s45, 0
    %s48 = sadd.s32 %s47, 1
    %s49 = scalar_select %p46, %s47, %s48
    %p52 = pneg %p46
    %p53 = scmp.eq.s32.totalorder %s11, 48
    %p54 = por %p52, %p53
    %p55 = scmp.ne.s32.totalorder %s47, %s50
    %p56 = scmp.eq.s32.totalorder %s11, 0
    %p57 = por %p55, %p56
    %p58 = scmp.ne.s32.totalorder %s47, %s50
    %p59 = scmp.eq.s32.totalorder %s16, 48
    %p60 = por %p58, %p59
    %p61 = scmp.ne.s32.totalorder %s50, %s51
    %p62 = scmp.eq.s32.totalorder %s16, 0
    %p63 = por %p61, %p62
    %p64 = scmp.ne.s32.totalorder %s50, %s51
    %p65 = scmp.eq.s32.totalorder %s17, 48
    %p66 = por %p64, %p65
    %p68 = scmp.ne.s32.totalorder %s51, %s67
    %p69 = scmp.eq.s32.totalorder %s17, 0
    %p70 = por %p68, %p69
    %s72 = sadd.s32 %s71, 1
    %p75 = scmp.eq.s32.totalorder %s11, 48
    %p76 = scmp.ne.s32.totalorder %s71, %s73
    %p77 = scmp.eq.s32.totalorder %s11, 0
    %p78 = por %p76, %p77
    %p79 = scmp.ne.s32.totalorder %s71, %s73
    %p80 = scmp.eq.s32.totalorder %s16, 48
    %p81 = por %p79, %p80
    %p82 = scmp.ne.s32.totalorder %s73, %s74
    %p83 = scmp.eq.s32.totalorder %s16, 0
    %p84 = por %p82, %p83
    %p85 = scmp.ne.s32.totalorder %s73, %s74
    %p86 = scmp.eq.s32.totalorder %s17, 48
    %p87 = por %p85, %p86
    %p89 = scmp.ne.s32.totalorder %s74, %s88
    %p90 = scmp.eq.s32.totalorder %s17, 0
    %p91 = por %p89, %p90
    %s93 = sadd.s32 %s92, 1
    %p96 = scmp.eq.s32.totalorder %s11, 48
    %p97 = scmp.ne.s32.totalorder %s92, %s94
    %p98 = scmp.eq.s32.totalorder %s11, 0
    %p99 = por %p97, %p98
    %p100 = scmp.ne.s32.totalorder %s92, %s94
    %p101 = scmp.eq.s32.totalorder %s16, 48
    %p102 = por %p100, %p101
    %p103 = scmp.ne.s32.totalorder %s94, %s95
    %p104 = scmp.eq.s32.totalorder %s16, 0
    %p105 = por %p103, %p104
    %p106 = scmp.ne.s32.totalorder %s94, %s95
    %p107 = scmp.eq.s32.totalorder %s17, 48
    %p108 = por %p106, %p107
    %p110 = scmp.ne.s32.totalorder %s95, %s109
    %p111 = scmp.eq.s32.totalorder %s17, 0
    %p112 = por %p110, %p111
    %s114 = sadd.s32 %s113, 1
    %p117 = scmp.eq.s32.totalorder %s11, 48
    %p118 = scmp.ne.s32.totalorder %s113, %s115
    %p119 = scmp.eq.s32.totalorder %s11, 0
    %p120 = por %p118, %p119
    %p121 = scmp.ne.s32.totalorder %s113, %s115
    %p122 = scmp.eq.s32.totalorder %s16, 48
    %p123 = por %p121, %p122
    %p124 = scmp.ne.s32.totalorder %s115, %s116
    %p125 = scmp.eq.s32.totalorder %s16, 0
    %p126 = por %p124, %p125
    %p127 = scmp.ne.s32.totalorder %s115, %s116
    %p128 = scmp.eq.s32.totalorder %s17, 48
    %p129 = por %p127, %p128
    %p131 = scmp.ne.s32.totalorder %s116, %s130
    %p132 = scmp.eq.s32.totalorder %s17, 0
    %p133 = por %p131, %p132
    %s135 = sadd.s32 %s134, 1
    %p138 = scmp.eq.s32.totalorder %s11, 48
    %p139 = scmp.ne.s32.totalorder %s134, %s136
    %p140 = scmp.eq.s32.totalorder %s11, 0
    %p141 = por %p139, %p140
    %p142 = scmp.ne.s32.totalorder %s134, %s136
    %p143 = scmp.eq.s32.totalorder %s16, 48
    %p144 = por %p142, %p143
    %p145 = scmp.ne.s32.totalorder %s136, %s137
    %p146 = scmp.eq.s32.totalorder %s16, 0
    %p147 = por %p145, %p146
    %p148 = scmp.ne.s32.totalorder %s136, %s137
    %p149 = scmp.eq.s32.totalorder %s17, 48
    %p150 = por %p148, %p149
    %p152 = scmp.ne.s32.totalorder %s137, %s151
    %p153 = scmp.eq.s32.totalorder %s17, 0
    %p154 = por %p152, %p153
    %p155 = scmp.le.s32.totalorder 1, %s11
    %p156 = scmp.lt.s32.totalorder %s11, 50
    %p157 = pnand %p155, %p156
    %p158 = pneg %p157
    // Predicated region
    $region9: #{simple_cnn_forward.7} parent=5 // pred_check
      _
    $region10: #{simple_cnn_forward.7} parent=5 // pred_check_branch
      %160 = sbr.rel (%p157) target = $region12
    $region11: #{simple_cnn_forward.7} parent=5 // pred_region
      %s161 = ssub.s32 %s11, 1
      // Predicated region
      $region13: #{simple_cnn_forward.7} parent=11 // pred_check
        %p162 = pneg %p84
      $region14: #{simple_cnn_forward.7} parent=11 // pred_check_branch
        %164 = sbr.rel (%p162) target = $region16
      $region15: #{simple_cnn_forward.7} parent=11 // pred_region
        _
      $region16: #{simple_cnn_forward.7} parent=11 // pred_fallthru
        _
      // Predicated region
      $region17: #{simple_cnn_forward.7} parent=11 // pred_check
        %p165 = pneg %p105
      $region18: #{simple_cnn_forward.7} parent=11 // pred_check_branch
        %167 = sbr.rel (%p165) target = $region20
      $region19: #{simple_cnn_forward.7} parent=11 // pred_region
        _
      $region20: #{simple_cnn_forward.7} parent=11 // pred_fallthru
        _
      // Predicated region
      $region21: #{simple_cnn_forward.7} parent=11 // pred_check
        %p168 = pneg %p126
      $region22: #{simple_cnn_forward.7} parent=11 // pred_check_branch
        %170 = sbr.rel (%p168) target = $region24
      $region23: #{simple_cnn_forward.7} parent=11 // pred_region
        _
      $region24: #{simple_cnn_forward.7} parent=11 // pred_fallthru
        _
    $region12: #{simple_cnn_forward.7} parent=5 // pred_fallthru
      _
    %p171 = scmp.lt.s32.totalorder %s11, 49
    // Predicated region
    $region25: #{simple_cnn_forward.7} parent=5 // pred_check
      %p172 = pneg %p171
    $region26: #{simple_cnn_forward.7} parent=5 // pred_check_branch
      %174 = sbr.rel (%p172) target = $region28
    $region27: #{simple_cnn_forward.7} parent=5 // pred_region
      // Predicated region
      $region29: #{simple_cnn_forward.7} parent=27 // pred_check
        %p175 = pneg %p31
      $region30: #{simple_cnn_forward.7} parent=27 // pred_check_branch
        %177 = sbr.rel (%p175) target = $region32
      $region31: #{simple_cnn_forward.7} parent=27 // pred_region
        %s178 = smul.u32 2, %s11
        %p179 = scmp.lt.s32.totalorder %s178, 97
        %s180 = scalar_select %p179, %s178, 97
        %s181 = smul.addr %s180, 4
        %s182 = scalar_lea.vmem %s0, %s181
        %s183 = smul.u32 2, %s11
      $region32: #{simple_cnn_forward.7} parent=27 // pred_fallthru
        _
      // Predicated region
      $region33: #{simple_cnn_forward.7} parent=27 // pred_check
        %p184 = pneg %p57
      $region34: #{simple_cnn_forward.7} parent=27 // pred_check_branch
        %186 = sbr.rel (%p184) target = $region36
      $region35: #{simple_cnn_forward.7} parent=27 // pred_region
        %s187 = smul.u32 32, %s11
        %p188 = scmp.lt.s32.totalorder %s187, 1567
        %s189 = scalar_select %p188, %s187, 1567
        %s190 = smul.addr %s189, 4
        %s191 = scalar_lea.vmem %s1, %s190
        %s192 = smul.u32 32, %s11
      $region36: #{simple_cnn_forward.7} parent=27 // pred_fallthru
        _
    $region28: #{simple_cnn_forward.7} parent=5 // pred_fallthru
      _
    %p193 = scmp.le.s32.totalorder 1, %s11
    %p194 = scmp.lt.s32.totalorder %s11, 50
    %p195 = pnand %p193, %p194
    %p196 = pneg %p195
    // Predicated region
    $region37: #{simple_cnn_forward.7} parent=5 // pred_check
      _
    $region38: #{simple_cnn_forward.7} parent=5 // pred_check_branch
      %198 = sbr.rel (%p195) target = $region40
    $region39: #{simple_cnn_forward.7} parent=5 // pred_region
      %s199 = ssub.s32 %s11, 1
      %s200 = smul.u32 2, %s16
      %p201 = scmp.lt.s32.totalorder %s200, 97
      %s202 = scalar_select %p201, %s200, 97
      %s203 = smul.addr %s202, 4
      %s204 = scalar_lea.vmem %s0, %s203
      %p205 = pneg %p37
      %p206 = pneg %p34
      %s207 = smul.u32 32, %s16
      %p208 = scmp.lt.s32.totalorder %s207, 1567
      %s209 = scalar_select %p208, %s207, 1567
      %s210 = smul.addr %s209, 4
      %s211 = scalar_lea.vmem %s1, %s210
      %p212 = pneg %p63
      %p213 = pneg %p60
      %p214 = pneg %p84
      %p215 = pneg %p81
      %p216 = pneg %p105
      %p217 = pneg %p102
      %p218 = pneg %p126
      %p219 = pneg %p123
      %p220 = pneg %p147
      %p221 = pneg %p144
      %s222 = smul.u32 2, %s16
      %p223 = scmp.lt.s32.totalorder %s222, 97
      %s224 = scalar_select %p223, %s222, 97
      %s225 = smul.addr %s224, 4
      %s226 = scalar_lea.vmem %s0, %s225
      %s227 = smul.u32 2, %s16
      %s228 = smul.u32 32, %s16
      %p229 = scmp.lt.s32.totalorder %s228, 1567
      %s230 = scalar_select %p229, %s228, 1567
      %s231 = smul.addr %s230, 4
      %s232 = scalar_lea.vmem %s1, %s231
      %s233 = smul.u32 32, %s16
      %p235 = scmp.eq.s32.totalorder %s16, 0
      // Predicated region
      $region41: #{simple_cnn_forward.7} parent=39 // pred_check
        %p236 = pneg %p235
      $region42: #{simple_cnn_forward.7} parent=39 // pred_check_branch
        %238 = sbr.rel (%p236) target = $region44
      $region43: #{simple_cnn_forward.7} parent=39 // pred_region
        %239 = vst [vmem:[#allocation2] sm:$0xff] 0.0
      $region44: #{simple_cnn_forward.7} parent=39 // pred_fallthru
        _
      %v240 = vld [vmem:[#allocation2] sm:$0xff]
      %v241 = vld [vmem:[%s226] sm:$0xff]
      %v242 = vld [vmem:[%s232] sm:$0xf]
      %v243 = vld [vmem:[%s232 + $0x4] sm:$0xf]
      %v244 = vld [vmem:[%s232 + $0x8] sm:$0xf]
      %v245 = vld [vmem:[%s232 + $0xc] sm:$0xf]
      %v246 = vld [vmem:[%s232 + $0x10] sm:$0xf]
      %v247 = vld [vmem:[%s232 + $0x14] sm:$0xf]
      %v248 = vld [vmem:[%s232 + $0x18] sm:$0xf]
      %v249 = vld [vmem:[%s232 + $0x1c] sm:$0xf]
      %v250 = vld [vmem:[%s232 + $0x20] sm:$0xf]
      %v251 = vld [vmem:[%s232 + $0x24] sm:$0xf]
      %v252 = vld [vmem:[%s232 + $0x28] sm:$0xf]
      %v253 = vld [vmem:[%s232 + $0x2c] sm:$0xf]
      %v254 = vld [vmem:[%s232 + $0x30] sm:$0xf]
      %v255 = vld [vmem:[%s232 + $0x34] sm:$0xf]
      %v256 = vld [vmem:[%s232 + $0x38] sm:$0xf]
      %v257 = vld [vmem:[%s232 + $0x3c] sm:$0xf]
      %v258 = vld [vmem:[%s232 + $0x40] sm:$0xf]
      %v259 = vld [vmem:[%s232 + $0x44] sm:$0xf]
      %v260 = vld [vmem:[%s232 + $0x48] sm:$0xf]
      %v261 = vld [vmem:[%s232 + $0x4c] sm:$0xf]
      %v262 = vld [vmem:[%s232 + $0x50] sm:$0xf]
      %v263 = vld [vmem:[%s232 + $0x54] sm:$0xf]
      %v264 = vld [vmem:[%s232 + $0x58] sm:$0xf]
      %v265 = vld [vmem:[%s232 + $0x5c] sm:$0xf]
      %v266 = vld [vmem:[%s232 + $0x60] sm:$0xf]
      %v267 = vld [vmem:[%s232 + $0x64] sm:$0xf]
      %v268 = vld [vmem:[%s232 + $0x68] sm:$0xf]
      %v269 = vld [vmem:[%s232 + $0x6c] sm:$0xf]
      %v270 = vld [vmem:[%s232 + $0x70] sm:$0xf]
      %v271 = vld [vmem:[%s232 + $0x74] sm:$0xf]
      %v272 = vld [vmem:[%s232 + $0x78] sm:$0xf]
      %v273 = vld [vmem:[%s232 + $0x7c] sm:$0xf]
      %v275 = vunpack.c.l.b16 %v241
      %v276 = vunpack.c.h.b16 %v241
      %v277 = vpack.c.b16 %v275, %v275
      %v278 = vpack.c.b16 %v276, %v276
      %v313 = vunpack.c.l.b16 %v242
      %v314 = vunpack.c.l.b16 %v243
      %v315 = vunpack.c.l.b16 %v244
      %v316 = vunpack.c.l.b16 %v245
      %v317 = vunpack.c.l.b16 %v246
      %v318 = vunpack.c.l.b16 %v247
      %v319 = vunpack.c.l.b16 %v248
      %v320 = vunpack.c.l.b16 %v249
      %v321 = vunpack.c.l.b16 %v250
      %v322 = vunpack.c.l.b16 %v251
      %v323 = vunpack.c.l.b16 %v252
      %v324 = vunpack.c.l.b16 %v253
      %v325 = vunpack.c.l.b16 %v254
      %v326 = vunpack.c.l.b16 %v255
      %v327 = vunpack.c.l.b16 %v256
      %v328 = vunpack.c.l.b16 %v257
      %v329 = vunpack.c.l.b16 %v258
      %v330 = vunpack.c.l.b16 %v259
      %v331 = vunpack.c.l.b16 %v260
      %v332 = vunpack.c.l.b16 %v261
      %v333 = vunpack.c.l.b16 %v262
      %v334 = vunpack.c.l.b16 %v263
      %v335 = vunpack.c.l.b16 %v264
      %v336 = vunpack.c.l.b16 %v265
      %v337 = vunpack.c.l.b16 %v266
      %v338 = vunpack.c.l.b16 %v267
      %v339 = vunpack.c.l.b16 %v268
      %v340 = vunpack.c.l.b16 %v269
      %v341 = vunpack.c.l.b16 %v270
      %v342 = vunpack.c.l.b16 %v271
      %v343 = vunpack.c.l.b16 %v272
      %v344 = vunpack.c.l.b16 %v273
      %v345 = vpack.c.b16 %v314, %v313
      %v346 = vpack.c.b16 %v316, %v315
      %v347 = vpack.c.b16 %v318, %v317
      %v348 = vpack.c.b16 %v320, %v319
      %v349 = vpack.c.b16 %v322, %v321
      %v350 = vpack.c.b16 %v324, %v323
      %v351 = vpack.c.b16 %v326, %v325
      %v352 = vpack.c.b16 %v328, %v327
      %v353 = vpack.c.b16 %v330, %v329
      %v354 = vpack.c.b16 %v332, %v331
      %v355 = vpack.c.b16 %v334, %v333
      %v356 = vpack.c.b16 %v336, %v335
      %v357 = vpack.c.b16 %v338, %v337
      %v358 = vpack.c.b16 %v340, %v339
      %v359 = vpack.c.b16 %v342, %v341
      %v360 = vpack.c.b16 %v344, %v343
      %377 = vmatprep.subr.bf16.mxu0 0
      %378 = vmatpush1.bf16.msra.mxu0 %v345
      %379 = vmatprep.subr.bf16.mxu0 0
      %380 = vmatpush1.bf16.msra.mxu0 %v346
      %381 = vmatprep.subr.bf16.mxu0 0
      %382 = vmatpush1.bf16.msra.mxu0 %v347
      %383 = vmatprep.subr.bf16.mxu0 0
      %384 = vmatpush1.bf16.msra.mxu0 %v348
      %385 = vmatprep.subr.bf16.mxu0 0
      %386 = vmatpush1.bf16.msra.mxu0 %v349
      %387 = vmatprep.subr.bf16.mxu0 0
      %388 = vmatpush1.bf16.msra.mxu0 %v350
      %389 = vmatprep.subr.bf16.mxu0 0
      %390 = vmatpush1.bf16.msra.mxu0 %v351
      %391 = vmatprep.subr.bf16.mxu0 0
      %392 = vmatpush1.bf16.msra.mxu0 %v352
      %393 = vmatprep.subr.bf16.mxu0 0
      %394 = vmatpush1.bf16.msra.mxu0 %v353
      %395 = vmatprep.subr.bf16.mxu0 0
      %396 = vmatpush1.bf16.msra.mxu0 %v354
      %397 = vmatprep.subr.bf16.mxu0 0
      %398 = vmatpush1.bf16.msra.mxu0 %v355
      %399 = vmatprep.subr.bf16.mxu0 0
      %400 = vmatpush1.bf16.msra.mxu0 %v356
      %401 = vmatprep.subr.bf16.mxu0 0
      %402 = vmatpush1.bf16.msra.mxu0 %v357
      %403 = vmatprep.subr.bf16.mxu0 0
      %404 = vmatpush1.bf16.msra.mxu0 %v358
      %405 = vmatprep.subr.bf16.mxu0 0
      %406 = vmatpush1.bf16.msra.mxu0 %v359
      %407 = vmatprep.subr.bf16.mxu0 0
      %408 = vmatpush1.bf16.msra.mxu0 %v360
      %409 = vmatprep.mubr.bf16.mxu0 %v278
      %410 = vmatmul.mubr.bf16.gmra.mrb[0].mxu0 %v277
      %v411 = vpop.f32.mrb[0].mxu0
      %v412 = vadd.f32 0.0, %v411
      %v413 = vpop.f32.mrb[0].mxu0
      %v414 = vpop.f32.mrb[0].mxu0
      %v415 = vpop.f32.mrb[0].mxu0
      %416 = vdwg.mxu0
      %v417 = vadd.f32 %v240, %v412
      %418 = vst [vmem:[#allocation2] sm:$0xff] %v417
      %p419 = scmp.eq.s32.totalorder %s16, 48
      // Predicated region
      $region45: #{simple_cnn_forward.7} parent=39 // pred_check
        %p420 = pneg %p419
      $region46: #{simple_cnn_forward.7} parent=39 // pred_check_branch
        %422 = sbr.rel (%p420) target = $region48
      $region47: #{simple_cnn_forward.7} parent=39 // pred_region
        %v423 = vld [vmem:[#allocation2] sm:$0xff]
        %v424 = vld [vmem:[%s2] sm:$0x1]
        %v426 = vlaneseq
        %v427 = vshrl.u32 %v426, 7
        %v428 = vsub.s32 0, %v427
        %v429 = vrot.slane %v424, %v428
        %v431 = vadd.f32 %v423, %v429
        %v432 = vmax.f32 %v431, 0.0
        %v433 = vpack.c.bf16 %v432, %v432
        %v434 = vld [vmem:[%s3] sm:$0xf]
        %v435 = vld [vmem:[%s3 + $0x4] sm:$0xf]
        %v436 = vld [vmem:[%s3 + $0x8] sm:$0xf]
        %v437 = vld [vmem:[%s3 + $0xc] sm:$0xf]
        %v438 = vld [vmem:[%s3 + $0x10] sm:$0xf]
        %v439 = vld [vmem:[%s3 + $0x14] sm:$0xf]
        %v440 = vld [vmem:[%s3 + $0x18] sm:$0xf]
        %v441 = vld [vmem:[%s3 + $0x1c] sm:$0xf]
        %v442 = vld [vmem:[%s3 + $0x20] sm:$0xf]
        %v443 = vld [vmem:[%s3 + $0x24] sm:$0xf]
        %v444 = vld [vmem:[%s3 + $0x28] sm:$0xf]
        %v445 = vld [vmem:[%s3 + $0x2c] sm:$0xf]
        %v446 = vld [vmem:[%s3 + $0x30] sm:$0xf]
        %v447 = vld [vmem:[%s3 + $0x34] sm:$0xf]
        %v448 = vld [vmem:[%s3 + $0x38] sm:$0xf]
        %v449 = vld [vmem:[%s3 + $0x3c] sm:$0xf]
        %v450 = vld [vmem:[%s4] sm:$0x1]
        %v452 = vlaneseq
        %v453 = vshrl.u32 %v452, 7
        %v454 = vsub.s32 0, %v453
        %v455 = vrot.slane %v450, %v454
        %v473 = vunpack.c.l.b16 %v434
        %v474 = vunpack.c.l.b16 %v435
        %v475 = vunpack.c.l.b16 %v436
        %v476 = vunpack.c.l.b16 %v437
        %v477 = vunpack.c.l.b16 %v438
        %v478 = vunpack.c.l.b16 %v439
        %v479 = vunpack.c.l.b16 %v440
        %v480 = vunpack.c.l.b16 %v441
        %v481 = vunpack.c.l.b16 %v442
        %v482 = vunpack.c.l.b16 %v443
        %v483 = vunpack.c.l.b16 %v444
        %v484 = vunpack.c.l.b16 %v445
        %v485 = vunpack.c.l.b16 %v446
        %v486 = vunpack.c.l.b16 %v447
        %v487 = vunpack.c.l.b16 %v448
        %v488 = vunpack.c.l.b16 %v449
        %v489 = vpack.c.b16 %v474, %v473
        %v490 = vpack.c.b16 %v476, %v475
        %v491 = vpack.c.b16 %v478, %v477
        %v492 = vpack.c.b16 %v480, %v479
        %v493 = vpack.c.b16 %v482, %v481
        %v494 = vpack.c.b16 %v484, %v483
        %v495 = vpack.c.b16 %v486, %v485
        %v496 = vpack.c.b16 %v488, %v487
        %505 = vmatprep.subr.bf16.mxu0 0
        %506 = vmatpush1.bf16.msra.mxu0 %v489
        %507 = vmatprep.subr.bf16.mxu0 0
        %508 = vmatpush1.bf16.msra.mxu0 %v490
        %509 = vmatprep.subr.bf16.mxu0 0
        %510 = vmatpush1.bf16.msra.mxu0 %v491
        %511 = vmatprep.subr.bf16.mxu0 0
        %512 = vmatpush1.bf16.msra.mxu0 %v492
        %513 = vmatprep.subr.bf16.mxu0 0
        %514 = vmatpush1.bf16.msra.mxu0 %v493
        %515 = vmatprep.subr.bf16.mxu0 0
        %516 = vmatpush1.bf16.msra.mxu0 %v494
        %517 = vmatprep.subr.bf16.mxu0 0
        %518 = vmatpush1.bf16.msra.mxu0 %v495
        %519 = vmatprep.subr.bf16.mxu0 0
        %520 = vmatpush1.bf16.msra.mxu0 %v496
        %521 = vmatprep.subr.bf16.mxu0 0
        %522 = vmatpush1.bf16.msra.mxu0 0
        %523 = vmatprep.subr.bf16.mxu0 0
        %524 = vmatpush1.bf16.msra.mxu0 0
        %525 = vmatprep.subr.bf16.mxu0 0
        %526 = vmatpush1.bf16.msra.mxu0 0
        %527 = vmatprep.subr.bf16.mxu0 0
        %528 = vmatpush1.bf16.msra.mxu0 0
        %529 = vmatprep.subr.bf16.mxu0 0
        %530 = vmatpush1.bf16.msra.mxu0 0
        %531 = vmatprep.subr.bf16.mxu0 0
        %532 = vmatpush1.bf16.msra.mxu0 0
        %533 = vmatprep.subr.bf16.mxu0 0
        %534 = vmatpush1.bf16.msra.mxu0 0
        %535 = vmatprep.subr.bf16.mxu0 0
        %536 = vmatpush1.bf16.msra.mxu0 0
        %537 = vmatprep.mubr.bf16.mxu0 0
        %538 = vmatmul.mubr.bf16.gmra.mrb[0].mxu0 %v433
        %v539 = vpop.f32.mrb[0].mxu0
        %v540 = vadd.f32 %v455, %v539
        %v541 = vpop.f32.mrb[0].mxu0
        %v542 = vpop.f32.mrb[0].mxu0
        %v543 = vpop.f32.mrb[0].mxu0
        %544 = vdwg.mxu0
        %545 = vst [vmem:[%s5] sm:$0xff] %v540
      $region48: #{simple_cnn_forward.7} parent=39 // pred_fallthru
        _
      // Predicated region
      $region49: #{simple_cnn_forward.7} parent=39 // pred_check
        %p546 = pneg %p144
      $region50: #{simple_cnn_forward.7} parent=39 // pred_check_branch
        %548 = sbr.rel (%p546) target = $region52
      $region51: #{simple_cnn_forward.7} parent=39 // pred_region
        _
      $region52: #{simple_cnn_forward.7} parent=39 // pred_fallthru
        _
      // Predicated region
      $region53: #{simple_cnn_forward.7} parent=39 // pred_check
        %p549 = pneg %p144
      $region54: #{simple_cnn_forward.7} parent=39 // pred_check_branch
        %551 = sbr.rel (%p549) target = $region56
      $region55: #{simple_cnn_forward.7} parent=39 // pred_region
        _
      $region56: #{simple_cnn_forward.7} parent=39 // pred_fallthru
        _
    $region40: #{simple_cnn_forward.7} parent=5 // pred_fallthru
      _
    %p552 = scmp.le.s32.totalorder 2, %s11
    // Predicated region
    $region57: #{simple_cnn_forward.7} parent=5 // pred_check
      %p553 = pneg %p552
    $region58: #{simple_cnn_forward.7} parent=5 // pred_check_branch
      %555 = sbr.rel (%p553) target = $region60
    $region59: #{simple_cnn_forward.7} parent=5 // pred_region
      %s556 = ssub.s32 %s11, 2
    $region60: #{simple_cnn_forward.7} parent=5 // pred_fallthru
      _
  $region6: #{simple_cnn_forward.7} parent=0 // loop_footer
    %s15 = sadd.s32 1, %s11
  $region7: #{simple_cnn_forward.7} parent=0 // loop_footer_branch
    %10 = sbr.rel target = $region3
  $region8: #{simple_cnn_forward.7} parent=0 // loop_exit
    _

</llo_original>
